<compile_context>
chip_gen: v6e
topology: v6e:2x2x1
jax: 0.10.0
libtpu: 0.0.40
codegen_flags: <defaults>
</compile_context>

<pallas_src>
import numpy as np
import jax
import jax.numpy as jnp
from jax import lax
from jax.experimental import pallas as pl
from jax.experimental.pallas import tpu as pltpu

LANE = 128                        # lane width (fixed)
SUB = 8                           # sublanes per compute slice (1 f32 vreg / plane)
_VMEM_LIMIT = 32 * 1024 * 1024    # explicit: v5e default scoped VMEM is only ~16 MiB
_BLOCK_BUDGET = 20 * 1024 * 1024  # budget for double-buffered in+out blocks


def _cdiv(a, b):
    return -(-a // b)


def _tile_batch(B, n_joints):
    """Pick (tb, n_blocks, slice_sz).

    tb      : batch sublanes per grid step (DMA granularity),
    n_blocks: grid size along the batch axis,
    slice_sz: sublanes per in-kernel compute slice (kept at 8 -> 1 vreg/plane).
    """
    b_sub = _cdiv(B, LANE)
    if b_sub <= SUB:
        return b_sub, 1, b_sub                       # single small block
    total = _cdiv(b_sub, SUB) * SUB
    # double-buffered bytes per batch sublane: theta (3 planes) + l2w (12 planes)
    per_sub = 2 * (3 + 12) * n_joints * LANE * 4
    tb_max = max(SUB, min(64, (int(_BLOCK_BUDGET // per_sub) // SUB) * SUB))
    tb = min(tb_max, total)
    if _cdiv(total, tb) < 2:
        # keep >= 2 "parallel" grid steps so v7x's 2 TensorCores both get work
        tb = max(SUB, _cdiv(total, 2 * SUB) * SUB)
    return tb, _cdiv(total, tb), SUB


def _make_kchain_kernel(parent_ids, n_joints, tb, slice_sz):
    parent_ids = tuple(int(p) for p in parent_ids)
    n_slices = tb // slice_sz
    assert n_slices * slice_sz == tb

    def kernel(theta_ref, tvec_ref, l2ws_ref):
        # theta_ref: (3, N_J, tb, 128)  axis-angle, coordinate-major, batch-dense
        # tvec_ref : (3, N_J, 1, 128)   per-joint bone vectors (lane-dense, tiny)
        # l2ws_ref : (N_J, 12, tb, 128) row-major 3x4 affine entries per joint
        for si in range(n_slices):
            off = si * slice_sz
            sl = slice(off, off + slice_sz)

            def rel3x4(j):
                # Rodrigues axis-angle -> rotation (3x3) plus bone translation col.
                vx = theta_ref[0, j, sl, :]
                vy = theta_ref[1, j, sl, :]
                vz = theta_ref[2, j, sl, :]
                sq = vx * vx + vy * vy + vz * vz + 1e-12
                inv = lax.rsqrt(sq)          # EUP; avoids f32 sqrt + divide
                angle = sq * inv             # == sqrt(sq)
                kx = vx * inv
                ky = vy * inv
                kz = vz * inv
                c = jnp.cos(angle)
                s = jnp.sin(angle)
                t = 1.0 - c
                tkx = t * kx
                tky = t * ky
                tkz = t * kz
                skx = s * kx
                sky = s * ky
                skz = s * kz
                txy = tkx * ky
                txz = tkx * kz
                tyz = tky * kz
                return ((c + tkx * kx, txy - skz, txz + sky, tvec_ref[0, j]),
                        (txy + skz, c + tky * ky, tyz - skx, tvec_ref[1, j]),
                        (txz - sky, tyz + skx, c + tkz * kz, tvec_ref[2, j]))

            def store(j, w):
                for i in range(3):
                    for k in range(4):
                        l2ws_ref[j, i * 4 + k, sl, :] = jnp.broadcast_to(
                            w[i][k], (slice_sz, LANE))

            def load(j):
                return tuple(tuple(l2ws_ref[j, i * 4 + k, sl, :] for k in range(4))
                             for i in range(3))

            # Root: l2w[0] = [R0 | rest_pose[0]]  (tvec[0] == rest_pose[0]).
            prev_j = 0
            prev_w = rel3x4(0)
            store(0, prev_w)

            # Kinematic chain, streamed: parents re-read from the output VMEM block
            # unless they are the immediately preceding joint (common chain case).
            for j in range(1, n_joints):
                p = parent_ids[j]
                a = prev_w if p == prev_j else load(p)
                b = rel3x4(j)
                w = []
                for i in range(3):
                    row = []
                    for k in range(4):
                        v = (a[i][0] * b[0][k] + a[i][1] * b[1][k]
                             + a[i][2] * b[2][k])
                        if k == 3:
                            v = v + a[i][3]
                        row.append(v)
                    w.append(tuple(row))
                w = tuple(w)
                store(j, w)
                prev_j, prev_w = j, w

    return kernel


def kinematic_chain_forward(theta, rest_pose, joint_parents, bone_factor=None):
    """theta: (B, N_J, 3) axis-angle; rest_pose: (N_J, 3); joint_parents: ints.

    Returns (kp3d (B,N_J,3), orient (B,N_J,3,3), l2ws (B,N_J,4,4), bone_factor).
    """
    assert bone_factor is None
    theta = jnp.asarray(theta, jnp.float32)
    rest_pose = jnp.asarray(rest_pose, jnp.float32)
    B, NJ, _ = theta.shape
    parents = tuple(int(p) for p in joint_parents)
    assert parents[0] == 0, "Only support skeletons with root at 0!"
    assert all(parents[j] < j for j in range(1, NJ))

    # --- batch tiling
    tb, n_blocks, slice_sz = _tile_batch(B, NJ)
    b_sub = tb * n_blocks
    b_pad = b_sub * LANE

    # --- per-joint bone vectors (batch independent): root uses rest_pose[0]
    parents_arr = jnp.array(parents, jnp.int32)
    tvec = rest_pose - rest_pose[parents_arr]
    tvec = tvec.at[0].set(rest_pose[0])                                  # (N_J, 3)
    tvec_t = jnp.broadcast_to(tvec.T[:, :, None, None], (3, NJ, 1, LANE))

    # --- coordinate-major, batch-dense theta: (3, N_J, B_sub, 128)
    theta_cm = jnp.transpose(theta, (2, 1, 0))                           # (3, NJ, B)
    if b_pad != B:
        theta_cm = jnp.pad(theta_cm, ((0, 0), (0, 0), (0, b_pad - B)))
    theta_t = theta_cm.reshape(3, NJ, b_sub, LANE)

    kernel = _make_kchain_kernel(parents, NJ, tb, slice_sz)
    l2ws_t = pl.pallas_call(
        kernel,
        out_shape=jax.ShapeDtypeStruct((NJ, 12, b_sub, LANE), jnp.float32),
        grid_spec=pltpu.PrefetchScalarGridSpec(
            num_scalar_prefetch=0,
            grid=(n_blocks,),
            in_specs=[
                pl.BlockSpec((3, NJ, tb, LANE), lambda b: (0, 0, b, 0)),
                pl.BlockSpec((3, NJ, 1, LANE), lambda b: (0, 0, 0, 0)),
            ],
            out_specs=pl.BlockSpec((NJ, 12, tb, LANE), lambda b: (0, 0, b, 0)),
        ),
        compiler_params=pltpu.CompilerParams(
            dimension_semantics=("parallel",),
            vmem_limit_bytes=_VMEM_LIMIT),
    )(theta_t, tvec_t)

    # (N_J, 12, B_sub, 128) -> (B, N_J, 3, 4); the constant (0,0,0,1) row is
    # attached here (fused by XLA) instead of being written/read through HBM.
    l2ws34 = jnp.transpose(l2ws_t.reshape(NJ, 3, 4, b_pad), (3, 0, 1, 2))[:B]
    bottom = jnp.broadcast_to(
        jnp.array([0.0, 0.0, 0.0, 1.0], jnp.float32), (B, NJ, 1, 4))
    l2ws = jnp.concatenate([l2ws34, bottom], axis=2)                     # (B,NJ,4,4)
    kp3d = l2ws34[..., :, 3]                                             # (B,NJ,3)
    orient = l2ws34[..., :, :3]                                          # (B,NJ,3,3)
    return kp3d, orient, l2ws, bone_factor


def _reference_forward(theta, rest_pose, parents):
    """Pure-numpy reference mirroring the PyTorch module's semantics."""
    theta = np.asarray(theta, np.float32)
    rest_pose = np.asarray(rest_pose, np.float32)
    B, NJ, _ = theta.shape
    v = theta.reshape(-1, 3)
    angle = np.sqrt((v ** 2).sum(-1) + 1e-12)
    k = v / angle[:, None]
    c, s = np.cos(angle), np.sin(angle)
    t = 1.0 - c
    kx, ky, kz = k[:, 0], k[:, 1], k[:, 2]
    R = np.stack([
        c + t * kx * kx, t * kx * ky - s * kz, t * kx * kz + s * ky,
        t * kx * ky + s * kz, c + t * ky * ky, t * ky * kz - s * kx,
        t * kx * kz - s * ky, t * ky * kz + s * kx, c + t * kz * kz,
    ], axis=-1).reshape(B, NJ, 3, 3)
    rest = np.broadcast_to(rest_pose[None], (B, NJ, 3))

    def homo(m34):  # (B, 3, 4) -> (B, 4, 4)
        last = np.tile(np.array([[[0., 0., 0., 1.]]], np.float32), (B, 1, 1))
        return np.concatenate([m34, last], axis=1)

    l2ws = [homo(np.concatenate([R[:, 0], rest[:, 0, :, None]], axis=-1))]
    for j in range(1, NJ):
        p = parents[j]
        bv = (rest[:, j] - rest[:, p])[:, :, None]
        rel = homo(np.concatenate([R[:, j], bv], axis=-1))
        l2ws.append(l2ws[p] @ rel)
    l2ws = np.stack(l2ws, axis=1)
    return l2ws[..., :3, -1], l2ws[..., :3, :3], l2ws


if __name__ == "__main__":
    parents = (0, 0, 1, 2, 2, 0, 5, 6)   # small synthetic skeleton, root at 0
    NJ = len(parents)

    key = jax.random.PRNGKey(0)
    k_rest, k_a, k_b, k_c = jax.random.split(key, 4)
    rest_pose = jax.random.normal(k_rest, (NJ, 3), jnp.float32)

    # B=2   : single tiny block (tb=1).
    # B=1030: padding + 2 "parallel" 8-sublane blocks (single inner slice).
    # B=2600: padding + 2 "parallel" 16-sublane blocks, 2 inner 8-sublane slices.
    for B, kk in ((2, k_a), (1030, k_b), (2600, k_c)):
        theta = 0.5 * jax.random.normal(kk, (B, NJ, 3), jnp.float32)
        kp3d, orient, l2ws, bf = kinematic_chain_forward(theta, rest_pose, parents)
        jax.block_until_ready((kp3d, orient, l2ws))

        kp3d_ref, orient_ref, l2ws_ref_np = _reference_forward(
            np.array(theta), np.array(rest_pose), parents)

        assert np.allclose(np.array(l2ws), l2ws_ref_np, atol=1e-4, rtol=1e-4)
        assert np.allclose(np.array(kp3d), kp3d_ref, atol=1e-4, rtol=1e-4)
        assert np.allclose(np.array(orient), orient_ref, atol=1e-4, rtol=1e-4)
        assert bf is None

    print("KERNEL_OK")
</pallas_src>

<mosaic_0001>
module attributes {stable_mosaic.version = 11 : i64} {
  func.func @kernel(%arg0: i32, %arg1: memref<3x8x1x128xf32, #tpu.memory_space<vmem>>, %arg2: memref<3x8x1x128xf32, #tpu.memory_space<vmem>>, %arg3: memref<8x12x1x128xf32, #tpu.memory_space<vmem>>) attributes {dimension_semantics = [#tpu.dimension_semantics<parallel>], iteration_bounds = array<i64: 1>, scalar_prefetch = 0 : i64, scratch_operands = 0 : i64, tpu.core_type = #tpu.core_type<tc>, window_params = [{transform_indices = @transform_0, window_bounds = array<i64: 3, 8, 1, 128>}, {pipeline_mode = #tpu.pipeline_mode<synchronous>, transform_indices = @transform_1, window_bounds = array<i64: 3, 8, 1, 128>}, {transform_indices = @transform_2, window_bounds = array<i64: 8, 12, 1, 128>}]} {
    %c0 = arith.constant 0 : index
    %c0_0 = arith.constant 0 : index
    %c0_1 = arith.constant 0 : index
    %c0_2 = arith.constant 0 : index
    %0 = vector.load %arg1[%c0, %c0_0, %c0_1, %c0_2] : memref<3x8x1x128xf32, #tpu.memory_space<vmem>>, vector<1x1x1x128xf32>
    %1 = vector.shape_cast %0 : vector<1x1x1x128xf32> to vector<1x128xf32>
    %c1 = arith.constant 1 : index
    %c0_3 = arith.constant 0 : index
    %c0_4 = arith.constant 0 : index
    %c0_5 = arith.constant 0 : index
    %2 = vector.load %arg1[%c1, %c0_3, %c0_4, %c0_5] : memref<3x8x1x128xf32, #tpu.memory_space<vmem>>, vector<1x1x1x128xf32>
    %3 = vector.shape_cast %2 : vector<1x1x1x128xf32> to vector<1x128xf32>
    %c2 = arith.constant 2 : index
    %c0_6 = arith.constant 0 : index
    %c0_7 = arith.constant 0 : index
    %c0_8 = arith.constant 0 : index
    %4 = vector.load %arg1[%c2, %c0_6, %c0_7, %c0_8] : memref<3x8x1x128xf32, #tpu.memory_space<vmem>>, vector<1x1x1x128xf32>
    %5 = vector.shape_cast %4 : vector<1x1x1x128xf32> to vector<1x128xf32>
    %6 = arith.mulf %1, %1 : vector<1x128xf32>
    %7 = arith.mulf %3, %3 : vector<1x128xf32>
    %8 = arith.addf %6, %7 : vector<1x128xf32>
    %9 = arith.mulf %5, %5 : vector<1x128xf32>
    %10 = arith.addf %8, %9 : vector<1x128xf32>
    %cst = arith.constant 9.99999996E-13 : f32
    %11 = vector.broadcast %cst : f32 to vector<1x128xf32>
    %12 = arith.addf %10, %11 : vector<1x128xf32>
    %13 = math.rsqrt %12 : vector<1x128xf32>
    %14 = arith.mulf %12, %13 : vector<1x128xf32>
    %15 = arith.mulf %1, %13 : vector<1x128xf32>
    %16 = arith.mulf %3, %13 : vector<1x128xf32>
    %17 = arith.mulf %5, %13 : vector<1x128xf32>
    %18 = math.cos %14 : vector<1x128xf32>
    %19 = math.sin %14 : vector<1x128xf32>
    %cst_9 = arith.constant 1.000000e+00 : f32
    %20 = vector.broadcast %cst_9 : f32 to vector<1x128xf32>
    %21 = arith.subf %20, %18 : vector<1x128xf32>
    %22 = arith.mulf %21, %15 : vector<1x128xf32>
    %23 = arith.mulf %21, %16 : vector<1x128xf32>
    %24 = arith.mulf %21, %17 : vector<1x128xf32>
    %25 = arith.mulf %19, %15 : vector<1x128xf32>
    %26 = arith.mulf %19, %16 : vector<1x128xf32>
    %27 = arith.mulf %19, %17 : vector<1x128xf32>
    %28 = arith.mulf %22, %16 : vector<1x128xf32>
    %29 = arith.mulf %22, %17 : vector<1x128xf32>
    %30 = arith.mulf %23, %17 : vector<1x128xf32>
    %31 = arith.mulf %22, %15 : vector<1x128xf32>
    %32 = arith.addf %18, %31 : vector<1x128xf32>
    %33 = arith.subf %28, %27 : vector<1x128xf32>
    %34 = arith.addf %29, %26 : vector<1x128xf32>
    %c0_10 = arith.constant 0 : index
    %c0_11 = arith.constant 0 : index
    %c0_12 = arith.constant 0 : index
    %c0_13 = arith.constant 0 : index
    %35 = vector.load %arg2[%c0_10, %c0_11, %c0_12, %c0_13] : memref<3x8x1x128xf32, #tpu.memory_space<vmem>>, vector<1x1x1x128xf32>
    %36 = vector.shape_cast %35 : vector<1x1x1x128xf32> to vector<1x128xf32>
    %37 = arith.addf %28, %27 : vector<1x128xf32>
    %38 = arith.mulf %23, %16 : vector<1x128xf32>
    %39 = arith.addf %18, %38 : vector<1x128xf32>
    %40 = arith.subf %30, %25 : vector<1x128xf32>
    %c1_14 = arith.constant 1 : index
    %c0_15 = arith.constant 0 : index
    %c0_16 = arith.constant 0 : index
    %c0_17 = arith.constant 0 : index
    %41 = vector.load %arg2[%c1_14, %c0_15, %c0_16, %c0_17] : memref<3x8x1x128xf32, #tpu.memory_space<vmem>>, vector<1x1x1x128xf32>
    %42 = vector.shape_cast %41 : vector<1x1x1x128xf32> to vector<1x128xf32>
    %43 = arith.subf %29, %26 : vector<1x128xf32>
    %44 = arith.addf %30, %25 : vector<1x128xf32>
    %45 = arith.mulf %24, %17 : vector<1x128xf32>
    %46 = arith.addf %18, %45 : vector<1x128xf32>
    %c2_18 = arith.constant 2 : index
    %c0_19 = arith.constant 0 : index
    %c0_20 = arith.constant 0 : index
    %c0_21 = arith.constant 0 : index
    %47 = vector.load %arg2[%c2_18, %c0_19, %c0_20, %c0_21] : memref<3x8x1x128xf32, #tpu.memory_space<vmem>>, vector<1x1x1x128xf32>
    %48 = vector.shape_cast %47 : vector<1x1x1x128xf32> to vector<1x128xf32>
    %c0_22 = arith.constant 0 : index
    %c0_23 = arith.constant 0 : index
    %c0_24 = arith.constant 0 : index
    %c0_25 = arith.constant 0 : index
    %49 = vector.load %arg3[%c0_22, %c0_23, %c0_24, %c0_25] : memref<8x12x1x128xf32, #tpu.memory_space<vmem>>, vector<1x1x1x128xf32>
    %50 = vector.shape_cast %49 : vector<1x1x1x128xf32> to vector<1x128xf32>
    %51 = vector.shape_cast %32 : vector<1x128xf32> to vector<1x1x1x128xf32>
    tpu.vector_store %arg3[%c0_22, %c0_23, %c0_24, %c0_25], %51 {strides = array<i32>} : memref<8x12x1x128xf32, #tpu.memory_space<vmem>>, vector<1x1x1x128xf32>,
    %c0_26 = arith.constant 0 : index
    %c1_27 = arith.constant 1 : index
    %c0_28 = arith.constant 0 : index
    %c0_29 = arith.constant 0 : index
    %52 = vector.load %arg3[%c0_26, %c1_27, %c0_28, %c0_29] : memref<8x12x1x128xf32, #tpu.memory_space<vmem>>, vector<1x1x1x128xf32>
    %53 = vector.shape_cast %52 : vector<1x1x1x128xf32> to vector<1x128xf32>
    %54 = vector.shape_cast %33 : vector<1x128xf32> to vector<1x1x1x128xf32>
    tpu.vector_store %arg3[%c0_26, %c1_27, %c0_28, %c0_29], %54 {strides = array<i32>} : memref<8x12x1x128xf32, #tpu.memory_space<vmem>>, vector<1x1x1x128xf32>,
    %c0_30 = arith.constant 0 : index
    %c2_31 = arith.constant 2 : index
    %c0_32 = arith.constant 0 : index
    %c0_33 = arith.constant 0 : index
    %55 = vector.load %arg3[%c0_30, %c2_31, %c0_32, %c0_33] : memref<8x12x1x128xf32, #tpu.memory_space<vmem>>, vector<1x1x1x128xf32>
    %56 = vector.shape_cast %55 : vector<1x1x1x128xf32> to vector<1x128xf32>
    %57 = vector.shape_cast %34 : vector<1x128xf32> to vector<1x1x1x128xf32>
    tpu.vector_store %arg3[%c0_30, %c2_31, %c0_32, %c0_33], %57 {strides = array<i32>} : memref<8x12x1x128xf32, #tpu.memory_space<vmem>>, vector<1x1x1x128xf32>,
    %c0_34 = arith.constant 0 : index
    %c3 = arith.constant 3 : index
    %c0_35 = arith.constant 0 : index
    %c0_36 = arith.constant 0 : index
    %58 = vector.load %arg3[%c0_34, %c3, %c0_35, %c0_36] : memref<8x12x1x128xf32, #tpu.memory_space<vmem>>, vector<1x1x1x128xf32>
    %59 = vector.shape_cast %58 : vector<1x1x1x128xf32> to vector<1x128xf32>
    %60 = vector.shape_cast %36 : vector<1x128xf32> to vector<1x1x1x128xf32>
    tpu.vector_store %arg3[%c0_34, %c3, %c0_35, %c0_36], %60 {strides = array<i32>} : memref<8x12x1x128xf32, #tpu.memory_space<vmem>>, vector<1x1x1x128xf32>,
    %c0_37 = arith.constant 0 : index
    %c4 = arith.constant 4 : index
    %c0_38 = arith.constant 0 : index
    %c0_39 = arith.constant 0 : index
    %61 = vector.load %arg3[%c0_37, %c4, %c0_38, %c0_39] : memref<8x12x1x128xf32, #tpu.memory_space<vmem>>, vector<1x1x1x128xf32>
    %62 = vector.shape_cast %61 : vector<1x1x1x128xf32> to vector<1x128xf32>
    %63 = vector.shape_cast %37 : vector<1x128xf32> to vector<1x1x1x128xf32>
    tpu.vector_store %arg3[%c0_37, %c4, %c0_38, %c0_39], %63 {strides = array<i32>} : memref<8x12x1x128xf32, #tpu.memory_space<vmem>>, vector<1x1x1x128xf32>,
    %c0_40 = arith.constant 0 : index
    %c5 = arith.constant 5 : index
    %c0_41 = arith.constant 0 : index
    %c0_42 = arith.constant 0 : index
    %64 = vector.load %arg3[%c0_40, %c5, %c0_41, %c0_42] : memref<8x12x1x128xf32, #tpu.memory_space<vmem>>, vector<1x1x1x128xf32>
    %65 = vector.shape_cast %64 : vector<1x1x1x128xf32> to vector<1x128xf32>
    %66 = vector.shape_cast %39 : vector<1x128xf32> to vector<1x1x1x128xf32>
    tpu.vector_store %arg3[%c0_40, %c5, %c0_41, %c0_42], %66 {strides = array<i32>} : memref<8x12x1x128xf32, #tpu.memory_space<vmem>>, vector<1x1x1x128xf32>,
    %c0_43 = arith.constant 0 : index
    %c6 = arith.constant 6 : index
    %c0_44 = arith.constant 0 : index
    %c0_45 = arith.constant 0 : index
    %67 = vector.load %arg3[%c0_43, %c6, %c0_44, %c0_45] : memref<8x12x1x128xf32, #tpu.memory_space<vmem>>, vector<1x1x1x128xf32>
    %68 = vector.shape_cast %67 : vector<1x1x1x128xf32> to vector<1x128xf32>
    %69 = vector.shape_cast %40 : vector<1x128xf32> to vector<1x1x1x128xf32>
    tpu.vector_store %arg3[%c0_43, %c6, %c0_44, %c0_45], %69 {strides = array<i32>} : memref<8x12x1x128xf32, #tpu.memory_space<vmem>>, vector<1x1x1x128xf32>,
    %c0_46 = arith.constant 0 : index
    %c7 = arith.constant 7 : index
    %c0_47 = arith.constant 0 : index
    %c0_48 = arith.constant 0 : index
    %70 = vector.load %arg3[%c0_46, %c7, %c0_47, %c0_48] : memref<8x12x1x128xf32, #tpu.memory_space<vmem>>, vector<1x1x1x128xf32>
    %71 = vector.shape_cast %70 : vector<1x1x1x128xf32> to vector<1x128xf32>
    %72 = vector.shape_cast %42 : vector<1x128xf32> to vector<1x1x1x128xf32>
    tpu.vector_store %arg3[%c0_46, %c7, %c0_47, %c0_48], %72 {strides = array<i32>} : memref<8x12x1x128xf32, #tpu.memory_space<vmem>>, vector<1x1x1x128xf32>,
    %c0_49 = arith.constant 0 : index
    %c8 = arith.constant 8 : index
    %c0_50 = arith.constant 0 : index
    %c0_51 = arith.constant 0 : index
    %73 = vector.load %arg3[%c0_49, %c8, %c0_50, %c0_51] : memref<8x12x1x128xf32, #tpu.memory_space<vmem>>, vector<1x1x1x128xf32>
    %74 = vector.shape_cast %73 : vector<1x1x1x128xf32> to vector<1x128xf32>
    %75 = vector.shape_cast %43 : vector<1x128xf32> to vector<1x1x1x128xf32>
    tpu.vector_store %arg3[%c0_49, %c8, %c0_50, %c0_51], %75 {strides = array<i32>} : memref<8x12x1x128xf32, #tpu.memory_space<vmem>>, vector<1x1x1x128xf32>,
    %c0_52 = arith.constant 0 : index
    %c9 = arith.constant 9 : index
    %c0_53 = arith.constant 0 : index
    %c0_54 = arith.constant 0 : index
    %76 = vector.load %arg3[%c0_52, %c9, %c0_53, %c0_54] : memref<8x12x1x128xf32, #tpu.memory_space<vmem>>, vector<1x1x1x128xf32>
    %77 = vector.shape_cast %76 : vector<1x1x1x128xf32> to vector<1x128xf32>
    %78 = vector.shape_cast %44 : vector<1x128xf32> to vector<1x1x1x128xf32>
    tpu.vector_store %arg3[%c0_52, %c9, %c0_53, %c0_54], %78 {strides = array<i32>} : memref<8x12x1x128xf32, #tpu.memory_space<vmem>>, vector<1x1x1x128xf32>,
    %c0_55 = arith.constant 0 : index
    %c10 = arith.constant 10 : index
    %c0_56 = arith.constant 0 : index
    %c0_57 = arith.constant 0 : index
    %79 = vector.load %arg3[%c0_55, %c10, %c0_56, %c0_57] : memref<8x12x1x128xf32, #tpu.memory_space<vmem>>, vector<1x1x1x128xf32>
    %80 = vector.shape_cast %79 : vector<1x1x1x128xf32> to vector<1x128xf32>
    %81 = vector.shape_cast %46 : vector<1x128xf32> to vector<1x1x1x128xf32>
    tpu.vector_store %arg3[%c0_55, %c10, %c0_56, %c0_57], %81 {strides = array<i32>} : memref<8x12x1x128xf32, #tpu.memory_space<vmem>>, vector<1x1x1x128xf32>,
    %c0_58 = arith.constant 0 : index
    %c11 = arith.constant 11 : index
    %c0_59 = arith.constant 0 : index
    %c0_60 = arith.constant 0 : index
    %82 = vector.load %arg3[%c0_58, %c11, %c0_59, %c0_60] : memref<8x12x1x128xf32, #tpu.memory_space<vmem>>, vector<1x1x1x128xf32>
    %83 = vector.shape_cast %82 : vector<1x1x1x128xf32> to vector<1x128xf32>
    %84 = vector.shape_cast %48 : vector<1x128xf32> to vector<1x1x1x128xf32>
    tpu.vector_store %arg3[%c0_58, %c11, %c0_59, %c0_60], %84 {strides = array<i32>} : memref<8x12x1x128xf32, #tpu.memory_space<vmem>>, vector<1x1x1x128xf32>,
    %c0_61 = arith.constant 0 : index
    %c1_62 = arith.constant 1 : index
    %c0_63 = arith.constant 0 : index
    %c0_64 = arith.constant 0 : index
    %85 = vector.load %arg1[%c0_61, %c1_62, %c0_63, %c0_64] : memref<3x8x1x128xf32, #tpu.memory_space<vmem>>, vector<1x1x1x128xf32>
    %86 = vector.shape_cast %85 : vector<1x1x1x128xf32> to vector<1x128xf32>
    %c1_65 = arith.constant 1 : index
    %c1_66 = arith.constant 1 : index
    %c0_67 = arith.constant 0 : index
    %c0_68 = arith.constant 0 : index
    %87 = vector.load %arg1[%c1_65, %c1_66, %c0_67, %c0_68] : memref<3x8x1x128xf32, #tpu.memory_space<vmem>>, vector<1x1x1x128xf32>
    %88 = vector.shape_cast %87 : vector<1x1x1x128xf32> to vector<1x128xf32>
    %c2_69 = arith.constant 2 : index
    %c1_70 = arith.constant 1 : index
    %c0_71 = arith.constant 0 : index
    %c0_72 = arith.constant 0 : index
    %89 = vector.load %arg1[%c2_69, %c1_70, %c0_71, %c0_72] : memref<3x8x1x128xf32, #tpu.memory_space<vmem>>, vector<1x1x1x128xf32>
    %90 = vector.shape_cast %89 : vector<1x1x1x128xf32> to vector<1x128xf32>
    %91 = arith.mulf %86, %86 : vector<1x128xf32>
    %92 = arith.mulf %88, %88 : vector<1x128xf32>
    %93 = arith.addf %91, %92 : vector<1x128xf32>
    %94 = arith.mulf %90, %90 : vector<1x128xf32>
    %95 = arith.addf %93, %94 : vector<1x128xf32>
    %cst_73 = arith.constant 9.99999996E-13 : f32
    %96 = vector.broadcast %cst_73 : f32 to vector<1x128xf32>
    %97 = arith.addf %95, %96 : vector<1x128xf32>
    %98 = math.rsqrt %97 : vector<1x128xf32>
    %99 = arith.mulf %97, %98 : vector<1x128xf32>
    %100 = arith.mulf %86, %98 : vector<1x128xf32>
    %101 = arith.mulf %88, %98 : vector<1x128xf32>
    %102 = arith.mulf %90, %98 : vector<1x128xf32>
    %103 = math.cos %99 : vector<1x128xf32>
    %104 = math.sin %99 : vector<1x128xf32>
    %cst_74 = arith.constant 1.000000e+00 : f32
    %105 = vector.broadcast %cst_74 : f32 to vector<1x128xf32>
    %106 = arith.subf %105, %103 : vector<1x128xf32>
    %107 = arith.mulf %106, %100 : vector<1x128xf32>
    %108 = arith.mulf %106, %101 : vector<1x128xf32>
    %109 = arith.mulf %106, %102 : vector<1x128xf32>
    %110 = arith.mulf %104, %100 : vector<1x128xf32>
    %111 = arith.mulf %104, %101 : vector<1x128xf32>
    %112 = arith.mulf %104, %102 : vector<1x128xf32>
    %113 = arith.mulf %107, %101 : vector<1x128xf32>
    %114 = arith.mulf %107, %102 : vector<1x128xf32>
    %115 = arith.mulf %108, %102 : vector<1x128xf32>
    %116 = arith.mulf %107, %100 : vector<1x128xf32>
    %117 = arith.addf %103, %116 : vector<1x128xf32>
    %118 = arith.subf %113, %112 : vector<1x128xf32>
    %119 = arith.addf %114, %111 : vector<1x128xf32>
    %c0_75 = arith.constant 0 : index
    %c1_76 = arith.constant 1 : index
    %c0_77 = arith.constant 0 : index
    %c0_78 = arith.constant 0 : index
    %120 = vector.load %arg2[%c0_75, %c1_76, %c0_77, %c0_78] : memref<3x8x1x128xf32, #tpu.memory_space<vmem>>, vector<1x1x1x128xf32>
    %121 = vector.shape_cast %120 : vector<1x1x1x128xf32> to vector<1x128xf32>
    %122 = arith.addf %113, %112 : vector<1x128xf32>
    %123 = arith.mulf %108, %101 : vector<1x128xf32>
    %124 = arith.addf %103, %123 : vector<1x128xf32>
    %125 = arith.subf %115, %110 : vector<1x128xf32>
    %c1_79 = arith.constant 1 : index
    %c1_80 = arith.constant 1 : index
    %c0_81 = arith.constant 0 : index
    %c0_82 = arith.constant 0 : index
    %126 = vector.load %arg2[%c1_79, %c1_80, %c0_81, %c0_82] : memref<3x8x1x128xf32, #tpu.memory_space<vmem>>, vector<1x1x1x128xf32>
    %127 = vector.shape_cast %126 : vector<1x1x1x128xf32> to vector<1x128xf32>
    %128 = arith.subf %114, %111 : vector<1x128xf32>
    %129 = arith.addf %115, %110 : vector<1x128xf32>
    %130 = arith.mulf %109, %102 : vector<1x128xf32>
    %131 = arith.addf %103, %130 : vector<1x128xf32>
    %c2_83 = arith.constant 2 : index
    %c1_84 = arith.constant 1 : index
    %c0_85 = arith.constant 0 : index
    %c0_86 = arith.constant 0 : index
    %132 = vector.load %arg2[%c2_83, %c1_84, %c0_85, %c0_86] : memref<3x8x1x128xf32, #tpu.memory_space<vmem>>, vector<1x1x1x128xf32>
    %133 = vector.shape_cast %132 : vector<1x1x1x128xf32> to vector<1x128xf32>
    %134 = arith.mulf %32, %117 : vector<1x128xf32>
    %135 = arith.mulf %33, %122 : vector<1x128xf32>
    %136 = arith.addf %134, %135 : vector<1x128xf32>
    %137 = arith.mulf %34, %128 : vector<1x128xf32>
    %138 = arith.addf %136, %137 : vector<1x128xf32>
    %139 = arith.mulf %32, %118 : vector<1x128xf32>
    %140 = arith.mulf %33, %124 : vector<1x128xf32>
    %141 = arith.addf %139, %140 : vector<1x128xf32>
    %142 = arith.mulf %34, %129 : vector<1x128xf32>
    %143 = arith.addf %141, %142 : vector<1x128xf32>
    %144 = arith.mulf %32, %119 : vector<1x128xf32>
    %145 = arith.mulf %33, %125 : vector<1x128xf32>
    %146 = arith.addf %144, %145 : vector<1x128xf32>
    %147 = arith.mulf %34, %131 : vector<1x128xf32>
    %148 = arith.addf %146, %147 : vector<1x128xf32>
    %149 = arith.mulf %32, %121 : vector<1x128xf32>
    %150 = arith.mulf %33, %127 : vector<1x128xf32>
    %151 = arith.addf %149, %150 : vector<1x128xf32>
    %152 = arith.mulf %34, %133 : vector<1x128xf32>
    %153 = arith.addf %151, %152 : vector<1x128xf32>
    %154 = arith.addf %153, %36 : vector<1x128xf32>
    %155 = arith.mulf %37, %117 : vector<1x128xf32>
    %156 = arith.mulf %39, %122 : vector<1x128xf32>
    %157 = arith.addf %155, %156 : vector<1x128xf32>
    %158 = arith.mulf %40, %128 : vector<1x128xf32>
    %159 = arith.addf %157, %158 : vector<1x128xf32>
    %160 = arith.mulf %37, %118 : vector<1x128xf32>
    %161 = arith.mulf %39, %124 : vector<1x128xf32>
    %162 = arith.addf %160, %161 : vector<1x128xf32>
    %163 = arith.mulf %40, %129 : vector<1x128xf32>
    %164 = arith.addf %162, %163 : vector<1x128xf32>
    %165 = arith.mulf %37, %119 : vector<1x128xf32>
    %166 = arith.mulf %39, %125 : vector<1x128xf32>
    %167 = arith.addf %165, %166 : vector<1x128xf32>
    %168 = arith.mulf %40, %131 : vector<1x128xf32>
    %169 = arith.addf %167, %168 : vector<1x128xf32>
    %170 = arith.mulf %37, %121 : vector<1x128xf32>
    %171 = arith.mulf %39, %127 : vector<1x128xf32>
    %172 = arith.addf %170, %171 : vector<1x128xf32>
    %173 = arith.mulf %40, %133 : vector<1x128xf32>
    %174 = arith.addf %172, %173 : vector<1x128xf32>
    %175 = arith.addf %174, %42 : vector<1x128xf32>
    %176 = arith.mulf %43, %117 : vector<1x128xf32>
    %177 = arith.mulf %44, %122 : vector<1x128xf32>
    %178 = arith.addf %176, %177 : vector<1x128xf32>
    %179 = arith.mulf %46, %128 : vector<1x128xf32>
    %180 = arith.addf %178, %179 : vector<1x128xf32>
    %181 = arith.mulf %43, %118 : vector<1x128xf32>
    %182 = arith.mulf %44, %124 : vector<1x128xf32>
    %183 = arith.addf %181, %182 : vector<1x128xf32>
    %184 = arith.mulf %46, %129 : vector<1x128xf32>
    %185 = arith.addf %183, %184 : vector<1x128xf32>
    %186 = arith.mulf %43, %119 : vector<1x128xf32>
    %187 = arith.mulf %44, %125 : vector<1x128xf32>
    %188 = arith.addf %186, %187 : vector<1x128xf32>
    %189 = arith.mulf %46, %131 : vector<1x128xf32>
    %190 = arith.addf %188, %189 : vector<1x128xf32>
    %191 = arith.mulf %43, %121 : vector<1x128xf32>
    %192 = arith.mulf %44, %127 : vector<1x128xf32>
    %193 = arith.addf %191, %192 : vector<1x128xf32>
    %194 = arith.mulf %46, %133 : vector<1x128xf32>
    %195 = arith.addf %193, %194 : vector<1x128xf32>
    %196 = arith.addf %195, %48 : vector<1x128xf32>
    %c1_87 = arith.constant 1 : index
    %c0_88 = arith.constant 0 : index
    %c0_89 = arith.constant 0 : index
    %c0_90 = arith.constant 0 : index
    %197 = vector.load %arg3[%c1_87, %c0_88, %c0_89, %c0_90] : memref<8x12x1x128xf32, #tpu.memory_space<vmem>>, vector<1x1x1x128xf32>
    %198 = vector.shape_cast %197 : vector<1x1x1x128xf32> to vector<1x128xf32>
    %199 = vector.shape_cast %138 : vector<1x128xf32> to vector<1x1x1x128xf32>
    tpu.vector_store %arg3[%c1_87, %c0_88, %c0_89, %c0_90], %199 {strides = array<i32>} : memref<8x12x1x128xf32, #tpu.memory_space<vmem>>, vector<1x1x1x128xf32>,
    %c1_91 = arith.constant 1 : index
    %c1_92 = arith.constant 1 : index
    %c0_93 = arith.constant 0 : index
    %c0_94 = arith.constant 0 : index
    %200 = vector.load %arg3[%c1_91, %c1_92, %c0_93, %c0_94] : memref<8x12x1x128xf32, #tpu.memory_space<vmem>>, vector<1x1x1x128xf32>
    %201 = vector.shape_cast %200 : vector<1x1x1x128xf32> to vector<1x128xf32>
    %202 = vector.shape_cast %143 : vector<1x128xf32> to vector<1x1x1x128xf32>
    tpu.vector_store %arg3[%c1_91, %c1_92, %c0_93, %c0_94], %202 {strides = array<i32>} : memref<8x12x1x128xf32, #tpu.memory_space<vmem>>, vector<1x1x1x128xf32>,
    %c1_95 = arith.constant 1 : index
    %c2_96 = arith.constant 2 : index
    %c0_97 = arith.constant 0 : index
    %c0_98 = arith.constant 0 : index
    %203 = vector.load %arg3[%c1_95, %c2_96, %c0_97, %c0_98] : memref<8x12x1x128xf32, #tpu.memory_space<vmem>>, vector<1x1x1x128xf32>
    %204 = vector.shape_cast %203 : vector<1x1x1x128xf32> to vector<1x128xf32>
    %205 = vector.shape_cast %148 : vector<1x128xf32> to vector<1x1x1x128xf32>
    tpu.vector_store %arg3[%c1_95, %c2_96, %c0_97, %c0_98], %205 {strides = array<i32>} : memref<8x12x1x128xf32, #tpu.memory_space<vmem>>, vector<1x1x1x128xf32>,
    %c1_99 = arith.constant 1 : index
    %c3_100 = arith.constant 3 : index
    %c0_101 = arith.constant 0 : index
    %c0_102 = arith.constant 0 : index
    %206 = vector.load %arg3[%c1_99, %c3_100, %c0_101, %c0_102] : memref<8x12x1x128xf32, #tpu.memory_space<vmem>>, vector<1x1x1x128xf32>
    %207 = vector.shape_cast %206 : vector<1x1x1x128xf32> to vector<1x128xf32>
    %208 = vector.shape_cast %154 : vector<1x128xf32> to vector<1x1x1x128xf32>
    tpu.vector_store %arg3[%c1_99, %c3_100, %c0_101, %c0_102], %208 {strides = array<i32>} : memref<8x12x1x128xf32, #tpu.memory_space<vmem>>, vector<1x1x1x128xf32>,
    %c1_103 = arith.constant 1 : index
    %c4_104 = arith.constant 4 : index
    %c0_105 = arith.constant 0 : index
    %c0_106 = arith.constant 0 : index
    %209 = vector.load %arg3[%c1_103, %c4_104, %c0_105, %c0_106] : memref<8x12x1x128xf32, #tpu.memory_space<vmem>>, vector<1x1x1x128xf32>
    %210 = vector.shape_cast %209 : vector<1x1x1x128xf32> to vector<1x128xf32>
    %211 = vector.shape_cast %159 : vector<1x128xf32> to vector<1x1x1x128xf32>
    tpu.vector_store %arg3[%c1_103, %c4_104, %c0_105, %c0_106], %211 {strides = array<i32>} : memref<8x12x1x128xf32, #tpu.memory_space<vmem>>, vector<1x1x1x128xf32>,
    %c1_107 = arith.constant 1 : index
    %c5_108 = arith.constant 5 : index
    %c0_109 = arith.constant 0 : index
    %c0_110 = arith.constant 0 : index
    %212 = vector.load %arg3[%c1_107, %c5_108, %c0_109, %c0_110] : memref<8x12x1x128xf32, #tpu.memory_space<vmem>>, vector<1x1x1x128xf32>
    %213 = vector.shape_cast %212 : vector<1x1x1x128xf32> to vector<1x128xf32>
    %214 = vector.shape_cast %164 : vector<1x128xf32> to vector<1x1x1x128xf32>
    tpu.vector_store %arg3[%c1_107, %c5_108, %c0_109, %c0_110], %214 {strides = array<i32>} : memref<8x12x1x128xf32, #tpu.memory_space<vmem>>, vector<1x1x1x128xf32>,
    %c1_111 = arith.constant 1 : index
    %c6_112 = arith.constant 6 : index
    %c0_113 = arith.constant 0 : index
    %c0_114 = arith.constant 0 : index
    %215 = vector.load %arg3[%c1_111, %c6_112, %c0_113, %c0_114] : memref<8x12x1x128xf32, #tpu.memory_space<vmem>>, vector<1x1x1x128xf32>
    %216 = vector.shape_cast %215 : vector<1x1x1x128xf32> to vector<1x128xf32>
    %217 = vector.shape_cast %169 : vector<1x128xf32> to vector<1x1x1x128xf32>
    tpu.vector_store %arg3[%c1_111, %c6_112, %c0_113, %c0_114], %217 {strides = array<i32>} : memref<8x12x1x128xf32, #tpu.memory_space<vmem>>, vector<1x1x1x128xf32>,
    %c1_115 = arith.constant 1 : index
    %c7_116 = arith.constant 7 : index
    %c0_117 = arith.constant 0 : index
    %c0_118 = arith.constant 0 : index
    %218 = vector.load %arg3[%c1_115, %c7_116, %c0_117, %c0_118] : memref<8x12x1x128xf32, #tpu.memory_space<vmem>>, vector<1x1x1x128xf32>
    %219 = vector.shape_cast %218 : vector<1x1x1x128xf32> to vector<1x128xf32>
    %220 = vector.shape_cast %175 : vector<1x128xf32> to vector<1x1x1x128xf32>
    tpu.vector_store %arg3[%c1_115, %c7_116, %c0_117, %c0_118], %220 {strides = array<i32>} : memref<8x12x1x128xf32, #tpu.memory_space<vmem>>, vector<1x1x1x128xf32>,
    %c1_119 = arith.constant 1 : index
    %c8_120 = arith.constant 8 : index
    %c0_121 = arith.constant 0 : index
    %c0_122 = arith.constant 0 : index
    %221 = vector.load %arg3[%c1_119, %c8_120, %c0_121, %c0_122] : memref<8x12x1x128xf32, #tpu.memory_space<vmem>>, vector<1x1x1x128xf32>
    %222 = vector.shape_cast %221 : vector<1x1x1x128xf32> to vector<1x128xf32>
    %223 = vector.shape_cast %180 : vector<1x128xf32> to vector<1x1x1x128xf32>
    tpu.vector_store %arg3[%c1_119, %c8_120, %c0_121, %c0_122], %223 {strides = array<i32>} : memref<8x12x1x128xf32, #tpu.memory_space<vmem>>, vector<1x1x1x128xf32>,
    %c1_123 = arith.constant 1 : index
    %c9_124 = arith.constant 9 : index
    %c0_125 = arith.constant 0 : index
    %c0_126 = arith.constant 0 : index
    %224 = vector.load %arg3[%c1_123, %c9_124, %c0_125, %c0_126] : memref<8x12x1x128xf32, #tpu.memory_space<vmem>>, vector<1x1x1x128xf32>
    %225 = vector.shape_cast %224 : vector<1x1x1x128xf32> to vector<1x128xf32>
    %226 = vector.shape_cast %185 : vector<1x128xf32> to vector<1x1x1x128xf32>
    tpu.vector_store %arg3[%c1_123, %c9_124, %c0_125, %c0_126], %226 {strides = array<i32>} : memref<8x12x1x128xf32, #tpu.memory_space<vmem>>, vector<1x1x1x128xf32>,
    %c1_127 = arith.constant 1 : index
    %c10_128 = arith.constant 10 : index
    %c0_129 = arith.constant 0 : index
    %c0_130 = arith.constant 0 : index
    %227 = vector.load %arg3[%c1_127, %c10_128, %c0_129, %c0_130] : memref<8x12x1x128xf32, #tpu.memory_space<vmem>>, vector<1x1x1x128xf32>
    %228 = vector.shape_cast %227 : vector<1x1x1x128xf32> to vector<1x128xf32>
    %229 = vector.shape_cast %190 : vector<1x128xf32> to vector<1x1x1x128xf32>
    tpu.vector_store %arg3[%c1_127, %c10_128, %c0_129, %c0_130], %229 {strides = array<i32>} : memref<8x12x1x128xf32, #tpu.memory_space<vmem>>, vector<1x1x1x128xf32>,
    %c1_131 = arith.constant 1 : index
    %c11_132 = arith.constant 11 : index
    %c0_133 = arith.constant 0 : index
    %c0_134 = arith.constant 0 : index
    %230 = vector.load %arg3[%c1_131, %c11_132, %c0_133, %c0_134] : memref<8x12x1x128xf32, #tpu.memory_space<vmem>>, vector<1x1x1x128xf32>
    %231 = vector.shape_cast %230 : vector<1x1x1x128xf32> to vector<1x128xf32>
    %232 = vector.shape_cast %196 : vector<1x128xf32> to vector<1x1x1x128xf32>
    tpu.vector_store %arg3[%c1_131, %c11_132, %c0_133, %c0_134], %232 {strides = array<i32>} : memref<8x12x1x128xf32, #tpu.memory_space<vmem>>, vector<1x1x1x128xf32>,
    %c0_135 = arith.constant 0 : index
    %c2_136 = arith.constant 2 : index
    %c0_137 = arith.constant 0 : index
    %c0_138 = arith.constant 0 : index
    %233 = vector.load %arg1[%c0_135, %c2_136, %c0_137, %c0_138] : memref<3x8x1x128xf32, #tpu.memory_space<vmem>>, vector<1x1x1x128xf32>
    %234 = vector.shape_cast %233 : vector<1x1x1x128xf32> to vector<1x128xf32>
    %c1_139 = arith.constant 1 : index
    %c2_140 = arith.constant 2 : index
    %c0_141 = arith.constant 0 : index
    %c0_142 = arith.constant 0 : index
    %235 = vector.load %arg1[%c1_139, %c2_140, %c0_141, %c0_142] : memref<3x8x1x128xf32, #tpu.memory_space<vmem>>, vector<1x1x1x128xf32>
    %236 = vector.shape_cast %235 : vector<1x1x1x128xf32> to vector<1x128xf32>
    %c2_143 = arith.constant 2 : index
    %c2_144 = arith.constant 2 : index
    %c0_145 = arith.constant 0 : index
    %c0_146 = arith.constant 0 : index
    %237 = vector.load %arg1[%c2_143, %c2_144, %c0_145, %c0_146] : memref<3x8x1x128xf32, #tpu.memory_space<vmem>>, vector<1x1x1x128xf32>
    %238 = vector.shape_cast %237 : vector<1x1x1x128xf32> to vector<1x128xf32>
    %239 = arith.mulf %234, %234 : vector<1x128xf32>
    %240 = arith.mulf %236, %236 : vector<1x128xf32>
    %241 = arith.addf %239, %240 : vector<1x128xf32>
    %242 = arith.mulf %238, %238 : vector<1x128xf32>
    %243 = arith.addf %241, %242 : vector<1x128xf32>
    %cst_147 = arith.constant 9.99999996E-13 : f32
    %244 = vector.broadcast %cst_147 : f32 to vector<1x128xf32>
    %245 = arith.addf %243, %244 : vector<1x128xf32>
    %246 = math.rsqrt %245 : vector<1x128xf32>
    %247 = arith.mulf %245, %246 : vector<1x128xf32>
    %248 = arith.mulf %234, %246 : vector<1x128xf32>
    %249 = arith.mulf %236, %246 : vector<1x128xf32>
    %250 = arith.mulf %238, %246 : vector<1x128xf32>
    %251 = math.cos %247 : vector<1x128xf32>
    %252 = math.sin %247 : vector<1x128xf32>
    %cst_148 = arith.constant 1.000000e+00 : f32
    %253 = vector.broadcast %cst_148 : f32 to vector<1x128xf32>
    %254 = arith.subf %253, %251 : vector<1x128xf32>
    %255 = arith.mulf %254, %248 : vector<1x128xf32>
    %256 = arith.mulf %254, %249 : vector<1x128xf32>
    %257 = arith.mulf %254, %250 : vector<1x128xf32>
    %258 = arith.mulf %252, %248 : vector<1x128xf32>
    %259 = arith.mulf %252, %249 : vector<1x128xf32>
    %260 = arith.mulf %252, %250 : vector<1x128xf32>
    %261 = arith.mulf %255, %249 : vector<1x128xf32>
    %262 = arith.mulf %255, %250 : vector<1x128xf32>
    %263 = arith.mulf %256, %250 : vector<1x128xf32>
    %264 = arith.mulf %255, %248 : vector<1x128xf32>
    %265 = arith.addf %251, %264 : vector<1x128xf32>
    %266 = arith.subf %261, %260 : vector<1x128xf32>
    %267 = arith.addf %262, %259 : vector<1x128xf32>
    %c0_149 = arith.constant 0 : index
    %c2_150 = arith.constant 2 : index
    %c0_151 = arith.constant 0 : index
    %c0_152 = arith.constant 0 : index
    %268 = vector.load %arg2[%c0_149, %c2_150, %c0_151, %c0_152] : memref<3x8x1x128xf32, #tpu.memory_space<vmem>>, vector<1x1x1x128xf32>
    %269 = vector.shape_cast %268 : vector<1x1x1x128xf32> to vector<1x128xf32>
    %270 = arith.addf %261, %260 : vector<1x128xf32>
    %271 = arith.mulf %256, %249 : vector<1x128xf32>
    %272 = arith.addf %251, %271 : vector<1x128xf32>
    %273 = arith.subf %263, %258 : vector<1x128xf32>
    %c1_153 = arith.constant 1 : index
    %c2_154 = arith.constant 2 : index
    %c0_155 = arith.constant 0 : index
    %c0_156 = arith.constant 0 : index
    %274 = vector.load %arg2[%c1_153, %c2_154, %c0_155, %c0_156] : memref<3x8x1x128xf32, #tpu.memory_space<vmem>>, vector<1x1x1x128xf32>
    %275 = vector.shape_cast %274 : vector<1x1x1x128xf32> to vector<1x128xf32>
    %276 = arith.subf %262, %259 : vector<1x128xf32>
    %277 = arith.addf %263, %258 : vector<1x128xf32>
    %278 = arith.mulf %257, %250 : vector<1x128xf32>
    %279 = arith.addf %251, %278 : vector<1x128xf32>
    %c2_157 = arith.constant 2 : index
    %c2_158 = arith.constant 2 : index
    %c0_159 = arith.constant 0 : index
    %c0_160 = arith.constant 0 : index
    %280 = vector.load %arg2[%c2_157, %c2_158, %c0_159, %c0_160] : memref<3x8x1x128xf32, #tpu.memory_space<vmem>>, vector<1x1x1x128xf32>
    %281 = vector.shape_cast %280 : vector<1x1x1x128xf32> to vector<1x128xf32>
    %282 = arith.mulf %138, %265 : vector<1x128xf32>
    %283 = arith.mulf %143, %270 : vector<1x128xf32>
    %284 = arith.addf %282, %283 : vector<1x128xf32>
    %285 = arith.mulf %148, %276 : vector<1x128xf32>
    %286 = arith.addf %284, %285 : vector<1x128xf32>
    %287 = arith.mulf %138, %266 : vector<1x128xf32>
    %288 = arith.mulf %143, %272 : vector<1x128xf32>
    %289 = arith.addf %287, %288 : vector<1x128xf32>
    %290 = arith.mulf %148, %277 : vector<1x128xf32>
    %291 = arith.addf %289, %290 : vector<1x128xf32>
    %292 = arith.mulf %138, %267 : vector<1x128xf32>
    %293 = arith.mulf %143, %273 : vector<1x128xf32>
    %294 = arith.addf %292, %293 : vector<1x128xf32>
    %295 = arith.mulf %148, %279 : vector<1x128xf32>
    %296 = arith.addf %294, %295 : vector<1x128xf32>
    %297 = arith.mulf %138, %269 : vector<1x128xf32>
    %298 = arith.mulf %143, %275 : vector<1x128xf32>
    %299 = arith.addf %297, %298 : vector<1x128xf32>
    %300 = arith.mulf %148, %281 : vector<1x128xf32>
    %301 = arith.addf %299, %300 : vector<1x128xf32>
    %302 = arith.addf %301, %154 : vector<1x128xf32>
    %303 = arith.mulf %159, %265 : vector<1x128xf32>
    %304 = arith.mulf %164, %270 : vector<1x128xf32>
    %305 = arith.addf %303, %304 : vector<1x128xf32>
    %306 = arith.mulf %169, %276 : vector<1x128xf32>
    %307 = arith.addf %305, %306 : vector<1x128xf32>
    %308 = arith.mulf %159, %266 : vector<1x128xf32>
    %309 = arith.mulf %164, %272 : vector<1x128xf32>
    %310 = arith.addf %308, %309 : vector<1x128xf32>
    %311 = arith.mulf %169, %277 : vector<1x128xf32>
    %312 = arith.addf %310, %311 : vector<1x128xf32>
    %313 = arith.mulf %159, %267 : vector<1x128xf32>
    %314 = arith.mulf %164, %273 : vector<1x128xf32>
    %315 = arith.addf %313, %314 : vector<1x128xf32>
    %316 = arith.mulf %169, %279 : vector<1x128xf32>
    %317 = arith.addf %315, %316 : vector<1x128xf32>
    %318 = arith.mulf %159, %269 : vector<1x128xf32>
    %319 = arith.mulf %164, %275 : vector<1x128xf32>
    %320 = arith.addf %318, %319 : vector<1x128xf32>
    %321 = arith.mulf %169, %281 : vector<1x128xf32>
    %322 = arith.addf %320, %321 : vector<1x128xf32>
    %323 = arith.addf %322, %175 : vector<1x128xf32>
    %324 = arith.mulf %180, %265 : vector<1x128xf32>
    %325 = arith.mulf %185, %270 : vector<1x128xf32>
    %326 = arith.addf %324, %325 : vector<1x128xf32>
    %327 = arith.mulf %190, %276 : vector<1x128xf32>
    %328 = arith.addf %326, %327 : vector<1x128xf32>
    %329 = arith.mulf %180, %266 : vector<1x128xf32>
    %330 = arith.mulf %185, %272 : vector<1x128xf32>
    %331 = arith.addf %329, %330 : vector<1x128xf32>
    %332 = arith.mulf %190, %277 : vector<1x128xf32>
    %333 = arith.addf %331, %332 : vector<1x128xf32>
    %334 = arith.mulf %180, %267 : vector<1x128xf32>
    %335 = arith.mulf %185, %273 : vector<1x128xf32>
    %336 = arith.addf %334, %335 : vector<1x128xf32>
    %337 = arith.mulf %190, %279 : vector<1x128xf32>
    %338 = arith.addf %336, %337 : vector<1x128xf32>
    %339 = arith.mulf %180, %269 : vector<1x128xf32>
    %340 = arith.mulf %185, %275 : vector<1x128xf32>
    %341 = arith.addf %339, %340 : vector<1x128xf32>
    %342 = arith.mulf %190, %281 : vector<1x128xf32>
    %343 = arith.addf %341, %342 : vector<1x128xf32>
    %344 = arith.addf %343, %196 : vector<1x128xf32>
    %c2_161 = arith.constant 2 : index
    %c0_162 = arith.constant 0 : index
    %c0_163 = arith.constant 0 : index
    %c0_164 = arith.constant 0 : index
    %345 = vector.load %arg3[%c2_161, %c0_162, %c0_163, %c0_164] : memref<8x12x1x128xf32, #tpu.memory_space<vmem>>, vector<1x1x1x128xf32>
    %346 = vector.shape_cast %345 : vector<1x1x1x128xf32> to vector<1x128xf32>
    %347 = vector.shape_cast %286 : vector<1x128xf32> to vector<1x1x1x128xf32>
    tpu.vector_store %arg3[%c2_161, %c0_162, %c0_163, %c0_164], %347 {strides = array<i32>} : memref<8x12x1x128xf32, #tpu.memory_space<vmem>>, vector<1x1x1x128xf32>,
    %c2_165 = arith.constant 2 : index
    %c1_166 = arith.constant 1 : index
    %c0_167 = arith.constant 0 : index
    %c0_168 = arith.constant 0 : index
    %348 = vector.load %arg3[%c2_165, %c1_166, %c0_167, %c0_168] : memref<8x12x1x128xf32, #tpu.memory_space<vmem>>, vector<1x1x1x128xf32>
    %349 = vector.shape_cast %348 : vector<1x1x1x128xf32> to vector<1x128xf32>
    %350 = vector.shape_cast %291 : vector<1x128xf32> to vector<1x1x1x128xf32>
    tpu.vector_store %arg3[%c2_165, %c1_166, %c0_167, %c0_168], %350 {strides = array<i32>} : memref<8x12x1x128xf32, #tpu.memory_space<vmem>>, vector<1x1x1x128xf32>,
    %c2_169 = arith.constant 2 : index
    %c2_170 = arith.constant 2 : index
    %c0_171 = arith.constant 0 : index
    %c0_172 = arith.constant 0 : index
    %351 = vector.load %arg3[%c2_169, %c2_170, %c0_171, %c0_172] : memref<8x12x1x128xf32, #tpu.memory_space<vmem>>, vector<1x1x1x128xf32>
    %352 = vector.shape_cast %351 : vector<1x1x1x128xf32> to vector<1x128xf32>
    %353 = vector.shape_cast %296 : vector<1x128xf32> to vector<1x1x1x128xf32>
    tpu.vector_store %arg3[%c2_169, %c2_170, %c0_171, %c0_172], %353 {strides = array<i32>} : memref<8x12x1x128xf32, #tpu.memory_space<vmem>>, vector<1x1x1x128xf32>,
    %c2_173 = arith.constant 2 : index
    %c3_174 = arith.constant 3 : index
    %c0_175 = arith.constant 0 : index
    %c0_176 = arith.constant 0 : index
    %354 = vector.load %arg3[%c2_173, %c3_174, %c0_175, %c0_176] : memref<8x12x1x128xf32, #tpu.memory_space<vmem>>, vector<1x1x1x128xf32>
    %355 = vector.shape_cast %354 : vector<1x1x1x128xf32> to vector<1x128xf32>
    %356 = vector.shape_cast %302 : vector<1x128xf32> to vector<1x1x1x128xf32>
    tpu.vector_store %arg3[%c2_173, %c3_174, %c0_175, %c0_176], %356 {strides = array<i32>} : memref<8x12x1x128xf32, #tpu.memory_space<vmem>>, vector<1x1x1x128xf32>,
    %c2_177 = arith.constant 2 : index
    %c4_178 = arith.constant 4 : index
    %c0_179 = arith.constant 0 : index
    %c0_180 = arith.constant 0 : index
    %357 = vector.load %arg3[%c2_177, %c4_178, %c0_179, %c0_180] : memref<8x12x1x128xf32, #tpu.memory_space<vmem>>, vector<1x1x1x128xf32>
    %358 = vector.shape_cast %357 : vector<1x1x1x128xf32> to vector<1x128xf32>
    %359 = vector.shape_cast %307 : vector<1x128xf32> to vector<1x1x1x128xf32>
    tpu.vector_store %arg3[%c2_177, %c4_178, %c0_179, %c0_180], %359 {strides = array<i32>} : memref<8x12x1x128xf32, #tpu.memory_space<vmem>>, vector<1x1x1x128xf32>,
    %c2_181 = arith.constant 2 : index
    %c5_182 = arith.constant 5 : index
    %c0_183 = arith.constant 0 : index
    %c0_184 = arith.constant 0 : index
    %360 = vector.load %arg3[%c2_181, %c5_182, %c0_183, %c0_184] : memref<8x12x1x128xf32, #tpu.memory_space<vmem>>, vector<1x1x1x128xf32>
    %361 = vector.shape_cast %360 : vector<1x1x1x128xf32> to vector<1x128xf32>
    %362 = vector.shape_cast %312 : vector<1x128xf32> to vector<1x1x1x128xf32>
    tpu.vector_store %arg3[%c2_181, %c5_182, %c0_183, %c0_184], %362 {strides = array<i32>} : memref<8x12x1x128xf32, #tpu.memory_space<vmem>>, vector<1x1x1x128xf32>,
    %c2_185 = arith.constant 2 : index
    %c6_186 = arith.constant 6 : index
    %c0_187 = arith.constant 0 : index
    %c0_188 = arith.constant 0 : index
    %363 = vector.load %arg3[%c2_185, %c6_186, %c0_187, %c0_188] : memref<8x12x1x128xf32, #tpu.memory_space<vmem>>, vector<1x1x1x128xf32>
    %364 = vector.shape_cast %363 : vector<1x1x1x128xf32> to vector<1x128xf32>
    %365 = vector.shape_cast %317 : vector<1x128xf32> to vector<1x1x1x128xf32>
    tpu.vector_store %arg3[%c2_185, %c6_186, %c0_187, %c0_188], %365 {strides = array<i32>} : memref<8x12x1x128xf32, #tpu.memory_space<vmem>>, vector<1x1x1x128xf32>,
    %c2_189 = arith.constant 2 : index
    %c7_190 = arith.constant 7 : index
    %c0_191 = arith.constant 0 : index
    %c0_192 = arith.constant 0 : index
    %366 = vector.load %arg3[%c2_189, %c7_190, %c0_191, %c0_192] : memref<8x12x1x128xf32, #tpu.memory_space<vmem>>, vector<1x1x1x128xf32>
    %367 = vector.shape_cast %366 : vector<1x1x1x128xf32> to vector<1x128xf32>
    %368 = vector.shape_cast %323 : vector<1x128xf32> to vector<1x1x1x128xf32>
    tpu.vector_store %arg3[%c2_189, %c7_190, %c0_191, %c0_192], %368 {strides = array<i32>} : memref<8x12x1x128xf32, #tpu.memory_space<vmem>>, vector<1x1x1x128xf32>,
    %c2_193 = arith.constant 2 : index
    %c8_194 = arith.constant 8 : index
    %c0_195 = arith.constant 0 : index
    %c0_196 = arith.constant 0 : index
    %369 = vector.load %arg3[%c2_193, %c8_194, %c0_195, %c0_196] : memref<8x12x1x128xf32, #tpu.memory_space<vmem>>, vector<1x1x1x128xf32>
    %370 = vector.shape_cast %369 : vector<1x1x1x128xf32> to vector<1x128xf32>
    %371 = vector.shape_cast %328 : vector<1x128xf32> to vector<1x1x1x128xf32>
    tpu.vector_store %arg3[%c2_193, %c8_194, %c0_195, %c0_196], %371 {strides = array<i32>} : memref<8x12x1x128xf32, #tpu.memory_space<vmem>>, vector<1x1x1x128xf32>,
    %c2_197 = arith.constant 2 : index
    %c9_198 = arith.constant 9 : index
    %c0_199 = arith.constant 0 : index
    %c0_200 = arith.constant 0 : index
    %372 = vector.load %arg3[%c2_197, %c9_198, %c0_199, %c0_200] : memref<8x12x1x128xf32, #tpu.memory_space<vmem>>, vector<1x1x1x128xf32>
    %373 = vector.shape_cast %372 : vector<1x1x1x128xf32> to vector<1x128xf32>
    %374 = vector.shape_cast %333 : vector<1x128xf32> to vector<1x1x1x128xf32>
    tpu.vector_store %arg3[%c2_197, %c9_198, %c0_199, %c0_200], %374 {strides = array<i32>} : memref<8x12x1x128xf32, #tpu.memory_space<vmem>>, vector<1x1x1x128xf32>,
    %c2_201 = arith.constant 2 : index
    %c10_202 = arith.constant 10 : index
    %c0_203 = arith.constant 0 : index
    %c0_204 = arith.constant 0 : index
    %375 = vector.load %arg3[%c2_201, %c10_202, %c0_203, %c0_204] : memref<8x12x1x128xf32, #tpu.memory_space<vmem>>, vector<1x1x1x128xf32>
    %376 = vector.shape_cast %375 : vector<1x1x1x128xf32> to vector<1x128xf32>
    %377 = vector.shape_cast %338 : vector<1x128xf32> to vector<1x1x1x128xf32>
    tpu.vector_store %arg3[%c2_201, %c10_202, %c0_203, %c0_204], %377 {strides = array<i32>} : memref<8x12x1x128xf32, #tpu.memory_space<vmem>>, vector<1x1x1x128xf32>,
    %c2_205 = arith.constant 2 : index
    %c11_206 = arith.constant 11 : index
    %c0_207 = arith.constant 0 : index
    %c0_208 = arith.constant 0 : index
    %378 = vector.load %arg3[%c2_205, %c11_206, %c0_207, %c0_208] : memref<8x12x1x128xf32, #tpu.memory_space<vmem>>, vector<1x1x1x128xf32>
    %379 = vector.shape_cast %378 : vector<1x1x1x128xf32> to vector<1x128xf32>
    %380 = vector.shape_cast %344 : vector<1x128xf32> to vector<1x1x1x128xf32>
    tpu.vector_store %arg3[%c2_205, %c11_206, %c0_207, %c0_208], %380 {strides = array<i32>} : memref<8x12x1x128xf32, #tpu.memory_space<vmem>>, vector<1x1x1x128xf32>,
    %c0_209 = arith.constant 0 : index
    %c3_210 = arith.constant 3 : index
    %c0_211 = arith.constant 0 : index
    %c0_212 = arith.constant 0 : index
    %381 = vector.load %arg1[%c0_209, %c3_210, %c0_211, %c0_212] : memref<3x8x1x128xf32, #tpu.memory_space<vmem>>, vector<1x1x1x128xf32>
    %382 = vector.shape_cast %381 : vector<1x1x1x128xf32> to vector<1x128xf32>
    %c1_213 = arith.constant 1 : index
    %c3_214 = arith.constant 3 : index
    %c0_215 = arith.constant 0 : index
    %c0_216 = arith.constant 0 : index
    %383 = vector.load %arg1[%c1_213, %c3_214, %c0_215, %c0_216] : memref<3x8x1x128xf32, #tpu.memory_space<vmem>>, vector<1x1x1x128xf32>
    %384 = vector.shape_cast %383 : vector<1x1x1x128xf32> to vector<1x128xf32>
    %c2_217 = arith.constant 2 : index
    %c3_218 = arith.constant 3 : index
    %c0_219 = arith.constant 0 : index
    %c0_220 = arith.constant 0 : index
    %385 = vector.load %arg1[%c2_217, %c3_218, %c0_219, %c0_220] : memref<3x8x1x128xf32, #tpu.memory_space<vmem>>, vector<1x1x1x128xf32>
    %386 = vector.shape_cast %385 : vector<1x1x1x128xf32> to vector<1x128xf32>
    %387 = arith.mulf %382, %382 : vector<1x128xf32>
    %388 = arith.mulf %384, %384 : vector<1x128xf32>
    %389 = arith.addf %387, %388 : vector<1x128xf32>
    %390 = arith.mulf %386, %386 : vector<1x128xf32>
    %391 = arith.addf %389, %390 : vector<1x128xf32>
    %cst_221 = arith.constant 9.99999996E-13 : f32
    %392 = vector.broadcast %cst_221 : f32 to vector<1x128xf32>
    %393 = arith.addf %391, %392 : vector<1x128xf32>
    %394 = math.rsqrt %393 : vector<1x128xf32>
    %395 = arith.mulf %393, %394 : vector<1x128xf32>
    %396 = arith.mulf %382, %394 : vector<1x128xf32>
    %397 = arith.mulf %384, %394 : vector<1x128xf32>
    %398 = arith.mulf %386, %394 : vector<1x128xf32>
    %399 = math.cos %395 : vector<1x128xf32>
    %400 = math.sin %395 : vector<1x128xf32>
    %cst_222 = arith.constant 1.000000e+00 : f32
    %401 = vector.broadcast %cst_222 : f32 to vector<1x128xf32>
    %402 = arith.subf %401, %399 : vector<1x128xf32>
    %403 = arith.mulf %402, %396 : vector<1x128xf32>
    %404 = arith.mulf %402, %397 : vector<1x128xf32>
    %405 = arith.mulf %402, %398 : vector<1x128xf32>
    %406 = arith.mulf %400, %396 : vector<1x128xf32>
    %407 = arith.mulf %400, %397 : vector<1x128xf32>
    %408 = arith.mulf %400, %398 : vector<1x128xf32>
    %409 = arith.mulf %403, %397 : vector<1x128xf32>
    %410 = arith.mulf %403, %398 : vector<1x128xf32>
    %411 = arith.mulf %404, %398 : vector<1x128xf32>
    %412 = arith.mulf %403, %396 : vector<1x128xf32>
    %413 = arith.addf %399, %412 : vector<1x128xf32>
    %414 = arith.subf %409, %408 : vector<1x128xf32>
    %415 = arith.addf %410, %407 : vector<1x128xf32>
    %c0_223 = arith.constant 0 : index
    %c3_224 = arith.constant 3 : index
    %c0_225 = arith.constant 0 : index
    %c0_226 = arith.constant 0 : index
    %416 = vector.load %arg2[%c0_223, %c3_224, %c0_225, %c0_226] : memref<3x8x1x128xf32, #tpu.memory_space<vmem>>, vector<1x1x1x128xf32>
    %417 = vector.shape_cast %416 : vector<1x1x1x128xf32> to vector<1x128xf32>
    %418 = arith.addf %409, %408 : vector<1x128xf32>
    %419 = arith.mulf %404, %397 : vector<1x128xf32>
    %420 = arith.addf %399, %419 : vector<1x128xf32>
    %421 = arith.subf %411, %406 : vector<1x128xf32>
    %c1_227 = arith.constant 1 : index
    %c3_228 = arith.constant 3 : index
    %c0_229 = arith.constant 0 : index
    %c0_230 = arith.constant 0 : index
    %422 = vector.load %arg2[%c1_227, %c3_228, %c0_229, %c0_230] : memref<3x8x1x128xf32, #tpu.memory_space<vmem>>, vector<1x1x1x128xf32>
    %423 = vector.shape_cast %422 : vector<1x1x1x128xf32> to vector<1x128xf32>
    %424 = arith.subf %410, %407 : vector<1x128xf32>
    %425 = arith.addf %411, %406 : vector<1x128xf32>
    %426 = arith.mulf %405, %398 : vector<1x128xf32>
    %427 = arith.addf %399, %426 : vector<1x128xf32>
    %c2_231 = arith.constant 2 : index
    %c3_232 = arith.constant 3 : index
    %c0_233 = arith.constant 0 : index
    %c0_234 = arith.constant 0 : index
    %428 = vector.load %arg2[%c2_231, %c3_232, %c0_233, %c0_234] : memref<3x8x1x128xf32, #tpu.memory_space<vmem>>, vector<1x1x1x128xf32>
    %429 = vector.shape_cast %428 : vector<1x1x1x128xf32> to vector<1x128xf32>
    %430 = arith.mulf %286, %413 : vector<1x128xf32>
    %431 = arith.mulf %291, %418 : vector<1x128xf32>
    %432 = arith.addf %430, %431 : vector<1x128xf32>
    %433 = arith.mulf %296, %424 : vector<1x128xf32>
    %434 = arith.addf %432, %433 : vector<1x128xf32>
    %435 = arith.mulf %286, %414 : vector<1x128xf32>
    %436 = arith.mulf %291, %420 : vector<1x128xf32>
    %437 = arith.addf %435, %436 : vector<1x128xf32>
    %438 = arith.mulf %296, %425 : vector<1x128xf32>
    %439 = arith.addf %437, %438 : vector<1x128xf32>
    %440 = arith.mulf %286, %415 : vector<1x128xf32>
    %441 = arith.mulf %291, %421 : vector<1x128xf32>
    %442 = arith.addf %440, %441 : vector<1x128xf32>
    %443 = arith.mulf %296, %427 : vector<1x128xf32>
    %444 = arith.addf %442, %443 : vector<1x128xf32>
    %445 = arith.mulf %286, %417 : vector<1x128xf32>
    %446 = arith.mulf %291, %423 : vector<1x128xf32>
    %447 = arith.addf %445, %446 : vector<1x128xf32>
    %448 = arith.mulf %296, %429 : vector<1x128xf32>
    %449 = arith.addf %447, %448 : vector<1x128xf32>
    %450 = arith.addf %449, %302 : vector<1x128xf32>
    %451 = arith.mulf %307, %413 : vector<1x128xf32>
    %452 = arith.mulf %312, %418 : vector<1x128xf32>
    %453 = arith.addf %451, %452 : vector<1x128xf32>
    %454 = arith.mulf %317, %424 : vector<1x128xf32>
    %455 = arith.addf %453, %454 : vector<1x128xf32>
    %456 = arith.mulf %307, %414 : vector<1x128xf32>
    %457 = arith.mulf %312, %420 : vector<1x128xf32>
    %458 = arith.addf %456, %457 : vector<1x128xf32>
    %459 = arith.mulf %317, %425 : vector<1x128xf32>
    %460 = arith.addf %458, %459 : vector<1x128xf32>
    %461 = arith.mulf %307, %415 : vector<1x128xf32>
    %462 = arith.mulf %312, %421 : vector<1x128xf32>
    %463 = arith.addf %461, %462 : vector<1x128xf32>
    %464 = arith.mulf %317, %427 : vector<1x128xf32>
    %465 = arith.addf %463, %464 : vector<1x128xf32>
    %466 = arith.mulf %307, %417 : vector<1x128xf32>
    %467 = arith.mulf %312, %423 : vector<1x128xf32>
    %468 = arith.addf %466, %467 : vector<1x128xf32>
    %469 = arith.mulf %317, %429 : vector<1x128xf32>
    %470 = arith.addf %468, %469 : vector<1x128xf32>
    %471 = arith.addf %470, %323 : vector<1x128xf32>
    %472 = arith.mulf %328, %413 : vector<1x128xf32>
    %473 = arith.mulf %333, %418 : vector<1x128xf32>
    %474 = arith.addf %472, %473 : vector<1x128xf32>
    %475 = arith.mulf %338, %424 : vector<1x128xf32>
    %476 = arith.addf %474, %475 : vector<1x128xf32>
    %477 = arith.mulf %328, %414 : vector<1x128xf32>
    %478 = arith.mulf %333, %420 : vector<1x128xf32>
    %479 = arith.addf %477, %478 : vector<1x128xf32>
    %480 = arith.mulf %338, %425 : vector<1x128xf32>
    %481 = arith.addf %479, %480 : vector<1x128xf32>
    %482 = arith.mulf %328, %415 : vector<1x128xf32>
    %483 = arith.mulf %333, %421 : vector<1x128xf32>
    %484 = arith.addf %482, %483 : vector<1x128xf32>
    %485 = arith.mulf %338, %427 : vector<1x128xf32>
    %486 = arith.addf %484, %485 : vector<1x128xf32>
    %487 = arith.mulf %328, %417 : vector<1x128xf32>
    %488 = arith.mulf %333, %423 : vector<1x128xf32>
    %489 = arith.addf %487, %488 : vector<1x128xf32>
    %490 = arith.mulf %338, %429 : vector<1x128xf32>
    %491 = arith.addf %489, %490 : vector<1x128xf32>
    %492 = arith.addf %491, %344 : vector<1x128xf32>
    %c3_235 = arith.constant 3 : index
    %c0_236 = arith.constant 0 : index
    %c0_237 = arith.constant 0 : index
    %c0_238 = arith.constant 0 : index
    %493 = vector.load %arg3[%c3_235, %c0_236, %c0_237, %c0_238] : memref<8x12x1x128xf32, #tpu.memory_space<vmem>>, vector<1x1x1x128xf32>
    %494 = vector.shape_cast %493 : vector<1x1x1x128xf32> to vector<1x128xf32>
    %495 = vector.shape_cast %434 : vector<1x128xf32> to vector<1x1x1x128xf32>
    tpu.vector_store %arg3[%c3_235, %c0_236, %c0_237, %c0_238], %495 {strides = array<i32>} : memref<8x12x1x128xf32, #tpu.memory_space<vmem>>, vector<1x1x1x128xf32>,
    %c3_239 = arith.constant 3 : index
    %c1_240 = arith.constant 1 : index
    %c0_241 = arith.constant 0 : index
    %c0_242 = arith.constant 0 : index
    %496 = vector.load %arg3[%c3_239, %c1_240, %c0_241, %c0_242] : memref<8x12x1x128xf32, #tpu.memory_space<vmem>>, vector<1x1x1x128xf32>
    %497 = vector.shape_cast %496 : vector<1x1x1x128xf32> to vector<1x128xf32>
    %498 = vector.shape_cast %439 : vector<1x128xf32> to vector<1x1x1x128xf32>
    tpu.vector_store %arg3[%c3_239, %c1_240, %c0_241, %c0_242], %498 {strides = array<i32>} : memref<8x12x1x128xf32, #tpu.memory_space<vmem>>, vector<1x1x1x128xf32>,
    %c3_243 = arith.constant 3 : index
    %c2_244 = arith.constant 2 : index
    %c0_245 = arith.constant 0 : index
    %c0_246 = arith.constant 0 : index
    %499 = vector.load %arg3[%c3_243, %c2_244, %c0_245, %c0_246] : memref<8x12x1x128xf32, #tpu.memory_space<vmem>>, vector<1x1x1x128xf32>
    %500 = vector.shape_cast %499 : vector<1x1x1x128xf32> to vector<1x128xf32>
    %501 = vector.shape_cast %444 : vector<1x128xf32> to vector<1x1x1x128xf32>
    tpu.vector_store %arg3[%c3_243, %c2_244, %c0_245, %c0_246], %501 {strides = array<i32>} : memref<8x12x1x128xf32, #tpu.memory_space<vmem>>, vector<1x1x1x128xf32>,
    %c3_247 = arith.constant 3 : index
    %c3_248 = arith.constant 3 : index
    %c0_249 = arith.constant 0 : index
    %c0_250 = arith.constant 0 : index
    %502 = vector.load %arg3[%c3_247, %c3_248, %c0_249, %c0_250] : memref<8x12x1x128xf32, #tpu.memory_space<vmem>>, vector<1x1x1x128xf32>
    %503 = vector.shape_cast %502 : vector<1x1x1x128xf32> to vector<1x128xf32>
    %504 = vector.shape_cast %450 : vector<1x128xf32> to vector<1x1x1x128xf32>
    tpu.vector_store %arg3[%c3_247, %c3_248, %c0_249, %c0_250], %504 {strides = array<i32>} : memref<8x12x1x128xf32, #tpu.memory_space<vmem>>, vector<1x1x1x128xf32>,
    %c3_251 = arith.constant 3 : index
    %c4_252 = arith.constant 4 : index
    %c0_253 = arith.constant 0 : index
    %c0_254 = arith.constant 0 : index
    %505 = vector.load %arg3[%c3_251, %c4_252, %c0_253, %c0_254] : memref<8x12x1x128xf32, #tpu.memory_space<vmem>>, vector<1x1x1x128xf32>
    %506 = vector.shape_cast %505 : vector<1x1x1x128xf32> to vector<1x128xf32>
    %507 = vector.shape_cast %455 : vector<1x128xf32> to vector<1x1x1x128xf32>
    tpu.vector_store %arg3[%c3_251, %c4_252, %c0_253, %c0_254], %507 {strides = array<i32>} : memref<8x12x1x128xf32, #tpu.memory_space<vmem>>, vector<1x1x1x128xf32>,
    %c3_255 = arith.constant 3 : index
    %c5_256 = arith.constant 5 : index
    %c0_257 = arith.constant 0 : index
    %c0_258 = arith.constant 0 : index
    %508 = vector.load %arg3[%c3_255, %c5_256, %c0_257, %c0_258] : memref<8x12x1x128xf32, #tpu.memory_space<vmem>>, vector<1x1x1x128xf32>
    %509 = vector.shape_cast %508 : vector<1x1x1x128xf32> to vector<1x128xf32>
    %510 = vector.shape_cast %460 : vector<1x128xf32> to vector<1x1x1x128xf32>
    tpu.vector_store %arg3[%c3_255, %c5_256, %c0_257, %c0_258], %510 {strides = array<i32>} : memref<8x12x1x128xf32, #tpu.memory_space<vmem>>, vector<1x1x1x128xf32>,
    %c3_259 = arith.constant 3 : index
    %c6_260 = arith.constant 6 : index
    %c0_261 = arith.constant 0 : index
    %c0_262 = arith.constant 0 : index
    %511 = vector.load %arg3[%c3_259, %c6_260, %c0_261, %c0_262] : memref<8x12x1x128xf32, #tpu.memory_space<vmem>>, vector<1x1x1x128xf32>
    %512 = vector.shape_cast %511 : vector<1x1x1x128xf32> to vector<1x128xf32>
    %513 = vector.shape_cast %465 : vector<1x128xf32> to vector<1x1x1x128xf32>
    tpu.vector_store %arg3[%c3_259, %c6_260, %c0_261, %c0_262], %513 {strides = array<i32>} : memref<8x12x1x128xf32, #tpu.memory_space<vmem>>, vector<1x1x1x128xf32>,
    %c3_263 = arith.constant 3 : index
    %c7_264 = arith.constant 7 : index
    %c0_265 = arith.constant 0 : index
    %c0_266 = arith.constant 0 : index
    %514 = vector.load %arg3[%c3_263, %c7_264, %c0_265, %c0_266] : memref<8x12x1x128xf32, #tpu.memory_space<vmem>>, vector<1x1x1x128xf32>
    %515 = vector.shape_cast %514 : vector<1x1x1x128xf32> to vector<1x128xf32>
    %516 = vector.shape_cast %471 : vector<1x128xf32> to vector<1x1x1x128xf32>
    tpu.vector_store %arg3[%c3_263, %c7_264, %c0_265, %c0_266], %516 {strides = array<i32>} : memref<8x12x1x128xf32, #tpu.memory_space<vmem>>, vector<1x1x1x128xf32>,
    %c3_267 = arith.constant 3 : index
    %c8_268 = arith.constant 8 : index
    %c0_269 = arith.constant 0 : index
    %c0_270 = arith.constant 0 : index
    %517 = vector.load %arg3[%c3_267, %c8_268, %c0_269, %c0_270] : memref<8x12x1x128xf32, #tpu.memory_space<vmem>>, vector<1x1x1x128xf32>
    %518 = vector.shape_cast %517 : vector<1x1x1x128xf32> to vector<1x128xf32>
    %519 = vector.shape_cast %476 : vector<1x128xf32> to vector<1x1x1x128xf32>
    tpu.vector_store %arg3[%c3_267, %c8_268, %c0_269, %c0_270], %519 {strides = array<i32>} : memref<8x12x1x128xf32, #tpu.memory_space<vmem>>, vector<1x1x1x128xf32>,
    %c3_271 = arith.constant 3 : index
    %c9_272 = arith.constant 9 : index
    %c0_273 = arith.constant 0 : index
    %c0_274 = arith.constant 0 : index
    %520 = vector.load %arg3[%c3_271, %c9_272, %c0_273, %c0_274] : memref<8x12x1x128xf32, #tpu.memory_space<vmem>>, vector<1x1x1x128xf32>
    %521 = vector.shape_cast %520 : vector<1x1x1x128xf32> to vector<1x128xf32>
    %522 = vector.shape_cast %481 : vector<1x128xf32> to vector<1x1x1x128xf32>
    tpu.vector_store %arg3[%c3_271, %c9_272, %c0_273, %c0_274], %522 {strides = array<i32>} : memref<8x12x1x128xf32, #tpu.memory_space<vmem>>, vector<1x1x1x128xf32>,
    %c3_275 = arith.constant 3 : index
    %c10_276 = arith.constant 10 : index
    %c0_277 = arith.constant 0 : index
    %c0_278 = arith.constant 0 : index
    %523 = vector.load %arg3[%c3_275, %c10_276, %c0_277, %c0_278] : memref<8x12x1x128xf32, #tpu.memory_space<vmem>>, vector<1x1x1x128xf32>
    %524 = vector.shape_cast %523 : vector<1x1x1x128xf32> to vector<1x128xf32>
    %525 = vector.shape_cast %486 : vector<1x128xf32> to vector<1x1x1x128xf32>
    tpu.vector_store %arg3[%c3_275, %c10_276, %c0_277, %c0_278], %525 {strides = array<i32>} : memref<8x12x1x128xf32, #tpu.memory_space<vmem>>, vector<1x1x1x128xf32>,
    %c3_279 = arith.constant 3 : index
    %c11_280 = arith.constant 11 : index
    %c0_281 = arith.constant 0 : index
    %c0_282 = arith.constant 0 : index
    %526 = vector.load %arg3[%c3_279, %c11_280, %c0_281, %c0_282] : memref<8x12x1x128xf32, #tpu.memory_space<vmem>>, vector<1x1x1x128xf32>
    %527 = vector.shape_cast %526 : vector<1x1x1x128xf32> to vector<1x128xf32>
    %528 = vector.shape_cast %492 : vector<1x128xf32> to vector<1x1x1x128xf32>
    tpu.vector_store %arg3[%c3_279, %c11_280, %c0_281, %c0_282], %528 {strides = array<i32>} : memref<8x12x1x128xf32, #tpu.memory_space<vmem>>, vector<1x1x1x128xf32>,
    %c2_283 = arith.constant 2 : index
    %c0_284 = arith.constant 0 : index
    %c0_285 = arith.constant 0 : index
    %c0_286 = arith.constant 0 : index
    %529 = vector.load %arg3[%c2_283, %c0_284, %c0_285, %c0_286] : memref<8x12x1x128xf32, #tpu.memory_space<vmem>>, vector<1x1x1x128xf32>
    %530 = vector.shape_cast %529 : vector<1x1x1x128xf32> to vector<1x128xf32>
    %c2_287 = arith.constant 2 : index
    %c1_288 = arith.constant 1 : index
    %c0_289 = arith.constant 0 : index
    %c0_290 = arith.constant 0 : index
    %531 = vector.load %arg3[%c2_287, %c1_288, %c0_289, %c0_290] : memref<8x12x1x128xf32, #tpu.memory_space<vmem>>, vector<1x1x1x128xf32>
    %532 = vector.shape_cast %531 : vector<1x1x1x128xf32> to vector<1x128xf32>
    %c2_291 = arith.constant 2 : index
    %c2_292 = arith.constant 2 : index
    %c0_293 = arith.constant 0 : index
    %c0_294 = arith.constant 0 : index
    %533 = vector.load %arg3[%c2_291, %c2_292, %c0_293, %c0_294] : memref<8x12x1x128xf32, #tpu.memory_space<vmem>>, vector<1x1x1x128xf32>
    %534 = vector.shape_cast %533 : vector<1x1x1x128xf32> to vector<1x128xf32>
    %c2_295 = arith.constant 2 : index
    %c3_296 = arith.constant 3 : index
    %c0_297 = arith.constant 0 : index
    %c0_298 = arith.constant 0 : index
    %535 = vector.load %arg3[%c2_295, %c3_296, %c0_297, %c0_298] : memref<8x12x1x128xf32, #tpu.memory_space<vmem>>, vector<1x1x1x128xf32>
    %536 = vector.shape_cast %535 : vector<1x1x1x128xf32> to vector<1x128xf32>
    %c2_299 = arith.constant 2 : index
    %c4_300 = arith.constant 4 : index
    %c0_301 = arith.constant 0 : index
    %c0_302 = arith.constant 0 : index
    %537 = vector.load %arg3[%c2_299, %c4_300, %c0_301, %c0_302] : memref<8x12x1x128xf32, #tpu.memory_space<vmem>>, vector<1x1x1x128xf32>
    %538 = vector.shape_cast %537 : vector<1x1x1x128xf32> to vector<1x128xf32>
    %c2_303 = arith.constant 2 : index
    %c5_304 = arith.constant 5 : index
    %c0_305 = arith.constant 0 : index
    %c0_306 = arith.constant 0 : index
    %539 = vector.load %arg3[%c2_303, %c5_304, %c0_305, %c0_306] : memref<8x12x1x128xf32, #tpu.memory_space<vmem>>, vector<1x1x1x128xf32>
    %540 = vector.shape_cast %539 : vector<1x1x1x128xf32> to vector<1x128xf32>
    %c2_307 = arith.constant 2 : index
    %c6_308 = arith.constant 6 : index
    %c0_309 = arith.constant 0 : index
    %c0_310 = arith.constant 0 : index
    %541 = vector.load %arg3[%c2_307, %c6_308, %c0_309, %c0_310] : memref<8x12x1x128xf32, #tpu.memory_space<vmem>>, vector<1x1x1x128xf32>
    %542 = vector.shape_cast %541 : vector<1x1x1x128xf32> to vector<1x128xf32>
    %c2_311 = arith.constant 2 : index
    %c7_312 = arith.constant 7 : index
    %c0_313 = arith.constant 0 : index
    %c0_314 = arith.constant 0 : index
    %543 = vector.load %arg3[%c2_311, %c7_312, %c0_313, %c0_314] : memref<8x12x1x128xf32, #tpu.memory_space<vmem>>, vector<1x1x1x128xf32>
    %544 = vector.shape_cast %543 : vector<1x1x1x128xf32> to vector<1x128xf32>
    %c2_315 = arith.constant 2 : index
    %c8_316 = arith.constant 8 : index
    %c0_317 = arith.constant 0 : index
    %c0_318 = arith.constant 0 : index
    %545 = vector.load %arg3[%c2_315, %c8_316, %c0_317, %c0_318] : memref<8x12x1x128xf32, #tpu.memory_space<vmem>>, vector<1x1x1x128xf32>
    %546 = vector.shape_cast %545 : vector<1x1x1x128xf32> to vector<1x128xf32>
    %c2_319 = arith.constant 2 : index
    %c9_320 = arith.constant 9 : index
    %c0_321 = arith.constant 0 : index
    %c0_322 = arith.constant 0 : index
    %547 = vector.load %arg3[%c2_319, %c9_320, %c0_321, %c0_322] : memref<8x12x1x128xf32, #tpu.memory_space<vmem>>, vector<1x1x1x128xf32>
    %548 = vector.shape_cast %547 : vector<1x1x1x128xf32> to vector<1x128xf32>
    %c2_323 = arith.constant 2 : index
    %c10_324 = arith.constant 10 : index
    %c0_325 = arith.constant 0 : index
    %c0_326 = arith.constant 0 : index
    %549 = vector.load %arg3[%c2_323, %c10_324, %c0_325, %c0_326] : memref<8x12x1x128xf32, #tpu.memory_space<vmem>>, vector<1x1x1x128xf32>
    %550 = vector.shape_cast %549 : vector<1x1x1x128xf32> to vector<1x128xf32>
    %c2_327 = arith.constant 2 : index
    %c11_328 = arith.constant 11 : index
    %c0_329 = arith.constant 0 : index
    %c0_330 = arith.constant 0 : index
    %551 = vector.load %arg3[%c2_327, %c11_328, %c0_329, %c0_330] : memref<8x12x1x128xf32, #tpu.memory_space<vmem>>, vector<1x1x1x128xf32>
    %552 = vector.shape_cast %551 : vector<1x1x1x128xf32> to vector<1x128xf32>
    %c0_331 = arith.constant 0 : index
    %c4_332 = arith.constant 4 : index
    %c0_333 = arith.constant 0 : index
    %c0_334 = arith.constant 0 : index
    %553 = vector.load %arg1[%c0_331, %c4_332, %c0_333, %c0_334] : memref<3x8x1x128xf32, #tpu.memory_space<vmem>>, vector<1x1x1x128xf32>
    %554 = vector.shape_cast %553 : vector<1x1x1x128xf32> to vector<1x128xf32>
    %c1_335 = arith.constant 1 : index
    %c4_336 = arith.constant 4 : index
    %c0_337 = arith.constant 0 : index
    %c0_338 = arith.constant 0 : index
    %555 = vector.load %arg1[%c1_335, %c4_336, %c0_337, %c0_338] : memref<3x8x1x128xf32, #tpu.memory_space<vmem>>, vector<1x1x1x128xf32>
    %556 = vector.shape_cast %555 : vector<1x1x1x128xf32> to vector<1x128xf32>
    %c2_339 = arith.constant 2 : index
    %c4_340 = arith.constant 4 : index
    %c0_341 = arith.constant 0 : index
    %c0_342 = arith.constant 0 : index
    %557 = vector.load %arg1[%c2_339, %c4_340, %c0_341, %c0_342] : memref<3x8x1x128xf32, #tpu.memory_space<vmem>>, vector<1x1x1x128xf32>
    %558 = vector.shape_cast %557 : vector<1x1x1x128xf32> to vector<1x128xf32>
    %559 = arith.mulf %554, %554 : vector<1x128xf32>
    %560 = arith.mulf %556, %556 : vector<1x128xf32>
    %561 = arith.addf %559, %560 : vector<1x128xf32>
    %562 = arith.mulf %558, %558 : vector<1x128xf32>
    %563 = arith.addf %561, %562 : vector<1x128xf32>
    %cst_343 = arith.constant 9.99999996E-13 : f32
    %564 = vector.broadcast %cst_343 : f32 to vector<1x128xf32>
    %565 = arith.addf %563, %564 : vector<1x128xf32>
    %566 = math.rsqrt %565 : vector<1x128xf32>
    %567 = arith.mulf %565, %566 : vector<1x128xf32>
    %568 = arith.mulf %554, %566 : vector<1x128xf32>
    %569 = arith.mulf %556, %566 : vector<1x128xf32>
    %570 = arith.mulf %558, %566 : vector<1x128xf32>
    %571 = math.cos %567 : vector<1x128xf32>
    %572 = math.sin %567 : vector<1x128xf32>
    %cst_344 = arith.constant 1.000000e+00 : f32
    %573 = vector.broadcast %cst_344 : f32 to vector<1x128xf32>
    %574 = arith.subf %573, %571 : vector<1x128xf32>
    %575 = arith.mulf %574, %568 : vector<1x128xf32>
    %576 = arith.mulf %574, %569 : vector<1x128xf32>
    %577 = arith.mulf %574, %570 : vector<1x128xf32>
    %578 = arith.mulf %572, %568 : vector<1x128xf32>
    %579 = arith.mulf %572, %569 : vector<1x128xf32>
    %580 = arith.mulf %572, %570 : vector<1x128xf32>
    %581 = arith.mulf %575, %569 : vector<1x128xf32>
    %582 = arith.mulf %575, %570 : vector<1x128xf32>
    %583 = arith.mulf %576, %570 : vector<1x128xf32>
    %584 = arith.mulf %575, %568 : vector<1x128xf32>
    %585 = arith.addf %571, %584 : vector<1x128xf32>
    %586 = arith.subf %581, %580 : vector<1x128xf32>
    %587 = arith.addf %582, %579 : vector<1x128xf32>
    %c0_345 = arith.constant 0 : index
    %c4_346 = arith.constant 4 : index
    %c0_347 = arith.constant 0 : index
    %c0_348 = arith.constant 0 : index
    %588 = vector.load %arg2[%c0_345, %c4_346, %c0_347, %c0_348] : memref<3x8x1x128xf32, #tpu.memory_space<vmem>>, vector<1x1x1x128xf32>
    %589 = vector.shape_cast %588 : vector<1x1x1x128xf32> to vector<1x128xf32>
    %590 = arith.addf %581, %580 : vector<1x128xf32>
    %591 = arith.mulf %576, %569 : vector<1x128xf32>
    %592 = arith.addf %571, %591 : vector<1x128xf32>
    %593 = arith.subf %583, %578 : vector<1x128xf32>
    %c1_349 = arith.constant 1 : index
    %c4_350 = arith.constant 4 : index
    %c0_351 = arith.constant 0 : index
    %c0_352 = arith.constant 0 : index
    %594 = vector.load %arg2[%c1_349, %c4_350, %c0_351, %c0_352] : memref<3x8x1x128xf32, #tpu.memory_space<vmem>>, vector<1x1x1x128xf32>
    %595 = vector.shape_cast %594 : vector<1x1x1x128xf32> to vector<1x128xf32>
    %596 = arith.subf %582, %579 : vector<1x128xf32>
    %597 = arith.addf %583, %578 : vector<1x128xf32>
    %598 = arith.mulf %577, %570 : vector<1x128xf32>
    %599 = arith.addf %571, %598 : vector<1x128xf32>
    %c2_353 = arith.constant 2 : index
    %c4_354 = arith.constant 4 : index
    %c0_355 = arith.constant 0 : index
    %c0_356 = arith.constant 0 : index
    %600 = vector.load %arg2[%c2_353, %c4_354, %c0_355, %c0_356] : memref<3x8x1x128xf32, #tpu.memory_space<vmem>>, vector<1x1x1x128xf32>
    %601 = vector.shape_cast %600 : vector<1x1x1x128xf32> to vector<1x128xf32>
    %602 = arith.mulf %530, %585 : vector<1x128xf32>
    %603 = arith.mulf %532, %590 : vector<1x128xf32>
    %604 = arith.addf %602, %603 : vector<1x128xf32>
    %605 = arith.mulf %534, %596 : vector<1x128xf32>
    %606 = arith.addf %604, %605 : vector<1x128xf32>
    %607 = arith.mulf %530, %586 : vector<1x128xf32>
    %608 = arith.mulf %532, %592 : vector<1x128xf32>
    %609 = arith.addf %607, %608 : vector<1x128xf32>
    %610 = arith.mulf %534, %597 : vector<1x128xf32>
    %611 = arith.addf %609, %610 : vector<1x128xf32>
    %612 = arith.mulf %530, %587 : vector<1x128xf32>
    %613 = arith.mulf %532, %593 : vector<1x128xf32>
    %614 = arith.addf %612, %613 : vector<1x128xf32>
    %615 = arith.mulf %534, %599 : vector<1x128xf32>
    %616 = arith.addf %614, %615 : vector<1x128xf32>
    %617 = arith.mulf %530, %589 : vector<1x128xf32>
    %618 = arith.mulf %532, %595 : vector<1x128xf32>
    %619 = arith.addf %617, %618 : vector<1x128xf32>
    %620 = arith.mulf %534, %601 : vector<1x128xf32>
    %621 = arith.addf %619, %620 : vector<1x128xf32>
    %622 = arith.addf %621, %536 : vector<1x128xf32>
    %623 = arith.mulf %538, %585 : vector<1x128xf32>
    %624 = arith.mulf %540, %590 : vector<1x128xf32>
    %625 = arith.addf %623, %624 : vector<1x128xf32>
    %626 = arith.mulf %542, %596 : vector<1x128xf32>
    %627 = arith.addf %625, %626 : vector<1x128xf32>
    %628 = arith.mulf %538, %586 : vector<1x128xf32>
    %629 = arith.mulf %540, %592 : vector<1x128xf32>
    %630 = arith.addf %628, %629 : vector<1x128xf32>
    %631 = arith.mulf %542, %597 : vector<1x128xf32>
    %632 = arith.addf %630, %631 : vector<1x128xf32>
    %633 = arith.mulf %538, %587 : vector<1x128xf32>
    %634 = arith.mulf %540, %593 : vector<1x128xf32>
    %635 = arith.addf %633, %634 : vector<1x128xf32>
    %636 = arith.mulf %542, %599 : vector<1x128xf32>
    %637 = arith.addf %635, %636 : vector<1x128xf32>
    %638 = arith.mulf %538, %589 : vector<1x128xf32>
    %639 = arith.mulf %540, %595 : vector<1x128xf32>
    %640 = arith.addf %638, %639 : vector<1x128xf32>
    %641 = arith.mulf %542, %601 : vector<1x128xf32>
    %642 = arith.addf %640, %641 : vector<1x128xf32>
    %643 = arith.addf %642, %544 : vector<1x128xf32>
    %644 = arith.mulf %546, %585 : vector<1x128xf32>
    %645 = arith.mulf %548, %590 : vector<1x128xf32>
    %646 = arith.addf %644, %645 : vector<1x128xf32>
    %647 = arith.mulf %550, %596 : vector<1x128xf32>
    %648 = arith.addf %646, %647 : vector<1x128xf32>
    %649 = arith.mulf %546, %586 : vector<1x128xf32>
    %650 = arith.mulf %548, %592 : vector<1x128xf32>
    %651 = arith.addf %649, %650 : vector<1x128xf32>
    %652 = arith.mulf %550, %597 : vector<1x128xf32>
    %653 = arith.addf %651, %652 : vector<1x128xf32>
    %654 = arith.mulf %546, %587 : vector<1x128xf32>
    %655 = arith.mulf %548, %593 : vector<1x128xf32>
    %656 = arith.addf %654, %655 : vector<1x128xf32>
    %657 = arith.mulf %550, %599 : vector<1x128xf32>
    %658 = arith.addf %656, %657 : vector<1x128xf32>
    %659 = arith.mulf %546, %589 : vector<1x128xf32>
    %660 = arith.mulf %548, %595 : vector<1x128xf32>
    %661 = arith.addf %659, %660 : vector<1x128xf32>
    %662 = arith.mulf %550, %601 : vector<1x128xf32>
    %663 = arith.addf %661, %662 : vector<1x128xf32>
    %664 = arith.addf %663, %552 : vector<1x128xf32>
    %c4_357 = arith.constant 4 : index
    %c0_358 = arith.constant 0 : index
    %c0_359 = arith.constant 0 : index
    %c0_360 = arith.constant 0 : index
    %665 = vector.load %arg3[%c4_357, %c0_358, %c0_359, %c0_360] : memref<8x12x1x128xf32, #tpu.memory_space<vmem>>, vector<1x1x1x128xf32>
    %666 = vector.shape_cast %665 : vector<1x1x1x128xf32> to vector<1x128xf32>
    %667 = vector.shape_cast %606 : vector<1x128xf32> to vector<1x1x1x128xf32>
    tpu.vector_store %arg3[%c4_357, %c0_358, %c0_359, %c0_360], %667 {strides = array<i32>} : memref<8x12x1x128xf32, #tpu.memory_space<vmem>>, vector<1x1x1x128xf32>,
    %c4_361 = arith.constant 4 : index
    %c1_362 = arith.constant 1 : index
    %c0_363 = arith.constant 0 : index
    %c0_364 = arith.constant 0 : index
    %668 = vector.load %arg3[%c4_361, %c1_362, %c0_363, %c0_364] : memref<8x12x1x128xf32, #tpu.memory_space<vmem>>, vector<1x1x1x128xf32>
    %669 = vector.shape_cast %668 : vector<1x1x1x128xf32> to vector<1x128xf32>
    %670 = vector.shape_cast %611 : vector<1x128xf32> to vector<1x1x1x128xf32>
    tpu.vector_store %arg3[%c4_361, %c1_362, %c0_363, %c0_364], %670 {strides = array<i32>} : memref<8x12x1x128xf32, #tpu.memory_space<vmem>>, vector<1x1x1x128xf32>,
    %c4_365 = arith.constant 4 : index
    %c2_366 = arith.constant 2 : index
    %c0_367 = arith.constant 0 : index
    %c0_368 = arith.constant 0 : index
    %671 = vector.load %arg3[%c4_365, %c2_366, %c0_367, %c0_368] : memref<8x12x1x128xf32, #tpu.memory_space<vmem>>, vector<1x1x1x128xf32>
    %672 = vector.shape_cast %671 : vector<1x1x1x128xf32> to vector<1x128xf32>
    %673 = vector.shape_cast %616 : vector<1x128xf32> to vector<1x1x1x128xf32>
    tpu.vector_store %arg3[%c4_365, %c2_366, %c0_367, %c0_368], %673 {strides = array<i32>} : memref<8x12x1x128xf32, #tpu.memory_space<vmem>>, vector<1x1x1x128xf32>,
    %c4_369 = arith.constant 4 : index
    %c3_370 = arith.constant 3 : index
    %c0_371 = arith.constant 0 : index
    %c0_372 = arith.constant 0 : index
    %674 = vector.load %arg3[%c4_369, %c3_370, %c0_371, %c0_372] : memref<8x12x1x128xf32, #tpu.memory_space<vmem>>, vector<1x1x1x128xf32>
    %675 = vector.shape_cast %674 : vector<1x1x1x128xf32> to vector<1x128xf32>
    %676 = vector.shape_cast %622 : vector<1x128xf32> to vector<1x1x1x128xf32>
    tpu.vector_store %arg3[%c4_369, %c3_370, %c0_371, %c0_372], %676 {strides = array<i32>} : memref<8x12x1x128xf32, #tpu.memory_space<vmem>>, vector<1x1x1x128xf32>,
    %c4_373 = arith.constant 4 : index
    %c4_374 = arith.constant 4 : index
    %c0_375 = arith.constant 0 : index
    %c0_376 = arith.constant 0 : index
    %677 = vector.load %arg3[%c4_373, %c4_374, %c0_375, %c0_376] : memref<8x12x1x128xf32, #tpu.memory_space<vmem>>, vector<1x1x1x128xf32>
    %678 = vector.shape_cast %677 : vector<1x1x1x128xf32> to vector<1x128xf32>
    %679 = vector.shape_cast %627 : vector<1x128xf32> to vector<1x1x1x128xf32>
    tpu.vector_store %arg3[%c4_373, %c4_374, %c0_375, %c0_376], %679 {strides = array<i32>} : memref<8x12x1x128xf32, #tpu.memory_space<vmem>>, vector<1x1x1x128xf32>,
    %c4_377 = arith.constant 4 : index
    %c5_378 = arith.constant 5 : index
    %c0_379 = arith.constant 0 : index
    %c0_380 = arith.constant 0 : index
    %680 = vector.load %arg3[%c4_377, %c5_378, %c0_379, %c0_380] : memref<8x12x1x128xf32, #tpu.memory_space<vmem>>, vector<1x1x1x128xf32>
    %681 = vector.shape_cast %680 : vector<1x1x1x128xf32> to vector<1x128xf32>
    %682 = vector.shape_cast %632 : vector<1x128xf32> to vector<1x1x1x128xf32>
    tpu.vector_store %arg3[%c4_377, %c5_378, %c0_379, %c0_380], %682 {strides = array<i32>} : memref<8x12x1x128xf32, #tpu.memory_space<vmem>>, vector<1x1x1x128xf32>,
    %c4_381 = arith.constant 4 : index
    %c6_382 = arith.constant 6 : index
    %c0_383 = arith.constant 0 : index
    %c0_384 = arith.constant 0 : index
    %683 = vector.load %arg3[%c4_381, %c6_382, %c0_383, %c0_384] : memref<8x12x1x128xf32, #tpu.memory_space<vmem>>, vector<1x1x1x128xf32>
    %684 = vector.shape_cast %683 : vector<1x1x1x128xf32> to vector<1x128xf32>
    %685 = vector.shape_cast %637 : vector<1x128xf32> to vector<1x1x1x128xf32>
    tpu.vector_store %arg3[%c4_381, %c6_382, %c0_383, %c0_384], %685 {strides = array<i32>} : memref<8x12x1x128xf32, #tpu.memory_space<vmem>>, vector<1x1x1x128xf32>,
    %c4_385 = arith.constant 4 : index
    %c7_386 = arith.constant 7 : index
    %c0_387 = arith.constant 0 : index
    %c0_388 = arith.constant 0 : index
    %686 = vector.load %arg3[%c4_385, %c7_386, %c0_387, %c0_388] : memref<8x12x1x128xf32, #tpu.memory_space<vmem>>, vector<1x1x1x128xf32>
    %687 = vector.shape_cast %686 : vector<1x1x1x128xf32> to vector<1x128xf32>
    %688 = vector.shape_cast %643 : vector<1x128xf32> to vector<1x1x1x128xf32>
    tpu.vector_store %arg3[%c4_385, %c7_386, %c0_387, %c0_388], %688 {strides = array<i32>} : memref<8x12x1x128xf32, #tpu.memory_space<vmem>>, vector<1x1x1x128xf32>,
    %c4_389 = arith.constant 4 : index
    %c8_390 = arith.constant 8 : index
    %c0_391 = arith.constant 0 : index
    %c0_392 = arith.constant 0 : index
    %689 = vector.load %arg3[%c4_389, %c8_390, %c0_391, %c0_392] : memref<8x12x1x128xf32, #tpu.memory_space<vmem>>, vector<1x1x1x128xf32>
    %690 = vector.shape_cast %689 : vector<1x1x1x128xf32> to vector<1x128xf32>
    %691 = vector.shape_cast %648 : vector<1x128xf32> to vector<1x1x1x128xf32>
    tpu.vector_store %arg3[%c4_389, %c8_390, %c0_391, %c0_392], %691 {strides = array<i32>} : memref<8x12x1x128xf32, #tpu.memory_space<vmem>>, vector<1x1x1x128xf32>,
    %c4_393 = arith.constant 4 : index
    %c9_394 = arith.constant 9 : index
    %c0_395 = arith.constant 0 : index
    %c0_396 = arith.constant 0 : index
    %692 = vector.load %arg3[%c4_393, %c9_394, %c0_395, %c0_396] : memref<8x12x1x128xf32, #tpu.memory_space<vmem>>, vector<1x1x1x128xf32>
    %693 = vector.shape_cast %692 : vector<1x1x1x128xf32> to vector<1x128xf32>
    %694 = vector.shape_cast %653 : vector<1x128xf32> to vector<1x1x1x128xf32>
    tpu.vector_store %arg3[%c4_393, %c9_394, %c0_395, %c0_396], %694 {strides = array<i32>} : memref<8x12x1x128xf32, #tpu.memory_space<vmem>>, vector<1x1x1x128xf32>,
    %c4_397 = arith.constant 4 : index
    %c10_398 = arith.constant 10 : index
    %c0_399 = arith.constant 0 : index
    %c0_400 = arith.constant 0 : index
    %695 = vector.load %arg3[%c4_397, %c10_398, %c0_399, %c0_400] : memref<8x12x1x128xf32, #tpu.memory_space<vmem>>, vector<1x1x1x128xf32>
    %696 = vector.shape_cast %695 : vector<1x1x1x128xf32> to vector<1x128xf32>
    %697 = vector.shape_cast %658 : vector<1x128xf32> to vector<1x1x1x128xf32>
    tpu.vector_store %arg3[%c4_397, %c10_398, %c0_399, %c0_400], %697 {strides = array<i32>} : memref<8x12x1x128xf32, #tpu.memory_space<vmem>>, vector<1x1x1x128xf32>,
    %c4_401 = arith.constant 4 : index
    %c11_402 = arith.constant 11 : index
    %c0_403 = arith.constant 0 : index
    %c0_404 = arith.constant 0 : index
    %698 = vector.load %arg3[%c4_401, %c11_402, %c0_403, %c0_404] : memref<8x12x1x128xf32, #tpu.memory_space<vmem>>, vector<1x1x1x128xf32>
    %699 = vector.shape_cast %698 : vector<1x1x1x128xf32> to vector<1x128xf32>
    %700 = vector.shape_cast %664 : vector<1x128xf32> to vector<1x1x1x128xf32>
    tpu.vector_store %arg3[%c4_401, %c11_402, %c0_403, %c0_404], %700 {strides = array<i32>} : memref<8x12x1x128xf32, #tpu.memory_space<vmem>>, vector<1x1x1x128xf32>,
    %c0_405 = arith.constant 0 : index
    %c0_406 = arith.constant 0 : index
    %c0_407 = arith.constant 0 : index
    %c0_408 = arith.constant 0 : index
    %701 = vector.load %arg3[%c0_405, %c0_406, %c0_407, %c0_408] : memref<8x12x1x128xf32, #tpu.memory_space<vmem>>, vector<1x1x1x128xf32>
    %702 = vector.shape_cast %701 : vector<1x1x1x128xf32> to vector<1x128xf32>
    %c0_409 = arith.constant 0 : index
    %c1_410 = arith.constant 1 : index
    %c0_411 = arith.constant 0 : index
    %c0_412 = arith.constant 0 : index
    %703 = vector.load %arg3[%c0_409, %c1_410, %c0_411, %c0_412] : memref<8x12x1x128xf32, #tpu.memory_space<vmem>>, vector<1x1x1x128xf32>
    %704 = vector.shape_cast %703 : vector<1x1x1x128xf32> to vector<1x128xf32>
    %c0_413 = arith.constant 0 : index
    %c2_414 = arith.constant 2 : index
    %c0_415 = arith.constant 0 : index
    %c0_416 = arith.constant 0 : index
    %705 = vector.load %arg3[%c0_413, %c2_414, %c0_415, %c0_416] : memref<8x12x1x128xf32, #tpu.memory_space<vmem>>, vector<1x1x1x128xf32>
    %706 = vector.shape_cast %705 : vector<1x1x1x128xf32> to vector<1x128xf32>
    %c0_417 = arith.constant 0 : index
    %c3_418 = arith.constant 3 : index
    %c0_419 = arith.constant 0 : index
    %c0_420 = arith.constant 0 : index
    %707 = vector.load %arg3[%c0_417, %c3_418, %c0_419, %c0_420] : memref<8x12x1x128xf32, #tpu.memory_space<vmem>>, vector<1x1x1x128xf32>
    %708 = vector.shape_cast %707 : vector<1x1x1x128xf32> to vector<1x128xf32>
    %c0_421 = arith.constant 0 : index
    %c4_422 = arith.constant 4 : index
    %c0_423 = arith.constant 0 : index
    %c0_424 = arith.constant 0 : index
    %709 = vector.load %arg3[%c0_421, %c4_422, %c0_423, %c0_424] : memref<8x12x1x128xf32, #tpu.memory_space<vmem>>, vector<1x1x1x128xf32>
    %710 = vector.shape_cast %709 : vector<1x1x1x128xf32> to vector<1x128xf32>
    %c0_425 = arith.constant 0 : index
    %c5_426 = arith.constant 5 : index
    %c0_427 = arith.constant 0 : index
    %c0_428 = arith.constant 0 : index
    %711 = vector.load %arg3[%c0_425, %c5_426, %c0_427, %c0_428] : memref<8x12x1x128xf32, #tpu.memory_space<vmem>>, vector<1x1x1x128xf32>
    %712 = vector.shape_cast %711 : vector<1x1x1x128xf32> to vector<1x128xf32>
    %c0_429 = arith.constant 0 : index
    %c6_430 = arith.constant 6 : index
    %c0_431 = arith.constant 0 : index
    %c0_432 = arith.constant 0 : index
    %713 = vector.load %arg3[%c0_429, %c6_430, %c0_431, %c0_432] : memref<8x12x1x128xf32, #tpu.memory_space<vmem>>, vector<1x1x1x128xf32>
    %714 = vector.shape_cast %713 : vector<1x1x1x128xf32> to vector<1x128xf32>
    %c0_433 = arith.constant 0 : index
    %c7_434 = arith.constant 7 : index
    %c0_435 = arith.constant 0 : index
    %c0_436 = arith.constant 0 : index
    %715 = vector.load %arg3[%c0_433, %c7_434, %c0_435, %c0_436] : memref<8x12x1x128xf32, #tpu.memory_space<vmem>>, vector<1x1x1x128xf32>
    %716 = vector.shape_cast %715 : vector<1x1x1x128xf32> to vector<1x128xf32>
    %c0_437 = arith.constant 0 : index
    %c8_438 = arith.constant 8 : index
    %c0_439 = arith.constant 0 : index
    %c0_440 = arith.constant 0 : index
    %717 = vector.load %arg3[%c0_437, %c8_438, %c0_439, %c0_440] : memref<8x12x1x128xf32, #tpu.memory_space<vmem>>, vector<1x1x1x128xf32>
    %718 = vector.shape_cast %717 : vector<1x1x1x128xf32> to vector<1x128xf32>
    %c0_441 = arith.constant 0 : index
    %c9_442 = arith.constant 9 : index
    %c0_443 = arith.constant 0 : index
    %c0_444 = arith.constant 0 : index
    %719 = vector.load %arg3[%c0_441, %c9_442, %c0_443, %c0_444] : memref<8x12x1x128xf32, #tpu.memory_space<vmem>>, vector<1x1x1x128xf32>
    %720 = vector.shape_cast %719 : vector<1x1x1x128xf32> to vector<1x128xf32>
    %c0_445 = arith.constant 0 : index
    %c10_446 = arith.constant 10 : index
    %c0_447 = arith.constant 0 : index
    %c0_448 = arith.constant 0 : index
    %721 = vector.load %arg3[%c0_445, %c10_446, %c0_447, %c0_448] : memref<8x12x1x128xf32, #tpu.memory_space<vmem>>, vector<1x1x1x128xf32>
    %722 = vector.shape_cast %721 : vector<1x1x1x128xf32> to vector<1x128xf32>
    %c0_449 = arith.constant 0 : index
    %c11_450 = arith.constant 11 : index
    %c0_451 = arith.constant 0 : index
    %c0_452 = arith.constant 0 : index
    %723 = vector.load %arg3[%c0_449, %c11_450, %c0_451, %c0_452] : memref<8x12x1x128xf32, #tpu.memory_space<vmem>>, vector<1x1x1x128xf32>
    %724 = vector.shape_cast %723 : vector<1x1x1x128xf32> to vector<1x128xf32>
    %c0_453 = arith.constant 0 : index
    %c5_454 = arith.constant 5 : index
    %c0_455 = arith.constant 0 : index
    %c0_456 = arith.constant 0 : index
    %725 = vector.load %arg1[%c0_453, %c5_454, %c0_455, %c0_456] : memref<3x8x1x128xf32, #tpu.memory_space<vmem>>, vector<1x1x1x128xf32>
    %726 = vector.shape_cast %725 : vector<1x1x1x128xf32> to vector<1x128xf32>
    %c1_457 = arith.constant 1 : index
    %c5_458 = arith.constant 5 : index
    %c0_459 = arith.constant 0 : index
    %c0_460 = arith.constant 0 : index
    %727 = vector.load %arg1[%c1_457, %c5_458, %c0_459, %c0_460] : memref<3x8x1x128xf32, #tpu.memory_space<vmem>>, vector<1x1x1x128xf32>
    %728 = vector.shape_cast %727 : vector<1x1x1x128xf32> to vector<1x128xf32>
    %c2_461 = arith.constant 2 : index
    %c5_462 = arith.constant 5 : index
    %c0_463 = arith.constant 0 : index
    %c0_464 = arith.constant 0 : index
    %729 = vector.load %arg1[%c2_461, %c5_462, %c0_463, %c0_464] : memref<3x8x1x128xf32, #tpu.memory_space<vmem>>, vector<1x1x1x128xf32>
    %730 = vector.shape_cast %729 : vector<1x1x1x128xf32> to vector<1x128xf32>
    %731 = arith.mulf %726, %726 : vector<1x128xf32>
    %732 = arith.mulf %728, %728 : vector<1x128xf32>
    %733 = arith.addf %731, %732 : vector<1x128xf32>
    %734 = arith.mulf %730, %730 : vector<1x128xf32>
    %735 = arith.addf %733, %734 : vector<1x128xf32>
    %cst_465 = arith.constant 9.99999996E-13 : f32
    %736 = vector.broadcast %cst_465 : f32 to vector<1x128xf32>
    %737 = arith.addf %735, %736 : vector<1x128xf32>
    %738 = math.rsqrt %737 : vector<1x128xf32>
    %739 = arith.mulf %737, %738 : vector<1x128xf32>
    %740 = arith.mulf %726, %738 : vector<1x128xf32>
    %741 = arith.mulf %728, %738 : vector<1x128xf32>
    %742 = arith.mulf %730, %738 : vector<1x128xf32>
    %743 = math.cos %739 : vector<1x128xf32>
    %744 = math.sin %739 : vector<1x128xf32>
    %cst_466 = arith.constant 1.000000e+00 : f32
    %745 = vector.broadcast %cst_466 : f32 to vector<1x128xf32>
    %746 = arith.subf %745, %743 : vector<1x128xf32>
    %747 = arith.mulf %746, %740 : vector<1x128xf32>
    %748 = arith.mulf %746, %741 : vector<1x128xf32>
    %749 = arith.mulf %746, %742 : vector<1x128xf32>
    %750 = arith.mulf %744, %740 : vector<1x128xf32>
    %751 = arith.mulf %744, %741 : vector<1x128xf32>
    %752 = arith.mulf %744, %742 : vector<1x128xf32>
    %753 = arith.mulf %747, %741 : vector<1x128xf32>
    %754 = arith.mulf %747, %742 : vector<1x128xf32>
    %755 = arith.mulf %748, %742 : vector<1x128xf32>
    %756 = arith.mulf %747, %740 : vector<1x128xf32>
    %757 = arith.addf %743, %756 : vector<1x128xf32>
    %758 = arith.subf %753, %752 : vector<1x128xf32>
    %759 = arith.addf %754, %751 : vector<1x128xf32>
    %c0_467 = arith.constant 0 : index
    %c5_468 = arith.constant 5 : index
    %c0_469 = arith.constant 0 : index
    %c0_470 = arith.constant 0 : index
    %760 = vector.load %arg2[%c0_467, %c5_468, %c0_469, %c0_470] : memref<3x8x1x128xf32, #tpu.memory_space<vmem>>, vector<1x1x1x128xf32>
    %761 = vector.shape_cast %760 : vector<1x1x1x128xf32> to vector<1x128xf32>
    %762 = arith.addf %753, %752 : vector<1x128xf32>
    %763 = arith.mulf %748, %741 : vector<1x128xf32>
    %764 = arith.addf %743, %763 : vector<1x128xf32>
    %765 = arith.subf %755, %750 : vector<1x128xf32>
    %c1_471 = arith.constant 1 : index
    %c5_472 = arith.constant 5 : index
    %c0_473 = arith.constant 0 : index
    %c0_474 = arith.constant 0 : index
    %766 = vector.load %arg2[%c1_471, %c5_472, %c0_473, %c0_474] : memref<3x8x1x128xf32, #tpu.memory_space<vmem>>, vector<1x1x1x128xf32>
    %767 = vector.shape_cast %766 : vector<1x1x1x128xf32> to vector<1x128xf32>
    %768 = arith.subf %754, %751 : vector<1x128xf32>
    %769 = arith.addf %755, %750 : vector<1x128xf32>
    %770 = arith.mulf %749, %742 : vector<1x128xf32>
    %771 = arith.addf %743, %770 : vector<1x128xf32>
    %c2_475 = arith.constant 2 : index
    %c5_476 = arith.constant 5 : index
    %c0_477 = arith.constant 0 : index
    %c0_478 = arith.constant 0 : index
    %772 = vector.load %arg2[%c2_475, %c5_476, %c0_477, %c0_478] : memref<3x8x1x128xf32, #tpu.memory_space<vmem>>, vector<1x1x1x128xf32>
    %773 = vector.shape_cast %772 : vector<1x1x1x128xf32> to vector<1x128xf32>
    %774 = arith.mulf %702, %757 : vector<1x128xf32>
    %775 = arith.mulf %704, %762 : vector<1x128xf32>
    %776 = arith.addf %774, %775 : vector<1x128xf32>
    %777 = arith.mulf %706, %768 : vector<1x128xf32>
    %778 = arith.addf %776, %777 : vector<1x128xf32>
    %779 = arith.mulf %702, %758 : vector<1x128xf32>
    %780 = arith.mulf %704, %764 : vector<1x128xf32>
    %781 = arith.addf %779, %780 : vector<1x128xf32>
    %782 = arith.mulf %706, %769 : vector<1x128xf32>
    %783 = arith.addf %781, %782 : vector<1x128xf32>
    %784 = arith.mulf %702, %759 : vector<1x128xf32>
    %785 = arith.mulf %704, %765 : vector<1x128xf32>
    %786 = arith.addf %784, %785 : vector<1x128xf32>
    %787 = arith.mulf %706, %771 : vector<1x128xf32>
    %788 = arith.addf %786, %787 : vector<1x128xf32>
    %789 = arith.mulf %702, %761 : vector<1x128xf32>
    %790 = arith.mulf %704, %767 : vector<1x128xf32>
    %791 = arith.addf %789, %790 : vector<1x128xf32>
    %792 = arith.mulf %706, %773 : vector<1x128xf32>
    %793 = arith.addf %791, %792 : vector<1x128xf32>
    %794 = arith.addf %793, %708 : vector<1x128xf32>
    %795 = arith.mulf %710, %757 : vector<1x128xf32>
    %796 = arith.mulf %712, %762 : vector<1x128xf32>
    %797 = arith.addf %795, %796 : vector<1x128xf32>
    %798 = arith.mulf %714, %768 : vector<1x128xf32>
    %799 = arith.addf %797, %798 : vector<1x128xf32>
    %800 = arith.mulf %710, %758 : vector<1x128xf32>
    %801 = arith.mulf %712, %764 : vector<1x128xf32>
    %802 = arith.addf %800, %801 : vector<1x128xf32>
    %803 = arith.mulf %714, %769 : vector<1x128xf32>
    %804 = arith.addf %802, %803 : vector<1x128xf32>
    %805 = arith.mulf %710, %759 : vector<1x128xf32>
    %806 = arith.mulf %712, %765 : vector<1x128xf32>
    %807 = arith.addf %805, %806 : vector<1x128xf32>
    %808 = arith.mulf %714, %771 : vector<1x128xf32>
    %809 = arith.addf %807, %808 : vector<1x128xf32>
    %810 = arith.mulf %710, %761 : vector<1x128xf32>
    %811 = arith.mulf %712, %767 : vector<1x128xf32>
    %812 = arith.addf %810, %811 : vector<1x128xf32>
    %813 = arith.mulf %714, %773 : vector<1x128xf32>
    %814 = arith.addf %812, %813 : vector<1x128xf32>
    %815 = arith.addf %814, %716 : vector<1x128xf32>
    %816 = arith.mulf %718, %757 : vector<1x128xf32>
    %817 = arith.mulf %720, %762 : vector<1x128xf32>
    %818 = arith.addf %816, %817 : vector<1x128xf32>
    %819 = arith.mulf %722, %768 : vector<1x128xf32>
    %820 = arith.addf %818, %819 : vector<1x128xf32>
    %821 = arith.mulf %718, %758 : vector<1x128xf32>
    %822 = arith.mulf %720, %764 : vector<1x128xf32>
    %823 = arith.addf %821, %822 : vector<1x128xf32>
    %824 = arith.mulf %722, %769 : vector<1x128xf32>
    %825 = arith.addf %823, %824 : vector<1x128xf32>
    %826 = arith.mulf %718, %759 : vector<1x128xf32>
    %827 = arith.mulf %720, %765 : vector<1x128xf32>
    %828 = arith.addf %826, %827 : vector<1x128xf32>
    %829 = arith.mulf %722, %771 : vector<1x128xf32>
    %830 = arith.addf %828, %829 : vector<1x128xf32>
    %831 = arith.mulf %718, %761 : vector<1x128xf32>
    %832 = arith.mulf %720, %767 : vector<1x128xf32>
    %833 = arith.addf %831, %832 : vector<1x128xf32>
    %834 = arith.mulf %722, %773 : vector<1x128xf32>
    %835 = arith.addf %833, %834 : vector<1x128xf32>
    %836 = arith.addf %835, %724 : vector<1x128xf32>
    %c5_479 = arith.constant 5 : index
    %c0_480 = arith.constant 0 : index
    %c0_481 = arith.constant 0 : index
    %c0_482 = arith.constant 0 : index
    %837 = vector.load %arg3[%c5_479, %c0_480, %c0_481, %c0_482] : memref<8x12x1x128xf32, #tpu.memory_space<vmem>>, vector<1x1x1x128xf32>
    %838 = vector.shape_cast %837 : vector<1x1x1x128xf32> to vector<1x128xf32>
    %839 = vector.shape_cast %778 : vector<1x128xf32> to vector<1x1x1x128xf32>
    tpu.vector_store %arg3[%c5_479, %c0_480, %c0_481, %c0_482], %839 {strides = array<i32>} : memref<8x12x1x128xf32, #tpu.memory_space<vmem>>, vector<1x1x1x128xf32>,
    %c5_483 = arith.constant 5 : index
    %c1_484 = arith.constant 1 : index
    %c0_485 = arith.constant 0 : index
    %c0_486 = arith.constant 0 : index
    %840 = vector.load %arg3[%c5_483, %c1_484, %c0_485, %c0_486] : memref<8x12x1x128xf32, #tpu.memory_space<vmem>>, vector<1x1x1x128xf32>
    %841 = vector.shape_cast %840 : vector<1x1x1x128xf32> to vector<1x128xf32>
    %842 = vector.shape_cast %783 : vector<1x128xf32> to vector<1x1x1x128xf32>
    tpu.vector_store %arg3[%c5_483, %c1_484, %c0_485, %c0_486], %842 {strides = array<i32>} : memref<8x12x1x128xf32, #tpu.memory_space<vmem>>, vector<1x1x1x128xf32>,
    %c5_487 = arith.constant 5 : index
    %c2_488 = arith.constant 2 : index
    %c0_489 = arith.constant 0 : index
    %c0_490 = arith.constant 0 : index
    %843 = vector.load %arg3[%c5_487, %c2_488, %c0_489, %c0_490] : memref<8x12x1x128xf32, #tpu.memory_space<vmem>>, vector<1x1x1x128xf32>
    %844 = vector.shape_cast %843 : vector<1x1x1x128xf32> to vector<1x128xf32>
    %845 = vector.shape_cast %788 : vector<1x128xf32> to vector<1x1x1x128xf32>
    tpu.vector_store %arg3[%c5_487, %c2_488, %c0_489, %c0_490], %845 {strides = array<i32>} : memref<8x12x1x128xf32, #tpu.memory_space<vmem>>, vector<1x1x1x128xf32>,
    %c5_491 = arith.constant 5 : index
    %c3_492 = arith.constant 3 : index
    %c0_493 = arith.constant 0 : index
    %c0_494 = arith.constant 0 : index
    %846 = vector.load %arg3[%c5_491, %c3_492, %c0_493, %c0_494] : memref<8x12x1x128xf32, #tpu.memory_space<vmem>>, vector<1x1x1x128xf32>
    %847 = vector.shape_cast %846 : vector<1x1x1x128xf32> to vector<1x128xf32>
    %848 = vector.shape_cast %794 : vector<1x128xf32> to vector<1x1x1x128xf32>
    tpu.vector_store %arg3[%c5_491, %c3_492, %c0_493, %c0_494], %848 {strides = array<i32>} : memref<8x12x1x128xf32, #tpu.memory_space<vmem>>, vector<1x1x1x128xf32>,
    %c5_495 = arith.constant 5 : index
    %c4_496 = arith.constant 4 : index
    %c0_497 = arith.constant 0 : index
    %c0_498 = arith.constant 0 : index
    %849 = vector.load %arg3[%c5_495, %c4_496, %c0_497, %c0_498] : memref<8x12x1x128xf32, #tpu.memory_space<vmem>>, vector<1x1x1x128xf32>
    %850 = vector.shape_cast %849 : vector<1x1x1x128xf32> to vector<1x128xf32>
    %851 = vector.shape_cast %799 : vector<1x128xf32> to vector<1x1x1x128xf32>
    tpu.vector_store %arg3[%c5_495, %c4_496, %c0_497, %c0_498], %851 {strides = array<i32>} : memref<8x12x1x128xf32, #tpu.memory_space<vmem>>, vector<1x1x1x128xf32>,
    %c5_499 = arith.constant 5 : index
    %c5_500 = arith.constant 5 : index
    %c0_501 = arith.constant 0 : index
    %c0_502 = arith.constant 0 : index
    %852 = vector.load %arg3[%c5_499, %c5_500, %c0_501, %c0_502] : memref<8x12x1x128xf32, #tpu.memory_space<vmem>>, vector<1x1x1x128xf32>
    %853 = vector.shape_cast %852 : vector<1x1x1x128xf32> to vector<1x128xf32>
    %854 = vector.shape_cast %804 : vector<1x128xf32> to vector<1x1x1x128xf32>
    tpu.vector_store %arg3[%c5_499, %c5_500, %c0_501, %c0_502], %854 {strides = array<i32>} : memref<8x12x1x128xf32, #tpu.memory_space<vmem>>, vector<1x1x1x128xf32>,
    %c5_503 = arith.constant 5 : index
    %c6_504 = arith.constant 6 : index
    %c0_505 = arith.constant 0 : index
    %c0_506 = arith.constant 0 : index
    %855 = vector.load %arg3[%c5_503, %c6_504, %c0_505, %c0_506] : memref<8x12x1x128xf32, #tpu.memory_space<vmem>>, vector<1x1x1x128xf32>
    %856 = vector.shape_cast %855 : vector<1x1x1x128xf32> to vector<1x128xf32>
    %857 = vector.shape_cast %809 : vector<1x128xf32> to vector<1x1x1x128xf32>
    tpu.vector_store %arg3[%c5_503, %c6_504, %c0_505, %c0_506], %857 {strides = array<i32>} : memref<8x12x1x128xf32, #tpu.memory_space<vmem>>, vector<1x1x1x128xf32>,
    %c5_507 = arith.constant 5 : index
    %c7_508 = arith.constant 7 : index
    %c0_509 = arith.constant 0 : index
    %c0_510 = arith.constant 0 : index
    %858 = vector.load %arg3[%c5_507, %c7_508, %c0_509, %c0_510] : memref<8x12x1x128xf32, #tpu.memory_space<vmem>>, vector<1x1x1x128xf32>
    %859 = vector.shape_cast %858 : vector<1x1x1x128xf32> to vector<1x128xf32>
    %860 = vector.shape_cast %815 : vector<1x128xf32> to vector<1x1x1x128xf32>
    tpu.vector_store %arg3[%c5_507, %c7_508, %c0_509, %c0_510], %860 {strides = array<i32>} : memref<8x12x1x128xf32, #tpu.memory_space<vmem>>, vector<1x1x1x128xf32>,
    %c5_511 = arith.constant 5 : index
    %c8_512 = arith.constant 8 : index
    %c0_513 = arith.constant 0 : index
    %c0_514 = arith.constant 0 : index
    %861 = vector.load %arg3[%c5_511, %c8_512, %c0_513, %c0_514] : memref<8x12x1x128xf32, #tpu.memory_space<vmem>>, vector<1x1x1x128xf32>
    %862 = vector.shape_cast %861 : vector<1x1x1x128xf32> to vector<1x128xf32>
    %863 = vector.shape_cast %820 : vector<1x128xf32> to vector<1x1x1x128xf32>
    tpu.vector_store %arg3[%c5_511, %c8_512, %c0_513, %c0_514], %863 {strides = array<i32>} : memref<8x12x1x128xf32, #tpu.memory_space<vmem>>, vector<1x1x1x128xf32>,
    %c5_515 = arith.constant 5 : index
    %c9_516 = arith.constant 9 : index
    %c0_517 = arith.constant 0 : index
    %c0_518 = arith.constant 0 : index
    %864 = vector.load %arg3[%c5_515, %c9_516, %c0_517, %c0_518] : memref<8x12x1x128xf32, #tpu.memory_space<vmem>>, vector<1x1x1x128xf32>
    %865 = vector.shape_cast %864 : vector<1x1x1x128xf32> to vector<1x128xf32>
    %866 = vector.shape_cast %825 : vector<1x128xf32> to vector<1x1x1x128xf32>
    tpu.vector_store %arg3[%c5_515, %c9_516, %c0_517, %c0_518], %866 {strides = array<i32>} : memref<8x12x1x128xf32, #tpu.memory_space<vmem>>, vector<1x1x1x128xf32>,
    %c5_519 = arith.constant 5 : index
    %c10_520 = arith.constant 10 : index
    %c0_521 = arith.constant 0 : index
    %c0_522 = arith.constant 0 : index
    %867 = vector.load %arg3[%c5_519, %c10_520, %c0_521, %c0_522] : memref<8x12x1x128xf32, #tpu.memory_space<vmem>>, vector<1x1x1x128xf32>
    %868 = vector.shape_cast %867 : vector<1x1x1x128xf32> to vector<1x128xf32>
    %869 = vector.shape_cast %830 : vector<1x128xf32> to vector<1x1x1x128xf32>
    tpu.vector_store %arg3[%c5_519, %c10_520, %c0_521, %c0_522], %869 {strides = array<i32>} : memref<8x12x1x128xf32, #tpu.memory_space<vmem>>, vector<1x1x1x128xf32>,
    %c5_523 = arith.constant 5 : index
    %c11_524 = arith.constant 11 : index
    %c0_525 = arith.constant 0 : index
    %c0_526 = arith.constant 0 : index
    %870 = vector.load %arg3[%c5_523, %c11_524, %c0_525, %c0_526] : memref<8x12x1x128xf32, #tpu.memory_space<vmem>>, vector<1x1x1x128xf32>
    %871 = vector.shape_cast %870 : vector<1x1x1x128xf32> to vector<1x128xf32>
    %872 = vector.shape_cast %836 : vector<1x128xf32> to vector<1x1x1x128xf32>
    tpu.vector_store %arg3[%c5_523, %c11_524, %c0_525, %c0_526], %872 {strides = array<i32>} : memref<8x12x1x128xf32, #tpu.memory_space<vmem>>, vector<1x1x1x128xf32>,
    %c0_527 = arith.constant 0 : index
    %c6_528 = arith.constant 6 : index
    %c0_529 = arith.constant 0 : index
    %c0_530 = arith.constant 0 : index
    %873 = vector.load %arg1[%c0_527, %c6_528, %c0_529, %c0_530] : memref<3x8x1x128xf32, #tpu.memory_space<vmem>>, vector<1x1x1x128xf32>
    %874 = vector.shape_cast %873 : vector<1x1x1x128xf32> to vector<1x128xf32>
    %c1_531 = arith.constant 1 : index
    %c6_532 = arith.constant 6 : index
    %c0_533 = arith.constant 0 : index
    %c0_534 = arith.constant 0 : index
    %875 = vector.load %arg1[%c1_531, %c6_532, %c0_533, %c0_534] : memref<3x8x1x128xf32, #tpu.memory_space<vmem>>, vector<1x1x1x128xf32>
    %876 = vector.shape_cast %875 : vector<1x1x1x128xf32> to vector<1x128xf32>
    %c2_535 = arith.constant 2 : index
    %c6_536 = arith.constant 6 : index
    %c0_537 = arith.constant 0 : index
    %c0_538 = arith.constant 0 : index
    %877 = vector.load %arg1[%c2_535, %c6_536, %c0_537, %c0_538] : memref<3x8x1x128xf32, #tpu.memory_space<vmem>>, vector<1x1x1x128xf32>
    %878 = vector.shape_cast %877 : vector<1x1x1x128xf32> to vector<1x128xf32>
    %879 = arith.mulf %874, %874 : vector<1x128xf32>
    %880 = arith.mulf %876, %876 : vector<1x128xf32>
    %881 = arith.addf %879, %880 : vector<1x128xf32>
    %882 = arith.mulf %878, %878 : vector<1x128xf32>
    %883 = arith.addf %881, %882 : vector<1x128xf32>
    %cst_539 = arith.constant 9.99999996E-13 : f32
    %884 = vector.broadcast %cst_539 : f32 to vector<1x128xf32>
    %885 = arith.addf %883, %884 : vector<1x128xf32>
    %886 = math.rsqrt %885 : vector<1x128xf32>
    %887 = arith.mulf %885, %886 : vector<1x128xf32>
    %888 = arith.mulf %874, %886 : vector<1x128xf32>
    %889 = arith.mulf %876, %886 : vector<1x128xf32>
    %890 = arith.mulf %878, %886 : vector<1x128xf32>
    %891 = math.cos %887 : vector<1x128xf32>
    %892 = math.sin %887 : vector<1x128xf32>
    %cst_540 = arith.constant 1.000000e+00 : f32
    %893 = vector.broadcast %cst_540 : f32 to vector<1x128xf32>
    %894 = arith.subf %893, %891 : vector<1x128xf32>
    %895 = arith.mulf %894, %888 : vector<1x128xf32>
    %896 = arith.mulf %894, %889 : vector<1x128xf32>
    %897 = arith.mulf %894, %890 : vector<1x128xf32>
    %898 = arith.mulf %892, %888 : vector<1x128xf32>
    %899 = arith.mulf %892, %889 : vector<1x128xf32>
    %900 = arith.mulf %892, %890 : vector<1x128xf32>
    %901 = arith.mulf %895, %889 : vector<1x128xf32>
    %902 = arith.mulf %895, %890 : vector<1x128xf32>
    %903 = arith.mulf %896, %890 : vector<1x128xf32>
    %904 = arith.mulf %895, %888 : vector<1x128xf32>
    %905 = arith.addf %891, %904 : vector<1x128xf32>
    %906 = arith.subf %901, %900 : vector<1x128xf32>
    %907 = arith.addf %902, %899 : vector<1x128xf32>
    %c0_541 = arith.constant 0 : index
    %c6_542 = arith.constant 6 : index
    %c0_543 = arith.constant 0 : index
    %c0_544 = arith.constant 0 : index
    %908 = vector.load %arg2[%c0_541, %c6_542, %c0_543, %c0_544] : memref<3x8x1x128xf32, #tpu.memory_space<vmem>>, vector<1x1x1x128xf32>
    %909 = vector.shape_cast %908 : vector<1x1x1x128xf32> to vector<1x128xf32>
    %910 = arith.addf %901, %900 : vector<1x128xf32>
    %911 = arith.mulf %896, %889 : vector<1x128xf32>
    %912 = arith.addf %891, %911 : vector<1x128xf32>
    %913 = arith.subf %903, %898 : vector<1x128xf32>
    %c1_545 = arith.constant 1 : index
    %c6_546 = arith.constant 6 : index
    %c0_547 = arith.constant 0 : index
    %c0_548 = arith.constant 0 : index
    %914 = vector.load %arg2[%c1_545, %c6_546, %c0_547, %c0_548] : memref<3x8x1x128xf32, #tpu.memory_space<vmem>>, vector<1x1x1x128xf32>
    %915 = vector.shape_cast %914 : vector<1x1x1x128xf32> to vector<1x128xf32>
    %916 = arith.subf %902, %899 : vector<1x128xf32>
    %917 = arith.addf %903, %898 : vector<1x128xf32>
    %918 = arith.mulf %897, %890 : vector<1x128xf32>
    %919 = arith.addf %891, %918 : vector<1x128xf32>
    %c2_549 = arith.constant 2 : index
    %c6_550 = arith.constant 6 : index
    %c0_551 = arith.constant 0 : index
    %c0_552 = arith.constant 0 : index
    %920 = vector.load %arg2[%c2_549, %c6_550, %c0_551, %c0_552] : memref<3x8x1x128xf32, #tpu.memory_space<vmem>>, vector<1x1x1x128xf32>
    %921 = vector.shape_cast %920 : vector<1x1x1x128xf32> to vector<1x128xf32>
    %922 = arith.mulf %778, %905 : vector<1x128xf32>
    %923 = arith.mulf %783, %910 : vector<1x128xf32>
    %924 = arith.addf %922, %923 : vector<1x128xf32>
    %925 = arith.mulf %788, %916 : vector<1x128xf32>
    %926 = arith.addf %924, %925 : vector<1x128xf32>
    %927 = arith.mulf %778, %906 : vector<1x128xf32>
    %928 = arith.mulf %783, %912 : vector<1x128xf32>
    %929 = arith.addf %927, %928 : vector<1x128xf32>
    %930 = arith.mulf %788, %917 : vector<1x128xf32>
    %931 = arith.addf %929, %930 : vector<1x128xf32>
    %932 = arith.mulf %778, %907 : vector<1x128xf32>
    %933 = arith.mulf %783, %913 : vector<1x128xf32>
    %934 = arith.addf %932, %933 : vector<1x128xf32>
    %935 = arith.mulf %788, %919 : vector<1x128xf32>
    %936 = arith.addf %934, %935 : vector<1x128xf32>
    %937 = arith.mulf %778, %909 : vector<1x128xf32>
    %938 = arith.mulf %783, %915 : vector<1x128xf32>
    %939 = arith.addf %937, %938 : vector<1x128xf32>
    %940 = arith.mulf %788, %921 : vector<1x128xf32>
    %941 = arith.addf %939, %940 : vector<1x128xf32>
    %942 = arith.addf %941, %794 : vector<1x128xf32>
    %943 = arith.mulf %799, %905 : vector<1x128xf32>
    %944 = arith.mulf %804, %910 : vector<1x128xf32>
    %945 = arith.addf %943, %944 : vector<1x128xf32>
    %946 = arith.mulf %809, %916 : vector<1x128xf32>
    %947 = arith.addf %945, %946 : vector<1x128xf32>
    %948 = arith.mulf %799, %906 : vector<1x128xf32>
    %949 = arith.mulf %804, %912 : vector<1x128xf32>
    %950 = arith.addf %948, %949 : vector<1x128xf32>
    %951 = arith.mulf %809, %917 : vector<1x128xf32>
    %952 = arith.addf %950, %951 : vector<1x128xf32>
    %953 = arith.mulf %799, %907 : vector<1x128xf32>
    %954 = arith.mulf %804, %913 : vector<1x128xf32>
    %955 = arith.addf %953, %954 : vector<1x128xf32>
    %956 = arith.mulf %809, %919 : vector<1x128xf32>
    %957 = arith.addf %955, %956 : vector<1x128xf32>
    %958 = arith.mulf %799, %909 : vector<1x128xf32>
    %959 = arith.mulf %804, %915 : vector<1x128xf32>
    %960 = arith.addf %958, %959 : vector<1x128xf32>
    %961 = arith.mulf %809, %921 : vector<1x128xf32>
    %962 = arith.addf %960, %961 : vector<1x128xf32>
    %963 = arith.addf %962, %815 : vector<1x128xf32>
    %964 = arith.mulf %820, %905 : vector<1x128xf32>
    %965 = arith.mulf %825, %910 : vector<1x128xf32>
    %966 = arith.addf %964, %965 : vector<1x128xf32>
    %967 = arith.mulf %830, %916 : vector<1x128xf32>
    %968 = arith.addf %966, %967 : vector<1x128xf32>
    %969 = arith.mulf %820, %906 : vector<1x128xf32>
    %970 = arith.mulf %825, %912 : vector<1x128xf32>
    %971 = arith.addf %969, %970 : vector<1x128xf32>
    %972 = arith.mulf %830, %917 : vector<1x128xf32>
    %973 = arith.addf %971, %972 : vector<1x128xf32>
    %974 = arith.mulf %820, %907 : vector<1x128xf32>
    %975 = arith.mulf %825, %913 : vector<1x128xf32>
    %976 = arith.addf %974, %975 : vector<1x128xf32>
    %977 = arith.mulf %830, %919 : vector<1x128xf32>
    %978 = arith.addf %976, %977 : vector<1x128xf32>
    %979 = arith.mulf %820, %909 : vector<1x128xf32>
    %980 = arith.mulf %825, %915 : vector<1x128xf32>
    %981 = arith.addf %979, %980 : vector<1x128xf32>
    %982 = arith.mulf %830, %921 : vector<1x128xf32>
    %983 = arith.addf %981, %982 : vector<1x128xf32>
    %984 = arith.addf %983, %836 : vector<1x128xf32>
    %c6_553 = arith.constant 6 : index
    %c0_554 = arith.constant 0 : index
    %c0_555 = arith.constant 0 : index
    %c0_556 = arith.constant 0 : index
    %985 = vector.load %arg3[%c6_553, %c0_554, %c0_555, %c0_556] : memref<8x12x1x128xf32, #tpu.memory_space<vmem>>, vector<1x1x1x128xf32>
    %986 = vector.shape_cast %985 : vector<1x1x1x128xf32> to vector<1x128xf32>
    %987 = vector.shape_cast %926 : vector<1x128xf32> to vector<1x1x1x128xf32>
    tpu.vector_store %arg3[%c6_553, %c0_554, %c0_555, %c0_556], %987 {strides = array<i32>} : memref<8x12x1x128xf32, #tpu.memory_space<vmem>>, vector<1x1x1x128xf32>,
    %c6_557 = arith.constant 6 : index
    %c1_558 = arith.constant 1 : index
    %c0_559 = arith.constant 0 : index
    %c0_560 = arith.constant 0 : index
    %988 = vector.load %arg3[%c6_557, %c1_558, %c0_559, %c0_560] : memref<8x12x1x128xf32, #tpu.memory_space<vmem>>, vector<1x1x1x128xf32>
    %989 = vector.shape_cast %988 : vector<1x1x1x128xf32> to vector<1x128xf32>
    %990 = vector.shape_cast %931 : vector<1x128xf32> to vector<1x1x1x128xf32>
    tpu.vector_store %arg3[%c6_557, %c1_558, %c0_559, %c0_560], %990 {strides = array<i32>} : memref<8x12x1x128xf32, #tpu.memory_space<vmem>>, vector<1x1x1x128xf32>,
    %c6_561 = arith.constant 6 : index
    %c2_562 = arith.constant 2 : index
    %c0_563 = arith.constant 0 : index
    %c0_564 = arith.constant 0 : index
    %991 = vector.load %arg3[%c6_561, %c2_562, %c0_563, %c0_564] : memref<8x12x1x128xf32, #tpu.memory_space<vmem>>, vector<1x1x1x128xf32>
    %992 = vector.shape_cast %991 : vector<1x1x1x128xf32> to vector<1x128xf32>
    %993 = vector.shape_cast %936 : vector<1x128xf32> to vector<1x1x1x128xf32>
    tpu.vector_store %arg3[%c6_561, %c2_562, %c0_563, %c0_564], %993 {strides = array<i32>} : memref<8x12x1x128xf32, #tpu.memory_space<vmem>>, vector<1x1x1x128xf32>,
    %c6_565 = arith.constant 6 : index
    %c3_566 = arith.constant 3 : index
    %c0_567 = arith.constant 0 : index
    %c0_568 = arith.constant 0 : index
    %994 = vector.load %arg3[%c6_565, %c3_566, %c0_567, %c0_568] : memref<8x12x1x128xf32, #tpu.memory_space<vmem>>, vector<1x1x1x128xf32>
    %995 = vector.shape_cast %994 : vector<1x1x1x128xf32> to vector<1x128xf32>
    %996 = vector.shape_cast %942 : vector<1x128xf32> to vector<1x1x1x128xf32>
    tpu.vector_store %arg3[%c6_565, %c3_566, %c0_567, %c0_568], %996 {strides = array<i32>} : memref<8x12x1x128xf32, #tpu.memory_space<vmem>>, vector<1x1x1x128xf32>,
    %c6_569 = arith.constant 6 : index
    %c4_570 = arith.constant 4 : index
    %c0_571 = arith.constant 0 : index
    %c0_572 = arith.constant 0 : index
    %997 = vector.load %arg3[%c6_569, %c4_570, %c0_571, %c0_572] : memref<8x12x1x128xf32, #tpu.memory_space<vmem>>, vector<1x1x1x128xf32>
    %998 = vector.shape_cast %997 : vector<1x1x1x128xf32> to vector<1x128xf32>
    %999 = vector.shape_cast %947 : vector<1x128xf32> to vector<1x1x1x128xf32>
    tpu.vector_store %arg3[%c6_569, %c4_570, %c0_571, %c0_572], %999 {strides = array<i32>} : memref<8x12x1x128xf32, #tpu.memory_space<vmem>>, vector<1x1x1x128xf32>,
    %c6_573 = arith.constant 6 : index
    %c5_574 = arith.constant 5 : index
    %c0_575 = arith.constant 0 : index
    %c0_576 = arith.constant 0 : index
    %1000 = vector.load %arg3[%c6_573, %c5_574, %c0_575, %c0_576] : memref<8x12x1x128xf32, #tpu.memory_space<vmem>>, vector<1x1x1x128xf32>
    %1001 = vector.shape_cast %1000 : vector<1x1x1x128xf32> to vector<1x128xf32>
    %1002 = vector.shape_cast %952 : vector<1x128xf32> to vector<1x1x1x128xf32>
    tpu.vector_store %arg3[%c6_573, %c5_574, %c0_575, %c0_576], %1002 {strides = array<i32>} : memref<8x12x1x128xf32, #tpu.memory_space<vmem>>, vector<1x1x1x128xf32>,
    %c6_577 = arith.constant 6 : index
    %c6_578 = arith.constant 6 : index
    %c0_579 = arith.constant 0 : index
    %c0_580 = arith.constant 0 : index
    %1003 = vector.load %arg3[%c6_577, %c6_578, %c0_579, %c0_580] : memref<8x12x1x128xf32, #tpu.memory_space<vmem>>, vector<1x1x1x128xf32>
    %1004 = vector.shape_cast %1003 : vector<1x1x1x128xf32> to vector<1x128xf32>
    %1005 = vector.shape_cast %957 : vector<1x128xf32> to vector<1x1x1x128xf32>
    tpu.vector_store %arg3[%c6_577, %c6_578, %c0_579, %c0_580], %1005 {strides = array<i32>} : memref<8x12x1x128xf32, #tpu.memory_space<vmem>>, vector<1x1x1x128xf32>,
    %c6_581 = arith.constant 6 : index
    %c7_582 = arith.constant 7 : index
    %c0_583 = arith.constant 0 : index
    %c0_584 = arith.constant 0 : index
    %1006 = vector.load %arg3[%c6_581, %c7_582, %c0_583, %c0_584] : memref<8x12x1x128xf32, #tpu.memory_space<vmem>>, vector<1x1x1x128xf32>
    %1007 = vector.shape_cast %1006 : vector<1x1x1x128xf32> to vector<1x128xf32>
    %1008 = vector.shape_cast %963 : vector<1x128xf32> to vector<1x1x1x128xf32>
    tpu.vector_store %arg3[%c6_581, %c7_582, %c0_583, %c0_584], %1008 {strides = array<i32>} : memref<8x12x1x128xf32, #tpu.memory_space<vmem>>, vector<1x1x1x128xf32>,
    %c6_585 = arith.constant 6 : index
    %c8_586 = arith.constant 8 : index
    %c0_587 = arith.constant 0 : index
    %c0_588 = arith.constant 0 : index
    %1009 = vector.load %arg3[%c6_585, %c8_586, %c0_587, %c0_588] : memref<8x12x1x128xf32, #tpu.memory_space<vmem>>, vector<1x1x1x128xf32>
    %1010 = vector.shape_cast %1009 : vector<1x1x1x128xf32> to vector<1x128xf32>
    %1011 = vector.shape_cast %968 : vector<1x128xf32> to vector<1x1x1x128xf32>
    tpu.vector_store %arg3[%c6_585, %c8_586, %c0_587, %c0_588], %1011 {strides = array<i32>} : memref<8x12x1x128xf32, #tpu.memory_space<vmem>>, vector<1x1x1x128xf32>,
    %c6_589 = arith.constant 6 : index
    %c9_590 = arith.constant 9 : index
    %c0_591 = arith.constant 0 : index
    %c0_592 = arith.constant 0 : index
    %1012 = vector.load %arg3[%c6_589, %c9_590, %c0_591, %c0_592] : memref<8x12x1x128xf32, #tpu.memory_space<vmem>>, vector<1x1x1x128xf32>
    %1013 = vector.shape_cast %1012 : vector<1x1x1x128xf32> to vector<1x128xf32>
    %1014 = vector.shape_cast %973 : vector<1x128xf32> to vector<1x1x1x128xf32>
    tpu.vector_store %arg3[%c6_589, %c9_590, %c0_591, %c0_592], %1014 {strides = array<i32>} : memref<8x12x1x128xf32, #tpu.memory_space<vmem>>, vector<1x1x1x128xf32>,
    %c6_593 = arith.constant 6 : index
    %c10_594 = arith.constant 10 : index
    %c0_595 = arith.constant 0 : index
    %c0_596 = arith.constant 0 : index
    %1015 = vector.load %arg3[%c6_593, %c10_594, %c0_595, %c0_596] : memref<8x12x1x128xf32, #tpu.memory_space<vmem>>, vector<1x1x1x128xf32>
    %1016 = vector.shape_cast %1015 : vector<1x1x1x128xf32> to vector<1x128xf32>
    %1017 = vector.shape_cast %978 : vector<1x128xf32> to vector<1x1x1x128xf32>
    tpu.vector_store %arg3[%c6_593, %c10_594, %c0_595, %c0_596], %1017 {strides = array<i32>} : memref<8x12x1x128xf32, #tpu.memory_space<vmem>>, vector<1x1x1x128xf32>,
    %c6_597 = arith.constant 6 : index
    %c11_598 = arith.constant 11 : index
    %c0_599 = arith.constant 0 : index
    %c0_600 = arith.constant 0 : index
    %1018 = vector.load %arg3[%c6_597, %c11_598, %c0_599, %c0_600] : memref<8x12x1x128xf32, #tpu.memory_space<vmem>>, vector<1x1x1x128xf32>
    %1019 = vector.shape_cast %1018 : vector<1x1x1x128xf32> to vector<1x128xf32>
    %1020 = vector.shape_cast %984 : vector<1x128xf32> to vector<1x1x1x128xf32>
    tpu.vector_store %arg3[%c6_597, %c11_598, %c0_599, %c0_600], %1020 {strides = array<i32>} : memref<8x12x1x128xf32, #tpu.memory_space<vmem>>, vector<1x1x1x128xf32>,
    %c0_601 = arith.constant 0 : index
    %c7_602 = arith.constant 7 : index
    %c0_603 = arith.constant 0 : index
    %c0_604 = arith.constant 0 : index
    %1021 = vector.load %arg1[%c0_601, %c7_602, %c0_603, %c0_604] : memref<3x8x1x128xf32, #tpu.memory_space<vmem>>, vector<1x1x1x128xf32>
    %1022 = vector.shape_cast %1021 : vector<1x1x1x128xf32> to vector<1x128xf32>
    %c1_605 = arith.constant 1 : index
    %c7_606 = arith.constant 7 : index
    %c0_607 = arith.constant 0 : index
    %c0_608 = arith.constant 0 : index
    %1023 = vector.load %arg1[%c1_605, %c7_606, %c0_607, %c0_608] : memref<3x8x1x128xf32, #tpu.memory_space<vmem>>, vector<1x1x1x128xf32>
    %1024 = vector.shape_cast %1023 : vector<1x1x1x128xf32> to vector<1x128xf32>
    %c2_609 = arith.constant 2 : index
    %c7_610 = arith.constant 7 : index
    %c0_611 = arith.constant 0 : index
    %c0_612 = arith.constant 0 : index
    %1025 = vector.load %arg1[%c2_609, %c7_610, %c0_611, %c0_612] : memref<3x8x1x128xf32, #tpu.memory_space<vmem>>, vector<1x1x1x128xf32>
    %1026 = vector.shape_cast %1025 : vector<1x1x1x128xf32> to vector<1x128xf32>
    %1027 = arith.mulf %1022, %1022 : vector<1x128xf32>
    %1028 = arith.mulf %1024, %1024 : vector<1x128xf32>
    %1029 = arith.addf %1027, %1028 : vector<1x128xf32>
    %1030 = arith.mulf %1026, %1026 : vector<1x128xf32>
    %1031 = arith.addf %1029, %1030 : vector<1x128xf32>
    %cst_613 = arith.constant 9.99999996E-13 : f32
    %1032 = vector.broadcast %cst_613 : f32 to vector<1x128xf32>
    %1033 = arith.addf %1031, %1032 : vector<1x128xf32>
    %1034 = math.rsqrt %1033 : vector<1x128xf32>
    %1035 = arith.mulf %1033, %1034 : vector<1x128xf32>
    %1036 = arith.mulf %1022, %1034 : vector<1x128xf32>
    %1037 = arith.mulf %1024, %1034 : vector<1x128xf32>
    %1038 = arith.mulf %1026, %1034 : vector<1x128xf32>
    %1039 = math.cos %1035 : vector<1x128xf32>
    %1040 = math.sin %1035 : vector<1x128xf32>
    %cst_614 = arith.constant 1.000000e+00 : f32
    %1041 = vector.broadcast %cst_614 : f32 to vector<1x128xf32>
    %1042 = arith.subf %1041, %1039 : vector<1x128xf32>
    %1043 = arith.mulf %1042, %1036 : vector<1x128xf32>
    %1044 = arith.mulf %1042, %1037 : vector<1x128xf32>
    %1045 = arith.mulf %1042, %1038 : vector<1x128xf32>
    %1046 = arith.mulf %1040, %1036 : vector<1x128xf32>
    %1047 = arith.mulf %1040, %1037 : vector<1x128xf32>
    %1048 = arith.mulf %1040, %1038 : vector<1x128xf32>
    %1049 = arith.mulf %1043, %1037 : vector<1x128xf32>
    %1050 = arith.mulf %1043, %1038 : vector<1x128xf32>
    %1051 = arith.mulf %1044, %1038 : vector<1x128xf32>
    %1052 = arith.mulf %1043, %1036 : vector<1x128xf32>
    %1053 = arith.addf %1039, %1052 : vector<1x128xf32>
    %1054 = arith.subf %1049, %1048 : vector<1x128xf32>
    %1055 = arith.addf %1050, %1047 : vector<1x128xf32>
    %c0_615 = arith.constant 0 : index
    %c7_616 = arith.constant 7 : index
    %c0_617 = arith.constant 0 : index
    %c0_618 = arith.constant 0 : index
    %1056 = vector.load %arg2[%c0_615, %c7_616, %c0_617, %c0_618] : memref<3x8x1x128xf32, #tpu.memory_space<vmem>>, vector<1x1x1x128xf32>
    %1057 = vector.shape_cast %1056 : vector<1x1x1x128xf32> to vector<1x128xf32>
    %1058 = arith.addf %1049, %1048 : vector<1x128xf32>
    %1059 = arith.mulf %1044, %1037 : vector<1x128xf32>
    %1060 = arith.addf %1039, %1059 : vector<1x128xf32>
    %1061 = arith.subf %1051, %1046 : vector<1x128xf32>
    %c1_619 = arith.constant 1 : index
    %c7_620 = arith.constant 7 : index
    %c0_621 = arith.constant 0 : index
    %c0_622 = arith.constant 0 : index
    %1062 = vector.load %arg2[%c1_619, %c7_620, %c0_621, %c0_622] : memref<3x8x1x128xf32, #tpu.memory_space<vmem>>, vector<1x1x1x128xf32>
    %1063 = vector.shape_cast %1062 : vector<1x1x1x128xf32> to vector<1x128xf32>
    %1064 = arith.subf %1050, %1047 : vector<1x128xf32>
    %1065 = arith.addf %1051, %1046 : vector<1x128xf32>
    %1066 = arith.mulf %1045, %1038 : vector<1x128xf32>
    %1067 = arith.addf %1039, %1066 : vector<1x128xf32>
    %c2_623 = arith.constant 2 : index
    %c7_624 = arith.constant 7 : index
    %c0_625 = arith.constant 0 : index
    %c0_626 = arith.constant 0 : index
    %1068 = vector.load %arg2[%c2_623, %c7_624, %c0_625, %c0_626] : memref<3x8x1x128xf32, #tpu.memory_space<vmem>>, vector<1x1x1x128xf32>
    %1069 = vector.shape_cast %1068 : vector<1x1x1x128xf32> to vector<1x128xf32>
    %1070 = arith.mulf %926, %1053 : vector<1x128xf32>
    %1071 = arith.mulf %931, %1058 : vector<1x128xf32>
    %1072 = arith.addf %1070, %1071 : vector<1x128xf32>
    %1073 = arith.mulf %936, %1064 : vector<1x128xf32>
    %1074 = arith.addf %1072, %1073 : vector<1x128xf32>
    %1075 = arith.mulf %926, %1054 : vector<1x128xf32>
    %1076 = arith.mulf %931, %1060 : vector<1x128xf32>
    %1077 = arith.addf %1075, %1076 : vector<1x128xf32>
    %1078 = arith.mulf %936, %1065 : vector<1x128xf32>
    %1079 = arith.addf %1077, %1078 : vector<1x128xf32>
    %1080 = arith.mulf %926, %1055 : vector<1x128xf32>
    %1081 = arith.mulf %931, %1061 : vector<1x128xf32>
    %1082 = arith.addf %1080, %1081 : vector<1x128xf32>
    %1083 = arith.mulf %936, %1067 : vector<1x128xf32>
    %1084 = arith.addf %1082, %1083 : vector<1x128xf32>
    %1085 = arith.mulf %926, %1057 : vector<1x128xf32>
    %1086 = arith.mulf %931, %1063 : vector<1x128xf32>
    %1087 = arith.addf %1085, %1086 : vector<1x128xf32>
    %1088 = arith.mulf %936, %1069 : vector<1x128xf32>
    %1089 = arith.addf %1087, %1088 : vector<1x128xf32>
    %1090 = arith.addf %1089, %942 : vector<1x128xf32>
    %1091 = arith.mulf %947, %1053 : vector<1x128xf32>
    %1092 = arith.mulf %952, %1058 : vector<1x128xf32>
    %1093 = arith.addf %1091, %1092 : vector<1x128xf32>
    %1094 = arith.mulf %957, %1064 : vector<1x128xf32>
    %1095 = arith.addf %1093, %1094 : vector<1x128xf32>
    %1096 = arith.mulf %947, %1054 : vector<1x128xf32>
    %1097 = arith.mulf %952, %1060 : vector<1x128xf32>
    %1098 = arith.addf %1096, %1097 : vector<1x128xf32>
    %1099 = arith.mulf %957, %1065 : vector<1x128xf32>
    %1100 = arith.addf %1098, %1099 : vector<1x128xf32>
    %1101 = arith.mulf %947, %1055 : vector<1x128xf32>
    %1102 = arith.mulf %952, %1061 : vector<1x128xf32>
    %1103 = arith.addf %1101, %1102 : vector<1x128xf32>
    %1104 = arith.mulf %957, %1067 : vector<1x128xf32>
    %1105 = arith.addf %1103, %1104 : vector<1x128xf32>
    %1106 = arith.mulf %947, %1057 : vector<1x128xf32>
    %1107 = arith.mulf %952, %1063 : vector<1x128xf32>
    %1108 = arith.addf %1106, %1107 : vector<1x128xf32>
    %1109 = arith.mulf %957, %1069 : vector<1x128xf32>
    %1110 = arith.addf %1108, %1109 : vector<1x128xf32>
    %1111 = arith.addf %1110, %963 : vector<1x128xf32>
    %1112 = arith.mulf %968, %1053 : vector<1x128xf32>
    %1113 = arith.mulf %973, %1058 : vector<1x128xf32>
    %1114 = arith.addf %1112, %1113 : vector<1x128xf32>
    %1115 = arith.mulf %978, %1064 : vector<1x128xf32>
    %1116 = arith.addf %1114, %1115 : vector<1x128xf32>
    %1117 = arith.mulf %968, %1054 : vector<1x128xf32>
    %1118 = arith.mulf %973, %1060 : vector<1x128xf32>
    %1119 = arith.addf %1117, %1118 : vector<1x128xf32>
    %1120 = arith.mulf %978, %1065 : vector<1x128xf32>
    %1121 = arith.addf %1119, %1120 : vector<1x128xf32>
    %1122 = arith.mulf %968, %1055 : vector<1x128xf32>
    %1123 = arith.mulf %973, %1061 : vector<1x128xf32>
    %1124 = arith.addf %1122, %1123 : vector<1x128xf32>
    %1125 = arith.mulf %978, %1067 : vector<1x128xf32>
    %1126 = arith.addf %1124, %1125 : vector<1x128xf32>
    %1127 = arith.mulf %968, %1057 : vector<1x128xf32>
    %1128 = arith.mulf %973, %1063 : vector<1x128xf32>
    %1129 = arith.addf %1127, %1128 : vector<1x128xf32>
    %1130 = arith.mulf %978, %1069 : vector<1x128xf32>
    %1131 = arith.addf %1129, %1130 : vector<1x128xf32>
    %1132 = arith.addf %1131, %984 : vector<1x128xf32>
    %c7_627 = arith.constant 7 : index
    %c0_628 = arith.constant 0 : index
    %c0_629 = arith.constant 0 : index
    %c0_630 = arith.constant 0 : index
    %1133 = vector.load %arg3[%c7_627, %c0_628, %c0_629, %c0_630] : memref<8x12x1x128xf32, #tpu.memory_space<vmem>>, vector<1x1x1x128xf32>
    %1134 = vector.shape_cast %1133 : vector<1x1x1x128xf32> to vector<1x128xf32>
    %1135 = vector.shape_cast %1074 : vector<1x128xf32> to vector<1x1x1x128xf32>
    tpu.vector_store %arg3[%c7_627, %c0_628, %c0_629, %c0_630], %1135 {strides = array<i32>} : memref<8x12x1x128xf32, #tpu.memory_space<vmem>>, vector<1x1x1x128xf32>,
    %c7_631 = arith.constant 7 : index
    %c1_632 = arith.constant 1 : index
    %c0_633 = arith.constant 0 : index
    %c0_634 = arith.constant 0 : index
    %1136 = vector.load %arg3[%c7_631, %c1_632, %c0_633, %c0_634] : memref<8x12x1x128xf32, #tpu.memory_space<vmem>>, vector<1x1x1x128xf32>
    %1137 = vector.shape_cast %1136 : vector<1x1x1x128xf32> to vector<1x128xf32>
    %1138 = vector.shape_cast %1079 : vector<1x128xf32> to vector<1x1x1x128xf32>
    tpu.vector_store %arg3[%c7_631, %c1_632, %c0_633, %c0_634], %1138 {strides = array<i32>} : memref<8x12x1x128xf32, #tpu.memory_space<vmem>>, vector<1x1x1x128xf32>,
    %c7_635 = arith.constant 7 : index
    %c2_636 = arith.constant 2 : index
    %c0_637 = arith.constant 0 : index
    %c0_638 = arith.constant 0 : index
    %1139 = vector.load %arg3[%c7_635, %c2_636, %c0_637, %c0_638] : memref<8x12x1x128xf32, #tpu.memory_space<vmem>>, vector<1x1x1x128xf32>
    %1140 = vector.shape_cast %1139 : vector<1x1x1x128xf32> to vector<1x128xf32>
    %1141 = vector.shape_cast %1084 : vector<1x128xf32> to vector<1x1x1x128xf32>
    tpu.vector_store %arg3[%c7_635, %c2_636, %c0_637, %c0_638], %1141 {strides = array<i32>} : memref<8x12x1x128xf32, #tpu.memory_space<vmem>>, vector<1x1x1x128xf32>,
    %c7_639 = arith.constant 7 : index
    %c3_640 = arith.constant 3 : index
    %c0_641 = arith.constant 0 : index
    %c0_642 = arith.constant 0 : index
    %1142 = vector.load %arg3[%c7_639, %c3_640, %c0_641, %c0_642] : memref<8x12x1x128xf32, #tpu.memory_space<vmem>>, vector<1x1x1x128xf32>
    %1143 = vector.shape_cast %1142 : vector<1x1x1x128xf32> to vector<1x128xf32>
    %1144 = vector.shape_cast %1090 : vector<1x128xf32> to vector<1x1x1x128xf32>
    tpu.vector_store %arg3[%c7_639, %c3_640, %c0_641, %c0_642], %1144 {strides = array<i32>} : memref<8x12x1x128xf32, #tpu.memory_space<vmem>>, vector<1x1x1x128xf32>,
    %c7_643 = arith.constant 7 : index
    %c4_644 = arith.constant 4 : index
    %c0_645 = arith.constant 0 : index
    %c0_646 = arith.constant 0 : index
    %1145 = vector.load %arg3[%c7_643, %c4_644, %c0_645, %c0_646] : memref<8x12x1x128xf32, #tpu.memory_space<vmem>>, vector<1x1x1x128xf32>
    %1146 = vector.shape_cast %1145 : vector<1x1x1x128xf32> to vector<1x128xf32>
    %1147 = vector.shape_cast %1095 : vector<1x128xf32> to vector<1x1x1x128xf32>
    tpu.vector_store %arg3[%c7_643, %c4_644, %c0_645, %c0_646], %1147 {strides = array<i32>} : memref<8x12x1x128xf32, #tpu.memory_space<vmem>>, vector<1x1x1x128xf32>,
    %c7_647 = arith.constant 7 : index
    %c5_648 = arith.constant 5 : index
    %c0_649 = arith.constant 0 : index
    %c0_650 = arith.constant 0 : index
    %1148 = vector.load %arg3[%c7_647, %c5_648, %c0_649, %c0_650] : memref<8x12x1x128xf32, #tpu.memory_space<vmem>>, vector<1x1x1x128xf32>
    %1149 = vector.shape_cast %1148 : vector<1x1x1x128xf32> to vector<1x128xf32>
    %1150 = vector.shape_cast %1100 : vector<1x128xf32> to vector<1x1x1x128xf32>
    tpu.vector_store %arg3[%c7_647, %c5_648, %c0_649, %c0_650], %1150 {strides = array<i32>} : memref<8x12x1x128xf32, #tpu.memory_space<vmem>>, vector<1x1x1x128xf32>,
    %c7_651 = arith.constant 7 : index
    %c6_652 = arith.constant 6 : index
    %c0_653 = arith.constant 0 : index
    %c0_654 = arith.constant 0 : index
    %1151 = vector.load %arg3[%c7_651, %c6_652, %c0_653, %c0_654] : memref<8x12x1x128xf32, #tpu.memory_space<vmem>>, vector<1x1x1x128xf32>
    %1152 = vector.shape_cast %1151 : vector<1x1x1x128xf32> to vector<1x128xf32>
    %1153 = vector.shape_cast %1105 : vector<1x128xf32> to vector<1x1x1x128xf32>
    tpu.vector_store %arg3[%c7_651, %c6_652, %c0_653, %c0_654], %1153 {strides = array<i32>} : memref<8x12x1x128xf32, #tpu.memory_space<vmem>>, vector<1x1x1x128xf32>,
    %c7_655 = arith.constant 7 : index
    %c7_656 = arith.constant 7 : index
    %c0_657 = arith.constant 0 : index
    %c0_658 = arith.constant 0 : index
    %1154 = vector.load %arg3[%c7_655, %c7_656, %c0_657, %c0_658] : memref<8x12x1x128xf32, #tpu.memory_space<vmem>>, vector<1x1x1x128xf32>
    %1155 = vector.shape_cast %1154 : vector<1x1x1x128xf32> to vector<1x128xf32>
    %1156 = vector.shape_cast %1111 : vector<1x128xf32> to vector<1x1x1x128xf32>
    tpu.vector_store %arg3[%c7_655, %c7_656, %c0_657, %c0_658], %1156 {strides = array<i32>} : memref<8x12x1x128xf32, #tpu.memory_space<vmem>>, vector<1x1x1x128xf32>,
    %c7_659 = arith.constant 7 : index
    %c8_660 = arith.constant 8 : index
    %c0_661 = arith.constant 0 : index
    %c0_662 = arith.constant 0 : index
    %1157 = vector.load %arg3[%c7_659, %c8_660, %c0_661, %c0_662] : memref<8x12x1x128xf32, #tpu.memory_space<vmem>>, vector<1x1x1x128xf32>
    %1158 = vector.shape_cast %1157 : vector<1x1x1x128xf32> to vector<1x128xf32>
    %1159 = vector.shape_cast %1116 : vector<1x128xf32> to vector<1x1x1x128xf32>
    tpu.vector_store %arg3[%c7_659, %c8_660, %c0_661, %c0_662], %1159 {strides = array<i32>} : memref<8x12x1x128xf32, #tpu.memory_space<vmem>>, vector<1x1x1x128xf32>,
    %c7_663 = arith.constant 7 : index
    %c9_664 = arith.constant 9 : index
    %c0_665 = arith.constant 0 : index
    %c0_666 = arith.constant 0 : index
    %1160 = vector.load %arg3[%c7_663, %c9_664, %c0_665, %c0_666] : memref<8x12x1x128xf32, #tpu.memory_space<vmem>>, vector<1x1x1x128xf32>
    %1161 = vector.shape_cast %1160 : vector<1x1x1x128xf32> to vector<1x128xf32>
    %1162 = vector.shape_cast %1121 : vector<1x128xf32> to vector<1x1x1x128xf32>
    tpu.vector_store %arg3[%c7_663, %c9_664, %c0_665, %c0_666], %1162 {strides = array<i32>} : memref<8x12x1x128xf32, #tpu.memory_space<vmem>>, vector<1x1x1x128xf32>,
    %c7_667 = arith.constant 7 : index
    %c10_668 = arith.constant 10 : index
    %c0_669 = arith.constant 0 : index
    %c0_670 = arith.constant 0 : index
    %1163 = vector.load %arg3[%c7_667, %c10_668, %c0_669, %c0_670] : memref<8x12x1x128xf32, #tpu.memory_space<vmem>>, vector<1x1x1x128xf32>
    %1164 = vector.shape_cast %1163 : vector<1x1x1x128xf32> to vector<1x128xf32>
    %1165 = vector.shape_cast %1126 : vector<1x128xf32> to vector<1x1x1x128xf32>
    tpu.vector_store %arg3[%c7_667, %c10_668, %c0_669, %c0_670], %1165 {strides = array<i32>} : memref<8x12x1x128xf32, #tpu.memory_space<vmem>>, vector<1x1x1x128xf32>,
    %c7_671 = arith.constant 7 : index
    %c11_672 = arith.constant 11 : index
    %c0_673 = arith.constant 0 : index
    %c0_674 = arith.constant 0 : index
    %1166 = vector.load %arg3[%c7_671, %c11_672, %c0_673, %c0_674] : memref<8x12x1x128xf32, #tpu.memory_space<vmem>>, vector<1x1x1x128xf32>
    %1167 = vector.shape_cast %1166 : vector<1x1x1x128xf32> to vector<1x128xf32>
    %1168 = vector.shape_cast %1132 : vector<1x128xf32> to vector<1x1x1x128xf32>
    tpu.vector_store %arg3[%c7_671, %c11_672, %c0_673, %c0_674], %1168 {strides = array<i32>} : memref<8x12x1x128xf32, #tpu.memory_space<vmem>>, vector<1x1x1x128xf32>,
    return
  }
  func.func @transform_0(%arg0: i32) -> (i32, i32, i32, i32) {
    %c0_i32 = arith.constant 0 : i32
    %c0_i32_0 = arith.constant 0 : i32
    %c0_i32_1 = arith.constant 0 : i32
    %c0_i32_2 = arith.constant 0 : i32
    return %c0_i32, %c0_i32_0, %arg0, %c0_i32_1 : i32, i32, i32, i32
  }
  func.func @transform_1(%arg0: i32) -> (i32, i32, i32, i32) {
    %c0_i32 = arith.constant 0 : i32
    %c0_i32_0 = arith.constant 0 : i32
    %c0_i32_1 = arith.constant 0 : i32
    %c0_i32_2 = arith.constant 0 : i32
    %c0_i32_3 = arith.constant 0 : i32
    return %c0_i32, %c0_i32_0, %c0_i32_1, %c0_i32_2 : i32, i32, i32, i32
  }
  func.func @transform_2(%arg0: i32) -> (i32, i32, i32, i32) {
    %c0_i32 = arith.constant 0 : i32
    %c0_i32_0 = arith.constant 0 : i32
    %c0_i32_1 = arith.constant 0 : i32
    %c0_i32_2 = arith.constant 0 : i32
    return %c0_i32, %c0_i32_0, %arg0, %c0_i32_1 : i32, i32, i32, i32
  }
}

</mosaic_0001>

<llo_original>
// kernel: tpu_custom_call.1
$region0: #{tpu_custom_call.1}
  #allocation0 [shape = 'u32[]', space=smem, size = 0x4, offset = 0x4, fixed_abs, tag = 'smem constant byte address 0x4 - core index']
  #allocation1 [shape = 'u32[144,128]{1,0:T(1,128)}', space=vmem, size = 0x12000, scoped, tag = 'internal scratch']
  %s0 = inlined_call_operand.hbm [shape: f32[3,8,1,128], index: 0, kind: input, shape index: {}]
  %s1 = inlined_call_operand.hbm [shape: f32[3,8,1,128], index: 1, kind: input, shape index: {}]
  %s2 = inlined_call_operand.hbm [shape: f32[8,12,1,128], index: 2, kind: output, shape index: {}]
  %s3 = sld [smem:[#allocation0]]
  $region26: #{tpu_custom_call.1} parent=0
    _
  %s5 = ssub.s32 1, %s3
  %s6 = scalar_select 0, %s5, %s3
  $region1: #{tpu_custom_call.1} parent=0
    #allocation2 [shape = 'u8[12288]{0}', space=vmem, size = 0x3000, scoped, tag = 'input window, operand 0, single buffered']
    #allocation3 [shape = 's32[1]{0}', space=sflag, size = 0x4, scoped, tag = 'scoped memory for tpu_custom_call.1']
    #allocation4 [shape = 's32[1]{0}', space=sflag, size = 0x4, scoped, tag = 'scoped memory for tpu_custom_call.1']
    #allocation5 [shape = 'u8[12288]{0}', space=vmem, size = 0x3000, scoped, tag = 'input window, operand 1, single buffered']
    #allocation6 [shape = 's32[1]{0}', space=sflag, size = 0x4, scoped, tag = 'scoped memory for tpu_custom_call.1']
    #allocation7 [shape = 'u8[49152]{0}', space=vmem, size = 0xc000, scoped, tag = 'output window, operand 0, single buffered']
    %7 = vsyncpa [#allocation3], 0
    %8 = vsyncpa [#allocation6], 0
    %9 = vsyncpa [#allocation4], 0
    // Predicated region
    $region2: #{tpu_custom_call.1} parent=1 // pred_check
      _
    $region3: #{tpu_custom_call.1} parent=1 // pred_check_branch
      %11 = sbr.rel (0) target = $region5
    $region4: #{tpu_custom_call.1} parent=1 // pred_region
      %s13 = ssub.s32 384, 384
      %14 = vsyncadd [#allocation3], %s13
      %s15 = sshll.u32 [#allocation2], 4
      %s16 = int_to_ptr.vmem [resolvable:$true] %s15
      %21 = dma.hbm_to_vmem [thread:$0]  %s0, 384, %s16, [#allocation3], 16, 16, 1
    $region5: #{tpu_custom_call.1} parent=1 // pred_fallthru
      _
    // Predicated region
    $region6: #{tpu_custom_call.1} parent=1 // pred_check
      _
    $region7: #{tpu_custom_call.1} parent=1 // pred_check_branch
      %23 = sbr.rel (0) target = $region9
    $region8: #{tpu_custom_call.1} parent=1 // pred_region
      %s25 = ssub.s32 384, 384
      %26 = vsyncadd [#allocation6], %s25
      %s27 = sshll.u32 [#allocation5], 4
      %s28 = int_to_ptr.vmem [resolvable:$true] %s27
      %33 = dma.hbm_to_vmem [thread:$0]  %s1, 384, %s28, [#allocation6], 16, 16, 1
    $region9: #{tpu_custom_call.1} parent=1 // pred_fallthru
      _
    // Predicated region
    $region10: #{tpu_custom_call.1} parent=1 // pred_check
      _
    $region11: #{tpu_custom_call.1} parent=1 // pred_check_branch
      %35 = sbr.rel (0) target = $region13
    $region12: #{tpu_custom_call.1} parent=1 // pred_region
      %36 = dma.done [#allocation3], 384
    $region13: #{tpu_custom_call.1} parent=1 // pred_fallthru
      _
    // Predicated region
    $region14: #{tpu_custom_call.1} parent=1 // pred_check
      _
    $region15: #{tpu_custom_call.1} parent=1 // pred_check_branch
      %38 = sbr.rel (0) target = $region17
    $region16: #{tpu_custom_call.1} parent=1 // pred_region
      %39 = dma.done [#allocation6], 384
    $region17: #{tpu_custom_call.1} parent=1 // pred_fallthru
      _
    %v40 = vld [vmem:[#allocation2] sm:$0x1]
    %s41 = scalar_lea.vmem [#allocation2], 8
    %v42 = vld [vmem:[%s41] sm:$0x1]
    %s43 = scalar_lea.vmem [#allocation2], 16
    %v44 = vld [vmem:[%s43] sm:$0x1]
    %v45 = vmul.f32 %v40, %v40
    %v46 = vmul.f32 %v42, %v42
    %v47 = vadd.f32 %v45, %v46
    %v48 = vmul.f32 %v44, %v44
    %v49 = vadd.f32 %v47, %v48
    %v50 = vadd.f32 %v49, 1e-12
    %v51 = vrsqrt.pop %v50
    %v52 = vmul.f32 %v50, %v51
    %v53 = vmul.f32 %v40, %v51
    %v54 = vmul.f32 %v42, %v51
    %v55 = vmul.f32 %v44, %v51
    %v56 = vand.u32 2147483647, %v52
    %vm57 = vcmp.le.f32.partialorder %v56, 0.7853982
    %vm58 = vcmp.lt.s32.totalorder %v52, 0
    %v59 = vand.u32 %v52, 2139095040
    %v60 = vshrl.u32 %v59, 23
    %v61 = vsub.s32 %v60, 127
    %v62 = vand.u32 2147483647, %v52
    %v63 = vand.u32 %v62, 8388607
    %v64 = vor.u32 %v63, 8388608
    %v65 = vsub.s32 0, %v64
    %v66 = vadd.s32 %v61, 1
    %vm67 = vcmp.gt.s32.totalorder %v66, 0
    %v68 = vsel %vm67, %v66, 0
    %v69 = vshrl.u32 %v68, 5
    %v70 = vand.u32 %v68, 31
    %v71 = vsub.s32 32, %v70
    %v72 = vshrl.u32 683565275, %v71
    %v73 = vshll.u32 683565275, %v70
    %v74 = vshrl.u32 2475754826, %v71
    %v75 = vor.u32 %v73, %v74
    %v76 = vshll.u32 2475754826, %v70
    %v77 = vshrl.u32 2131351028, %v71
    %v78 = vor.u32 %v76, %v77
    %v79 = vshll.u32 2131351028, %v70
    %v80 = vshrl.u32 2102212464, %v71
    %v81 = vor.u32 %v79, %v80
    %v82 = vshll.u32 2102212464, %v70
    %v83 = vshrl.u32 920167782, %v71
    %v84 = vor.u32 %v82, %v83
    %v85 = vshll.u32 920167782, %v70
    %v86 = vshrl.u32 1326507024, %v71
    %v87 = vor.u32 %v85, %v86
    %vm88 = vcmp.lt.s32.totalorder %v69, 1
    %vm89 = vcmp.lt.s32.totalorder %v69, 2
    %vm90 = vcmp.lt.s32.totalorder %v69, 3
    %vm91 = vcmp.lt.s32.totalorder %v69, 4
    %v92 = vsel %vm88, %v72, %v75
    %v93 = vsel %vm91, %v81, 2102212464
    %v94 = vsel %vm90, %v78, %v93
    %v95 = vsel %vm89, %v92, %v94
    %v96 = vsel %vm88, %v75, %v78
    %v97 = vsel %vm91, %v84, 920167782
    %v98 = vsel %vm90, %v81, %v97
    %v99 = vsel %vm89, %v96, %v98
    %v100 = vsel %vm88, %v78, %v81
    %v101 = vsel %vm91, %v87, 1326507024
    %v102 = vsel %vm90, %v84, %v101
    %v103 = vsel %vm89, %v100, %v102
    %v104 = vshll.u32 %v64, 8
    %v105 = vmul.u32.u64.compose %v104, %v103
    %v106 = vextract.low.u32 %v105
    %v107 = vextract.high.u32 %v105
    %v108 = vmul.u32.u64.compose %v104, %v99
    %v109 = vextract.low.u32 %v108
    %v110 = vextract.high.u32 %v108
    %v111 = vmul.u32 %v104, %v95
    %v112 = vadd.s32 %v107, %v109
    %vm113 = vc.u32 %v107, %v109
    %v114 = vadd.s32 %v110, 1
    %v115 = vsel %vm113, %v114, %v110
    %v116 = vadd.s32 %v111, %v115
    %v117 = vadd.s32 %v116, 536870912
    %v118 = vshrl.u32 %v117, 30
    %v119 = vshll.u32 %v118, 30
    %v120 = vsub.s32 %v116, %v119
    %vm121 = vcmp.lt.s32.totalorder %v120, 0
    %v122 = vsub.s32 0, %v120
    %v123 = vsel %vm121, %v122, %v120
    %v124 = vclz %v123
    %v125 = vsub.s32 %v124, 2
    %vm126 = vcmp.gt.s32.totalorder 0, %v125
    %v127 = vsel %vm126, 0, %v125
    %v128 = vsub.s32 32, %v127
    %v129 = vshll.u32 %v120, %v127
    %v130 = vshrl.u32 %v112, %v128
    %v131 = vor.u32 %v129, %v130
    %v132 = vsub.s32 4294967266, %v127
    %v133 = vadd.s32 %v132, 127
    %v134 = vshll.u32 %v133, 23
    %v135 = vor.u32 4788187, %v134
    %v136 = vand.u32 2147483647, %v135
    %v138 = vcvt.s32.f32 %v131
    %v139 = vmul.f32 %v138, %v136
    %v140 = vxor.u32 %v139, 2147483648
    %v141 = vsel %vm58, %v140, %v139
    %v142 = vsub.s32 4, %v118
    %v143 = vsel %vm58, %v142, %v118
    %v144 = vsel %vm57, %v52, %v141
    %v145 = vsel %vm57, 0, %v143
    %v146 = vcosq.f32.pop %v144
    %v147 = vsinq.f32.pop %v144
    %vm148 = vweird.f32 %v52
    %v149 = vand.u32 %v145, 3
    %vm150 = vcmp.lt.s32.totalorder %v149, 2
    %vm151 = vcmp.eq.s32.totalorder %v149, 0
    %v152 = vxor.u32 %v147, 2147483648
    %v153 = vsel %vm151, %v146, %v152
    %vm154 = vcmp.eq.s32.totalorder %v149, 2
    %v155 = vxor.u32 %v146, 2147483648
    %v156 = vsel %vm154, %v155, %v147
    %v157 = vsel %vm150, %v153, %v156
    %v158 = vsel %vm148, nan, %v157
    %v159 = vand.u32 2147483647, %v52
    %vm160 = vcmp.le.f32.partialorder %v159, 0.7853982
    %vm161 = vcmp.lt.s32.totalorder %v52, 0
    %v162 = vand.u32 %v52, 2139095040
    %v163 = vshrl.u32 %v162, 23
    %v164 = vsub.s32 %v163, 127
    %v165 = vand.u32 2147483647, %v52
    %v166 = vand.u32 %v165, 8388607
    %v167 = vor.u32 %v166, 8388608
    %v168 = vsub.s32 0, %v167
    %v169 = vadd.s32 %v164, 1
    %vm170 = vcmp.gt.s32.totalorder %v169, 0
    %v171 = vsel %vm170, %v169, 0
    %v172 = vshrl.u32 %v171, 5
    %v173 = vand.u32 %v171, 31
    %v174 = vsub.s32 32, %v173
    %v175 = vshrl.u32 683565275, %v174
    %v176 = vshll.u32 683565275, %v173
    %v177 = vshrl.u32 2475754826, %v174
    %v178 = vor.u32 %v176, %v177
    %v179 = vshll.u32 2475754826, %v173
    %v180 = vshrl.u32 2131351028, %v174
    %v181 = vor.u32 %v179, %v180
    %v182 = vshll.u32 2131351028, %v173
    %v183 = vshrl.u32 2102212464, %v174
    %v184 = vor.u32 %v182, %v183
    %v185 = vshll.u32 2102212464, %v173
    %v186 = vshrl.u32 920167782, %v174
    %v187 = vor.u32 %v185, %v186
    %v188 = vshll.u32 920167782, %v173
    %v189 = vshrl.u32 1326507024, %v174
    %v190 = vor.u32 %v188, %v189
    %vm191 = vcmp.lt.s32.totalorder %v172, 1
    %vm192 = vcmp.lt.s32.totalorder %v172, 2
    %vm193 = vcmp.lt.s32.totalorder %v172, 3
    %vm194 = vcmp.lt.s32.totalorder %v172, 4
    %v195 = vsel %vm191, %v175, %v178
    %v196 = vsel %vm194, %v184, 2102212464
    %v197 = vsel %vm193, %v181, %v196
    %v198 = vsel %vm192, %v195, %v197
    %v199 = vsel %vm191, %v178, %v181
    %v200 = vsel %vm194, %v187, 920167782
    %v201 = vsel %vm193, %v184, %v200
    %v202 = vsel %vm192, %v199, %v201
    %v203 = vsel %vm191, %v181, %v184
    %v204 = vsel %vm194, %v190, 1326507024
    %v205 = vsel %vm193, %v187, %v204
    %v206 = vsel %vm192, %v203, %v205
    %v207 = vshll.u32 %v167, 8
    %v208 = vmul.u32.u64.compose %v207, %v206
    %v209 = vextract.low.u32 %v208
    %v210 = vextract.high.u32 %v208
    %v211 = vmul.u32.u64.compose %v207, %v202
    %v212 = vextract.low.u32 %v211
    %v213 = vextract.high.u32 %v211
    %v214 = vmul.u32 %v207, %v198
    %v215 = vadd.s32 %v210, %v212
    %vm216 = vc.u32 %v210, %v212
    %v217 = vadd.s32 %v213, 1
    %v218 = vsel %vm216, %v217, %v213
    %v219 = vadd.s32 %v214, %v218
    %v220 = vadd.s32 %v219, 536870912
    %v221 = vshrl.u32 %v220, 30
    %v222 = vshll.u32 %v221, 30
    %v223 = vsub.s32 %v219, %v222
    %vm224 = vcmp.lt.s32.totalorder %v223, 0
    %v225 = vsub.s32 0, %v223
    %v226 = vsel %vm224, %v225, %v223
    %v227 = vclz %v226
    %v228 = vsub.s32 %v227, 2
    %vm229 = vcmp.gt.s32.totalorder 0, %v228
    %v230 = vsel %vm229, 0, %v228
    %v231 = vsub.s32 32, %v230
    %v232 = vshll.u32 %v223, %v230
    %v233 = vshrl.u32 %v215, %v231
    %v234 = vor.u32 %v232, %v233
    %v235 = vsub.s32 4294967266, %v230
    %v236 = vadd.s32 %v235, 127
    %v237 = vshll.u32 %v236, 23
    %v238 = vor.u32 4788187, %v237
    %v239 = vand.u32 2147483647, %v238
    %v241 = vcvt.s32.f32 %v234
    %v242 = vmul.f32 %v241, %v239
    %v243 = vxor.u32 %v242, 2147483648
    %v244 = vsel %vm161, %v243, %v242
    %v245 = vsub.s32 4, %v221
    %v246 = vsel %vm161, %v245, %v221
    %v247 = vsel %vm160, %v52, %v244
    %v248 = vsel %vm160, 0, %v246
    %v249 = vcosq.f32.pop %v247
    %v250 = vsinq.f32.pop %v247
    %vm251 = vweird.f32 %v52
    %v252 = vadd.s32 %v248, 3
    %v253 = vand.u32 %v252, 3
    %vm254 = vcmp.lt.s32.totalorder %v253, 2
    %vm255 = vcmp.eq.s32.totalorder %v253, 0
    %v256 = vxor.u32 %v250, 2147483648
    %v257 = vsel %vm255, %v249, %v256
    %vm258 = vcmp.eq.s32.totalorder %v253, 2
    %v259 = vxor.u32 %v249, 2147483648
    %v260 = vsel %vm258, %v259, %v250
    %v261 = vsel %vm254, %v257, %v260
    %v262 = vsel %vm251, nan, %v261
    %v263 = vsub.f32 1.0, %v158
    %v264 = vmul.f32 %v263, %v53
    %v265 = vmul.f32 %v263, %v54
    %v266 = vmul.f32 %v263, %v55
    %v267 = vmul.f32 %v262, %v53
    %v268 = vmul.f32 %v262, %v54
    %v269 = vmul.f32 %v262, %v55
    %v270 = vmul.f32 %v264, %v54
    %v271 = vmul.f32 %v264, %v55
    %v272 = vmul.f32 %v265, %v55
    %v273 = vmul.f32 %v264, %v53
    %v274 = vadd.f32 %v158, %v273
    %v275 = vsub.f32 %v270, %v269
    %v276 = vadd.f32 %v271, %v268
    %v277 = vld [vmem:[#allocation5] sm:$0x1]
    %v278 = vadd.f32 %v270, %v269
    %v279 = vmul.f32 %v265, %v54
    %v280 = vadd.f32 %v158, %v279
    %v281 = vsub.f32 %v272, %v267
    %s282 = scalar_lea.vmem [#allocation5], 8
    %v283 = vld [vmem:[%s282] sm:$0x1]
    %v284 = vsub.f32 %v271, %v268
    %v285 = vadd.f32 %v272, %v267
    %v286 = vmul.f32 %v266, %v55
    %v287 = vadd.f32 %v158, %v286
    %s288 = scalar_lea.vmem [#allocation5], 16
    %v289 = vld [vmem:[%s288] sm:$0x1]
    %290 = vst [vmem:[#allocation7] sm:$0x1] %v274
    %s291 = scalar_lea.vmem [#allocation7], 1
    %292 = vst [vmem:[%s291] sm:$0x1] %v275
    %s293 = scalar_lea.vmem [#allocation7], 2
    %294 = vst [vmem:[%s293] sm:$0x1] %v276
    %s295 = scalar_lea.vmem [#allocation7], 3
    %296 = vst [vmem:[%s295] sm:$0x1] %v277
    %s297 = scalar_lea.vmem [#allocation7], 4
    %298 = vst [vmem:[%s297] sm:$0x1] %v278
    %s299 = scalar_lea.vmem [#allocation7], 5
    %300 = vst [vmem:[%s299] sm:$0x1] %v280
    %s301 = scalar_lea.vmem [#allocation7], 6
    %302 = vst [vmem:[%s301] sm:$0x1] %v281
    %s303 = scalar_lea.vmem [#allocation7], 7
    %304 = vst [vmem:[%s303] sm:$0x1] %v283
    %s305 = scalar_lea.vmem [#allocation7], 8
    %306 = vst [vmem:[%s305] sm:$0x1] %v284
    %s307 = scalar_lea.vmem [#allocation7], 9
    %308 = vst [vmem:[%s307] sm:$0x1] %v285
    %s309 = scalar_lea.vmem [#allocation7], 10
    %310 = vst [vmem:[%s309] sm:$0x1] %v287
    %s311 = scalar_lea.vmem [#allocation7], 11
    %312 = vst [vmem:[%s311] sm:$0x1] %v289
    %s313 = scalar_lea.vmem [#allocation2], 1
    %v314 = vld [vmem:[%s313] sm:$0x1]
    %s315 = scalar_lea.vmem [#allocation2], 9
    %v316 = vld [vmem:[%s315] sm:$0x1]
    %s317 = scalar_lea.vmem [#allocation2], 17
    %v318 = vld [vmem:[%s317] sm:$0x1]
    %v319 = vmul.f32 %v314, %v314
    %v320 = vmul.f32 %v316, %v316
    %v321 = vadd.f32 %v319, %v320
    %v322 = vmul.f32 %v318, %v318
    %v323 = vadd.f32 %v321, %v322
    %v324 = vadd.f32 %v323, 1e-12
    %v325 = vrsqrt.pop %v324
    %v326 = vmul.f32 %v324, %v325
    %v327 = vmul.f32 %v314, %v325
    %v328 = vmul.f32 %v316, %v325
    %v329 = vmul.f32 %v318, %v325
    %v330 = vand.u32 2147483647, %v326
    %vm331 = vcmp.le.f32.partialorder %v330, 0.7853982
    %vm332 = vcmp.lt.s32.totalorder %v326, 0
    %v333 = vand.u32 %v326, 2139095040
    %v334 = vshrl.u32 %v333, 23
    %v335 = vsub.s32 %v334, 127
    %v336 = vand.u32 2147483647, %v326
    %v337 = vand.u32 %v336, 8388607
    %v338 = vor.u32 %v337, 8388608
    %v339 = vsub.s32 0, %v338
    %v340 = vadd.s32 %v335, 1
    %vm341 = vcmp.gt.s32.totalorder %v340, 0
    %v342 = vsel %vm341, %v340, 0
    %v343 = vshrl.u32 %v342, 5
    %v344 = vand.u32 %v342, 31
    %v345 = vsub.s32 32, %v344
    %v346 = vshrl.u32 683565275, %v345
    %v347 = vshll.u32 683565275, %v344
    %v348 = vshrl.u32 2475754826, %v345
    %v349 = vor.u32 %v347, %v348
    %v350 = vshll.u32 2475754826, %v344
    %v351 = vshrl.u32 2131351028, %v345
    %v352 = vor.u32 %v350, %v351
    %v353 = vshll.u32 2131351028, %v344
    %v354 = vshrl.u32 2102212464, %v345
    %v355 = vor.u32 %v353, %v354
    %v356 = vshll.u32 2102212464, %v344
    %v357 = vshrl.u32 920167782, %v345
    %v358 = vor.u32 %v356, %v357
    %v359 = vshll.u32 920167782, %v344
    %v360 = vshrl.u32 1326507024, %v345
    %v361 = vor.u32 %v359, %v360
    %vm362 = vcmp.lt.s32.totalorder %v343, 1
    %vm363 = vcmp.lt.s32.totalorder %v343, 2
    %vm364 = vcmp.lt.s32.totalorder %v343, 3
    %vm365 = vcmp.lt.s32.totalorder %v343, 4
    %v366 = vsel %vm362, %v346, %v349
    %v367 = vsel %vm365, %v355, 2102212464
    %v368 = vsel %vm364, %v352, %v367
    %v369 = vsel %vm363, %v366, %v368
    %v370 = vsel %vm362, %v349, %v352
    %v371 = vsel %vm365, %v358, 920167782
    %v372 = vsel %vm364, %v355, %v371
    %v373 = vsel %vm363, %v370, %v372
    %v374 = vsel %vm362, %v352, %v355
    %v375 = vsel %vm365, %v361, 1326507024
    %v376 = vsel %vm364, %v358, %v375
    %v377 = vsel %vm363, %v374, %v376
    %v378 = vshll.u32 %v338, 8
    %v379 = vmul.u32.u64.compose %v378, %v377
    %v380 = vextract.low.u32 %v379
    %v381 = vextract.high.u32 %v379
    %v382 = vmul.u32.u64.compose %v378, %v373
    %v383 = vextract.low.u32 %v382
    %v384 = vextract.high.u32 %v382
    %v385 = vmul.u32 %v378, %v369
    %v386 = vadd.s32 %v381, %v383
    %vm387 = vc.u32 %v381, %v383
    %v388 = vadd.s32 %v384, 1
    %v389 = vsel %vm387, %v388, %v384
    %v390 = vadd.s32 %v385, %v389
    %v391 = vadd.s32 %v390, 536870912
    %v392 = vshrl.u32 %v391, 30
    %v393 = vshll.u32 %v392, 30
    %v394 = vsub.s32 %v390, %v393
    %vm395 = vcmp.lt.s32.totalorder %v394, 0
    %v396 = vsub.s32 0, %v394
    %v397 = vsel %vm395, %v396, %v394
    %v398 = vclz %v397
    %v399 = vsub.s32 %v398, 2
    %vm400 = vcmp.gt.s32.totalorder 0, %v399
    %v401 = vsel %vm400, 0, %v399
    %v402 = vsub.s32 32, %v401
    %v403 = vshll.u32 %v394, %v401
    %v404 = vshrl.u32 %v386, %v402
    %v405 = vor.u32 %v403, %v404
    %v406 = vsub.s32 4294967266, %v401
    %v407 = vadd.s32 %v406, 127
    %v408 = vshll.u32 %v407, 23
    %v409 = vor.u32 4788187, %v408
    %v410 = vand.u32 2147483647, %v409
    %v412 = vcvt.s32.f32 %v405
    %v413 = vmul.f32 %v412, %v410
    %v414 = vxor.u32 %v413, 2147483648
    %v415 = vsel %vm332, %v414, %v413
    %v416 = vsub.s32 4, %v392
    %v417 = vsel %vm332, %v416, %v392
    %v418 = vsel %vm331, %v326, %v415
    %v419 = vsel %vm331, 0, %v417
    %v420 = vcosq.f32.pop %v418
    %v421 = vsinq.f32.pop %v418
    %vm422 = vweird.f32 %v326
    %v423 = vand.u32 %v419, 3
    %vm424 = vcmp.lt.s32.totalorder %v423, 2
    %vm425 = vcmp.eq.s32.totalorder %v423, 0
    %v426 = vxor.u32 %v421, 2147483648
    %v427 = vsel %vm425, %v420, %v426
    %vm428 = vcmp.eq.s32.totalorder %v423, 2
    %v429 = vxor.u32 %v420, 2147483648
    %v430 = vsel %vm428, %v429, %v421
    %v431 = vsel %vm424, %v427, %v430
    %v432 = vsel %vm422, nan, %v431
    %v433 = vand.u32 2147483647, %v326
    %vm434 = vcmp.le.f32.partialorder %v433, 0.7853982
    %vm435 = vcmp.lt.s32.totalorder %v326, 0
    %v436 = vand.u32 %v326, 2139095040
    %v437 = vshrl.u32 %v436, 23
    %v438 = vsub.s32 %v437, 127
    %v439 = vand.u32 2147483647, %v326
    %v440 = vand.u32 %v439, 8388607
    %v441 = vor.u32 %v440, 8388608
    %v442 = vsub.s32 0, %v441
    %v443 = vadd.s32 %v438, 1
    %vm444 = vcmp.gt.s32.totalorder %v443, 0
    %v445 = vsel %vm444, %v443, 0
    %v446 = vshrl.u32 %v445, 5
    %v447 = vand.u32 %v445, 31
    %v448 = vsub.s32 32, %v447
    %v449 = vshrl.u32 683565275, %v448
    %v450 = vshll.u32 683565275, %v447
    %v451 = vshrl.u32 2475754826, %v448
    %v452 = vor.u32 %v450, %v451
    %v453 = vshll.u32 2475754826, %v447
    %v454 = vshrl.u32 2131351028, %v448
    %v455 = vor.u32 %v453, %v454
    %v456 = vshll.u32 2131351028, %v447
    %v457 = vshrl.u32 2102212464, %v448
    %v458 = vor.u32 %v456, %v457
    %v459 = vshll.u32 2102212464, %v447
    %v460 = vshrl.u32 920167782, %v448
    %v461 = vor.u32 %v459, %v460
    %v462 = vshll.u32 920167782, %v447
    %v463 = vshrl.u32 1326507024, %v448
    %v464 = vor.u32 %v462, %v463
    %vm465 = vcmp.lt.s32.totalorder %v446, 1
    %vm466 = vcmp.lt.s32.totalorder %v446, 2
    %vm467 = vcmp.lt.s32.totalorder %v446, 3
    %vm468 = vcmp.lt.s32.totalorder %v446, 4
    %v469 = vsel %vm465, %v449, %v452
    %v470 = vsel %vm468, %v458, 2102212464
    %v471 = vsel %vm467, %v455, %v470
    %v472 = vsel %vm466, %v469, %v471
    %v473 = vsel %vm465, %v452, %v455
    %v474 = vsel %vm468, %v461, 920167782
    %v475 = vsel %vm467, %v458, %v474
    %v476 = vsel %vm466, %v473, %v475
    %v477 = vsel %vm465, %v455, %v458
    %v478 = vsel %vm468, %v464, 1326507024
    %v479 = vsel %vm467, %v461, %v478
    %v480 = vsel %vm466, %v477, %v479
    %v481 = vshll.u32 %v441, 8
    %v482 = vmul.u32.u64.compose %v481, %v480
    %v483 = vextract.low.u32 %v482
    %v484 = vextract.high.u32 %v482
    %v485 = vmul.u32.u64.compose %v481, %v476
    %v486 = vextract.low.u32 %v485
    %v487 = vextract.high.u32 %v485
    %v488 = vmul.u32 %v481, %v472
    %v489 = vadd.s32 %v484, %v486
    %vm490 = vc.u32 %v484, %v486
    %v491 = vadd.s32 %v487, 1
    %v492 = vsel %vm490, %v491, %v487
    %v493 = vadd.s32 %v488, %v492
    %v494 = vadd.s32 %v493, 536870912
    %v495 = vshrl.u32 %v494, 30
    %v496 = vshll.u32 %v495, 30
    %v497 = vsub.s32 %v493, %v496
    %vm498 = vcmp.lt.s32.totalorder %v497, 0
    %v499 = vsub.s32 0, %v497
    %v500 = vsel %vm498, %v499, %v497
    %v501 = vclz %v500
    %v502 = vsub.s32 %v501, 2
    %vm503 = vcmp.gt.s32.totalorder 0, %v502
    %v504 = vsel %vm503, 0, %v502
    %v505 = vsub.s32 32, %v504
    %v506 = vshll.u32 %v497, %v504
    %v507 = vshrl.u32 %v489, %v505
    %v508 = vor.u32 %v506, %v507
    %v509 = vsub.s32 4294967266, %v504
    %v510 = vadd.s32 %v509, 127
    %v511 = vshll.u32 %v510, 23
    %v512 = vor.u32 4788187, %v511
    %v513 = vand.u32 2147483647, %v512
    %v515 = vcvt.s32.f32 %v508
    %v516 = vmul.f32 %v515, %v513
    %v517 = vxor.u32 %v516, 2147483648
    %v518 = vsel %vm435, %v517, %v516
    %v519 = vsub.s32 4, %v495
    %v520 = vsel %vm435, %v519, %v495
    %v521 = vsel %vm434, %v326, %v518
    %v522 = vsel %vm434, 0, %v520
    %v523 = vcosq.f32.pop %v521
    %v524 = vsinq.f32.pop %v521
    %vm525 = vweird.f32 %v326
    %v526 = vadd.s32 %v522, 3
    %v527 = vand.u32 %v526, 3
    %vm528 = vcmp.lt.s32.totalorder %v527, 2
    %vm529 = vcmp.eq.s32.totalorder %v527, 0
    %v530 = vxor.u32 %v524, 2147483648
    %v531 = vsel %vm529, %v523, %v530
    %vm532 = vcmp.eq.s32.totalorder %v527, 2
    %v533 = vxor.u32 %v523, 2147483648
    %v534 = vsel %vm532, %v533, %v524
    %v535 = vsel %vm528, %v531, %v534
    %v536 = vsel %vm525, nan, %v535
    %v537 = vsub.f32 1.0, %v432
    %v538 = vmul.f32 %v537, %v327
    %v539 = vmul.f32 %v537, %v328
    %v540 = vmul.f32 %v537, %v329
    %v541 = vmul.f32 %v536, %v327
    %v542 = vmul.f32 %v536, %v328
    %v543 = vmul.f32 %v536, %v329
    %v544 = vmul.f32 %v538, %v328
    %v545 = vmul.f32 %v538, %v329
    %v546 = vmul.f32 %v539, %v329
    %v547 = vmul.f32 %v538, %v327
    %v548 = vadd.f32 %v432, %v547
    %v549 = vsub.f32 %v544, %v543
    %v550 = vadd.f32 %v545, %v542
    %s551 = scalar_lea.vmem [#allocation5], 1
    %v552 = vld [vmem:[%s551] sm:$0x1]
    %v553 = vadd.f32 %v544, %v543
    %v554 = vmul.f32 %v539, %v328
    %v555 = vadd.f32 %v432, %v554
    %v556 = vsub.f32 %v546, %v541
    %s557 = scalar_lea.vmem [#allocation5], 9
    %v558 = vld [vmem:[%s557] sm:$0x1]
    %v559 = vsub.f32 %v545, %v542
    %v560 = vadd.f32 %v546, %v541
    %v561 = vmul.f32 %v540, %v329
    %v562 = vadd.f32 %v432, %v561
    %s563 = scalar_lea.vmem [#allocation5], 17
    %v564 = vld [vmem:[%s563] sm:$0x1]
    %v565 = vmul.f32 %v274, %v548
    %v566 = vmul.f32 %v275, %v553
    %v567 = vadd.f32 %v565, %v566
    %v568 = vmul.f32 %v276, %v559
    %v569 = vadd.f32 %v567, %v568
    %v570 = vmul.f32 %v274, %v549
    %v571 = vmul.f32 %v275, %v555
    %v572 = vadd.f32 %v570, %v571
    %v573 = vmul.f32 %v276, %v560
    %v574 = vadd.f32 %v572, %v573
    %v575 = vmul.f32 %v274, %v550
    %v576 = vmul.f32 %v275, %v556
    %v577 = vadd.f32 %v575, %v576
    %v578 = vmul.f32 %v276, %v562
    %v579 = vadd.f32 %v577, %v578
    %v580 = vmul.f32 %v274, %v552
    %v581 = vmul.f32 %v275, %v558
    %v582 = vadd.f32 %v580, %v581
    %v583 = vmul.f32 %v276, %v564
    %v584 = vadd.f32 %v582, %v583
    %v585 = vadd.f32 %v584, %v277
    %v586 = vmul.f32 %v278, %v548
    %v587 = vmul.f32 %v280, %v553
    %v588 = vadd.f32 %v586, %v587
    %v589 = vmul.f32 %v281, %v559
    %v590 = vadd.f32 %v588, %v589
    %v591 = vmul.f32 %v278, %v549
    %v592 = vmul.f32 %v280, %v555
    %v593 = vadd.f32 %v591, %v592
    %v594 = vmul.f32 %v281, %v560
    %v595 = vadd.f32 %v593, %v594
    %v596 = vmul.f32 %v278, %v550
    %v597 = vmul.f32 %v280, %v556
    %v598 = vadd.f32 %v596, %v597
    %v599 = vmul.f32 %v281, %v562
    %v600 = vadd.f32 %v598, %v599
    %v601 = vmul.f32 %v278, %v552
    %v602 = vmul.f32 %v280, %v558
    %v603 = vadd.f32 %v601, %v602
    %v604 = vmul.f32 %v281, %v564
    %v605 = vadd.f32 %v603, %v604
    %v606 = vadd.f32 %v605, %v283
    %v607 = vmul.f32 %v284, %v548
    %v608 = vmul.f32 %v285, %v553
    %v609 = vadd.f32 %v607, %v608
    %v610 = vmul.f32 %v287, %v559
    %v611 = vadd.f32 %v609, %v610
    %v612 = vmul.f32 %v284, %v549
    %v613 = vmul.f32 %v285, %v555
    %v614 = vadd.f32 %v612, %v613
    %v615 = vmul.f32 %v287, %v560
    %v616 = vadd.f32 %v614, %v615
    %v617 = vmul.f32 %v284, %v550
    %v618 = vmul.f32 %v285, %v556
    %v619 = vadd.f32 %v617, %v618
    %v620 = vmul.f32 %v287, %v562
    %v621 = vadd.f32 %v619, %v620
    %v622 = vmul.f32 %v284, %v552
    %v623 = vmul.f32 %v285, %v558
    %v624 = vadd.f32 %v622, %v623
    %v625 = vmul.f32 %v287, %v564
    %v626 = vadd.f32 %v624, %v625
    %v627 = vadd.f32 %v626, %v289
    %s628 = scalar_lea.vmem [#allocation7], 12
    %629 = vst [vmem:[%s628] sm:$0x1] %v569
    %s630 = scalar_lea.vmem [#allocation7], 13
    %631 = vst [vmem:[%s630] sm:$0x1] %v574
    %s632 = scalar_lea.vmem [#allocation7], 14
    %633 = vst [vmem:[%s632] sm:$0x1] %v579
    %s634 = scalar_lea.vmem [#allocation7], 15
    %635 = vst [vmem:[%s634] sm:$0x1] %v585
    %s636 = scalar_lea.vmem [#allocation7], 16
    %637 = vst [vmem:[%s636] sm:$0x1] %v590
    %s638 = scalar_lea.vmem [#allocation7], 17
    %639 = vst [vmem:[%s638] sm:$0x1] %v595
    %s640 = scalar_lea.vmem [#allocation7], 18
    %641 = vst [vmem:[%s640] sm:$0x1] %v600
    %s642 = scalar_lea.vmem [#allocation7], 19
    %643 = vst [vmem:[%s642] sm:$0x1] %v606
    %s644 = scalar_lea.vmem [#allocation7], 20
    %645 = vst [vmem:[%s644] sm:$0x1] %v611
    %s646 = scalar_lea.vmem [#allocation7], 21
    %647 = vst [vmem:[%s646] sm:$0x1] %v616
    %s648 = scalar_lea.vmem [#allocation7], 22
    %649 = vst [vmem:[%s648] sm:$0x1] %v621
    %s650 = scalar_lea.vmem [#allocation7], 23
    %651 = vst [vmem:[%s650] sm:$0x1] %v627
    %s652 = scalar_lea.vmem [#allocation2], 2
    %v653 = vld [vmem:[%s652] sm:$0x1]
    %s654 = scalar_lea.vmem [#allocation2], 10
    %v655 = vld [vmem:[%s654] sm:$0x1]
    %s656 = scalar_lea.vmem [#allocation2], 18
    %v657 = vld [vmem:[%s656] sm:$0x1]
    %v658 = vmul.f32 %v653, %v653
    %v659 = vmul.f32 %v655, %v655
    %v660 = vadd.f32 %v658, %v659
    %v661 = vmul.f32 %v657, %v657
    %v662 = vadd.f32 %v660, %v661
    %v663 = vadd.f32 %v662, 1e-12
    %v664 = vrsqrt.pop %v663
    %v665 = vmul.f32 %v663, %v664
    %v666 = vmul.f32 %v653, %v664
    %v667 = vmul.f32 %v655, %v664
    %v668 = vmul.f32 %v657, %v664
    %v669 = vand.u32 2147483647, %v665
    %vm670 = vcmp.le.f32.partialorder %v669, 0.7853982
    %vm671 = vcmp.lt.s32.totalorder %v665, 0
    %v672 = vand.u32 %v665, 2139095040
    %v673 = vshrl.u32 %v672, 23
    %v674 = vsub.s32 %v673, 127
    %v675 = vand.u32 2147483647, %v665
    %v676 = vand.u32 %v675, 8388607
    %v677 = vor.u32 %v676, 8388608
    %v678 = vsub.s32 0, %v677
    %v679 = vadd.s32 %v674, 1
    %vm680 = vcmp.gt.s32.totalorder %v679, 0
    %v681 = vsel %vm680, %v679, 0
    %v682 = vshrl.u32 %v681, 5
    %v683 = vand.u32 %v681, 31
    %v684 = vsub.s32 32, %v683
    %v685 = vshrl.u32 683565275, %v684
    %v686 = vshll.u32 683565275, %v683
    %v687 = vshrl.u32 2475754826, %v684
    %v688 = vor.u32 %v686, %v687
    %v689 = vshll.u32 2475754826, %v683
    %v690 = vshrl.u32 2131351028, %v684
    %v691 = vor.u32 %v689, %v690
    %v692 = vshll.u32 2131351028, %v683
    %v693 = vshrl.u32 2102212464, %v684
    %v694 = vor.u32 %v692, %v693
    %v695 = vshll.u32 2102212464, %v683
    %v696 = vshrl.u32 920167782, %v684
    %v697 = vor.u32 %v695, %v696
    %v698 = vshll.u32 920167782, %v683
    %v699 = vshrl.u32 1326507024, %v684
    %v700 = vor.u32 %v698, %v699
    %vm701 = vcmp.lt.s32.totalorder %v682, 1
    %vm702 = vcmp.lt.s32.totalorder %v682, 2
    %vm703 = vcmp.lt.s32.totalorder %v682, 3
    %vm704 = vcmp.lt.s32.totalorder %v682, 4
    %v705 = vsel %vm701, %v685, %v688
    %v706 = vsel %vm704, %v694, 2102212464
    %v707 = vsel %vm703, %v691, %v706
    %v708 = vsel %vm702, %v705, %v707
    %v709 = vsel %vm701, %v688, %v691
    %v710 = vsel %vm704, %v697, 920167782
    %v711 = vsel %vm703, %v694, %v710
    %v712 = vsel %vm702, %v709, %v711
    %v713 = vsel %vm701, %v691, %v694
    %v714 = vsel %vm704, %v700, 1326507024
    %v715 = vsel %vm703, %v697, %v714
    %v716 = vsel %vm702, %v713, %v715
    %v717 = vshll.u32 %v677, 8
    %v718 = vmul.u32.u64.compose %v717, %v716
    %v719 = vextract.low.u32 %v718
    %v720 = vextract.high.u32 %v718
    %v721 = vmul.u32.u64.compose %v717, %v712
    %v722 = vextract.low.u32 %v721
    %v723 = vextract.high.u32 %v721
    %v724 = vmul.u32 %v717, %v708
    %v725 = vadd.s32 %v720, %v722
    %vm726 = vc.u32 %v720, %v722
    %v727 = vadd.s32 %v723, 1
    %v728 = vsel %vm726, %v727, %v723
    %v729 = vadd.s32 %v724, %v728
    %v730 = vadd.s32 %v729, 536870912
    %v731 = vshrl.u32 %v730, 30
    %v732 = vshll.u32 %v731, 30
    %v733 = vsub.s32 %v729, %v732
    %vm734 = vcmp.lt.s32.totalorder %v733, 0
    %v735 = vsub.s32 0, %v733
    %v736 = vsel %vm734, %v735, %v733
    %v737 = vclz %v736
    %v738 = vsub.s32 %v737, 2
    %vm739 = vcmp.gt.s32.totalorder 0, %v738
    %v740 = vsel %vm739, 0, %v738
    %v741 = vsub.s32 32, %v740
    %v742 = vshll.u32 %v733, %v740
    %v743 = vshrl.u32 %v725, %v741
    %v744 = vor.u32 %v742, %v743
    %v745 = vsub.s32 4294967266, %v740
    %v746 = vadd.s32 %v745, 127
    %v747 = vshll.u32 %v746, 23
    %v748 = vor.u32 4788187, %v747
    %v749 = vand.u32 2147483647, %v748
    %v751 = vcvt.s32.f32 %v744
    %v752 = vmul.f32 %v751, %v749
    %v753 = vxor.u32 %v752, 2147483648
    %v754 = vsel %vm671, %v753, %v752
    %v755 = vsub.s32 4, %v731
    %v756 = vsel %vm671, %v755, %v731
    %v757 = vsel %vm670, %v665, %v754
    %v758 = vsel %vm670, 0, %v756
    %v759 = vcosq.f32.pop %v757
    %v760 = vsinq.f32.pop %v757
    %vm761 = vweird.f32 %v665
    %v762 = vand.u32 %v758, 3
    %vm763 = vcmp.lt.s32.totalorder %v762, 2
    %vm764 = vcmp.eq.s32.totalorder %v762, 0
    %v765 = vxor.u32 %v760, 2147483648
    %v766 = vsel %vm764, %v759, %v765
    %vm767 = vcmp.eq.s32.totalorder %v762, 2
    %v768 = vxor.u32 %v759, 2147483648
    %v769 = vsel %vm767, %v768, %v760
    %v770 = vsel %vm763, %v766, %v769
    %v771 = vsel %vm761, nan, %v770
    %v772 = vand.u32 2147483647, %v665
    %vm773 = vcmp.le.f32.partialorder %v772, 0.7853982
    %vm774 = vcmp.lt.s32.totalorder %v665, 0
    %v775 = vand.u32 %v665, 2139095040
    %v776 = vshrl.u32 %v775, 23
    %v777 = vsub.s32 %v776, 127
    %v778 = vand.u32 2147483647, %v665
    %v779 = vand.u32 %v778, 8388607
    %v780 = vor.u32 %v779, 8388608
    %v781 = vsub.s32 0, %v780
    %v782 = vadd.s32 %v777, 1
    %vm783 = vcmp.gt.s32.totalorder %v782, 0
    %v784 = vsel %vm783, %v782, 0
    %v785 = vshrl.u32 %v784, 5
    %v786 = vand.u32 %v784, 31
    %v787 = vsub.s32 32, %v786
    %v788 = vshrl.u32 683565275, %v787
    %v789 = vshll.u32 683565275, %v786
    %v790 = vshrl.u32 2475754826, %v787
    %v791 = vor.u32 %v789, %v790
    %v792 = vshll.u32 2475754826, %v786
    %v793 = vshrl.u32 2131351028, %v787
    %v794 = vor.u32 %v792, %v793
    %v795 = vshll.u32 2131351028, %v786
    %v796 = vshrl.u32 2102212464, %v787
    %v797 = vor.u32 %v795, %v796
    %v798 = vshll.u32 2102212464, %v786
    %v799 = vshrl.u32 920167782, %v787
    %v800 = vor.u32 %v798, %v799
    %v801 = vshll.u32 920167782, %v786
    %v802 = vshrl.u32 1326507024, %v787
    %v803 = vor.u32 %v801, %v802
    %vm804 = vcmp.lt.s32.totalorder %v785, 1
    %vm805 = vcmp.lt.s32.totalorder %v785, 2
    %vm806 = vcmp.lt.s32.totalorder %v785, 3
    %vm807 = vcmp.lt.s32.totalorder %v785, 4
    %v808 = vsel %vm804, %v788, %v791
    %v809 = vsel %vm807, %v797, 2102212464
    %v810 = vsel %vm806, %v794, %v809
    %v811 = vsel %vm805, %v808, %v810
    %v812 = vsel %vm804, %v791, %v794
    %v813 = vsel %vm807, %v800, 920167782
    %v814 = vsel %vm806, %v797, %v813
    %v815 = vsel %vm805, %v812, %v814
    %v816 = vsel %vm804, %v794, %v797
    %v817 = vsel %vm807, %v803, 1326507024
    %v818 = vsel %vm806, %v800, %v817
    %v819 = vsel %vm805, %v816, %v818
    %v820 = vshll.u32 %v780, 8
    %v821 = vmul.u32.u64.compose %v820, %v819
    %v822 = vextract.low.u32 %v821
    %v823 = vextract.high.u32 %v821
    %v824 = vmul.u32.u64.compose %v820, %v815
    %v825 = vextract.low.u32 %v824
    %v826 = vextract.high.u32 %v824
    %v827 = vmul.u32 %v820, %v811
    %v828 = vadd.s32 %v823, %v825
    %vm829 = vc.u32 %v823, %v825
    %v830 = vadd.s32 %v826, 1
    %v831 = vsel %vm829, %v830, %v826
    %v832 = vadd.s32 %v827, %v831
    %v833 = vadd.s32 %v832, 536870912
    %v834 = vshrl.u32 %v833, 30
    %v835 = vshll.u32 %v834, 30
    %v836 = vsub.s32 %v832, %v835
    %vm837 = vcmp.lt.s32.totalorder %v836, 0
    %v838 = vsub.s32 0, %v836
    %v839 = vsel %vm837, %v838, %v836
    %v840 = vclz %v839
    %v841 = vsub.s32 %v840, 2
    %vm842 = vcmp.gt.s32.totalorder 0, %v841
    %v843 = vsel %vm842, 0, %v841
    %v844 = vsub.s32 32, %v843
    %v845 = vshll.u32 %v836, %v843
    %v846 = vshrl.u32 %v828, %v844
    %v847 = vor.u32 %v845, %v846
    %v848 = vsub.s32 4294967266, %v843
    %v849 = vadd.s32 %v848, 127
    %v850 = vshll.u32 %v849, 23
    %v851 = vor.u32 4788187, %v850
    %v852 = vand.u32 2147483647, %v851
    %v854 = vcvt.s32.f32 %v847
    %v855 = vmul.f32 %v854, %v852
    %v856 = vxor.u32 %v855, 2147483648
    %v857 = vsel %vm774, %v856, %v855
    %v858 = vsub.s32 4, %v834
    %v859 = vsel %vm774, %v858, %v834
    %v860 = vsel %vm773, %v665, %v857
    %v861 = vsel %vm773, 0, %v859
    %v862 = vcosq.f32.pop %v860
    %v863 = vsinq.f32.pop %v860
    %vm864 = vweird.f32 %v665
    %v865 = vadd.s32 %v861, 3
    %v866 = vand.u32 %v865, 3
    %vm867 = vcmp.lt.s32.totalorder %v866, 2
    %vm868 = vcmp.eq.s32.totalorder %v866, 0
    %v869 = vxor.u32 %v863, 2147483648
    %v870 = vsel %vm868, %v862, %v869
    %vm871 = vcmp.eq.s32.totalorder %v866, 2
    %v872 = vxor.u32 %v862, 2147483648
    %v873 = vsel %vm871, %v872, %v863
    %v874 = vsel %vm867, %v870, %v873
    %v875 = vsel %vm864, nan, %v874
    %v876 = vsub.f32 1.0, %v771
    %v877 = vmul.f32 %v876, %v666
    %v878 = vmul.f32 %v876, %v667
    %v879 = vmul.f32 %v876, %v668
    %v880 = vmul.f32 %v875, %v666
    %v881 = vmul.f32 %v875, %v667
    %v882 = vmul.f32 %v875, %v668
    %v883 = vmul.f32 %v877, %v667
    %v884 = vmul.f32 %v877, %v668
    %v885 = vmul.f32 %v878, %v668
    %v886 = vmul.f32 %v877, %v666
    %v887 = vadd.f32 %v771, %v886
    %v888 = vsub.f32 %v883, %v882
    %v889 = vadd.f32 %v884, %v881
    %s890 = scalar_lea.vmem [#allocation5], 2
    %v891 = vld [vmem:[%s890] sm:$0x1]
    %v892 = vadd.f32 %v883, %v882
    %v893 = vmul.f32 %v878, %v667
    %v894 = vadd.f32 %v771, %v893
    %v895 = vsub.f32 %v885, %v880
    %s896 = scalar_lea.vmem [#allocation5], 10
    %v897 = vld [vmem:[%s896] sm:$0x1]
    %v898 = vsub.f32 %v884, %v881
    %v899 = vadd.f32 %v885, %v880
    %v900 = vmul.f32 %v879, %v668
    %v901 = vadd.f32 %v771, %v900
    %s902 = scalar_lea.vmem [#allocation5], 18
    %v903 = vld [vmem:[%s902] sm:$0x1]
    %v904 = vmul.f32 %v569, %v887
    %v905 = vmul.f32 %v574, %v892
    %v906 = vadd.f32 %v904, %v905
    %v907 = vmul.f32 %v579, %v898
    %v908 = vadd.f32 %v906, %v907
    %v909 = vmul.f32 %v569, %v888
    %v910 = vmul.f32 %v574, %v894
    %v911 = vadd.f32 %v909, %v910
    %v912 = vmul.f32 %v579, %v899
    %v913 = vadd.f32 %v911, %v912
    %v914 = vmul.f32 %v569, %v889
    %v915 = vmul.f32 %v574, %v895
    %v916 = vadd.f32 %v914, %v915
    %v917 = vmul.f32 %v579, %v901
    %v918 = vadd.f32 %v916, %v917
    %v919 = vmul.f32 %v569, %v891
    %v920 = vmul.f32 %v574, %v897
    %v921 = vadd.f32 %v919, %v920
    %v922 = vmul.f32 %v579, %v903
    %v923 = vadd.f32 %v921, %v922
    %v924 = vadd.f32 %v923, %v585
    %v925 = vmul.f32 %v590, %v887
    %v926 = vmul.f32 %v595, %v892
    %v927 = vadd.f32 %v925, %v926
    %v928 = vmul.f32 %v600, %v898
    %v929 = vadd.f32 %v927, %v928
    %v930 = vmul.f32 %v590, %v888
    %v931 = vmul.f32 %v595, %v894
    %v932 = vadd.f32 %v930, %v931
    %v933 = vmul.f32 %v600, %v899
    %v934 = vadd.f32 %v932, %v933
    %v935 = vmul.f32 %v590, %v889
    %v936 = vmul.f32 %v595, %v895
    %v937 = vadd.f32 %v935, %v936
    %v938 = vmul.f32 %v600, %v901
    %v939 = vadd.f32 %v937, %v938
    %v940 = vmul.f32 %v590, %v891
    %v941 = vmul.f32 %v595, %v897
    %v942 = vadd.f32 %v940, %v941
    %v943 = vmul.f32 %v600, %v903
    %v944 = vadd.f32 %v942, %v943
    %v945 = vadd.f32 %v944, %v606
    %v946 = vmul.f32 %v611, %v887
    %v947 = vmul.f32 %v616, %v892
    %v948 = vadd.f32 %v946, %v947
    %v949 = vmul.f32 %v621, %v898
    %v950 = vadd.f32 %v948, %v949
    %v951 = vmul.f32 %v611, %v888
    %v952 = vmul.f32 %v616, %v894
    %v953 = vadd.f32 %v951, %v952
    %v954 = vmul.f32 %v621, %v899
    %v955 = vadd.f32 %v953, %v954
    %v956 = vmul.f32 %v611, %v889
    %v957 = vmul.f32 %v616, %v895
    %v958 = vadd.f32 %v956, %v957
    %v959 = vmul.f32 %v621, %v901
    %v960 = vadd.f32 %v958, %v959
    %v961 = vmul.f32 %v611, %v891
    %v962 = vmul.f32 %v616, %v897
    %v963 = vadd.f32 %v961, %v962
    %v964 = vmul.f32 %v621, %v903
    %v965 = vadd.f32 %v963, %v964
    %v966 = vadd.f32 %v965, %v627
    %s967 = scalar_lea.vmem [#allocation7], 24
    %968 = vst [vmem:[%s967] sm:$0x1] %v908
    %s969 = scalar_lea.vmem [#allocation7], 25
    %970 = vst [vmem:[%s969] sm:$0x1] %v913
    %s971 = scalar_lea.vmem [#allocation7], 26
    %972 = vst [vmem:[%s971] sm:$0x1] %v918
    %s973 = scalar_lea.vmem [#allocation7], 27
    %974 = vst [vmem:[%s973] sm:$0x1] %v924
    %s975 = scalar_lea.vmem [#allocation7], 28
    %976 = vst [vmem:[%s975] sm:$0x1] %v929
    %s977 = scalar_lea.vmem [#allocation7], 29
    %978 = vst [vmem:[%s977] sm:$0x1] %v934
    %s979 = scalar_lea.vmem [#allocation7], 30
    %980 = vst [vmem:[%s979] sm:$0x1] %v939
    %s981 = scalar_lea.vmem [#allocation7], 31
    %982 = vst [vmem:[%s981] sm:$0x1] %v945
    %s983 = scalar_lea.vmem [#allocation7], 32
    %984 = vst [vmem:[%s983] sm:$0x1] %v950
    %s985 = scalar_lea.vmem [#allocation7], 33
    %986 = vst [vmem:[%s985] sm:$0x1] %v955
    %s987 = scalar_lea.vmem [#allocation7], 34
    %988 = vst [vmem:[%s987] sm:$0x1] %v960
    %s989 = scalar_lea.vmem [#allocation7], 35
    %990 = vst [vmem:[%s989] sm:$0x1] %v966
    %s991 = scalar_lea.vmem [#allocation2], 3
    %v992 = vld [vmem:[%s991] sm:$0x1]
    %s993 = scalar_lea.vmem [#allocation2], 11
    %v994 = vld [vmem:[%s993] sm:$0x1]
    %s995 = scalar_lea.vmem [#allocation2], 19
    %v996 = vld [vmem:[%s995] sm:$0x1]
    %v997 = vmul.f32 %v992, %v992
    %v998 = vmul.f32 %v994, %v994
    %v999 = vadd.f32 %v997, %v998
    %v1000 = vmul.f32 %v996, %v996
    %v1001 = vadd.f32 %v999, %v1000
    %v1002 = vadd.f32 %v1001, 1e-12
    %v1003 = vrsqrt.pop %v1002
    %v1004 = vmul.f32 %v1002, %v1003
    %v1005 = vmul.f32 %v992, %v1003
    %v1006 = vmul.f32 %v994, %v1003
    %v1007 = vmul.f32 %v996, %v1003
    %v1008 = vand.u32 2147483647, %v1004
    %vm1009 = vcmp.le.f32.partialorder %v1008, 0.7853982
    %vm1010 = vcmp.lt.s32.totalorder %v1004, 0
    %v1011 = vand.u32 %v1004, 2139095040
    %v1012 = vshrl.u32 %v1011, 23
    %v1013 = vsub.s32 %v1012, 127
    %v1014 = vand.u32 2147483647, %v1004
    %v1015 = vand.u32 %v1014, 8388607
    %v1016 = vor.u32 %v1015, 8388608
    %v1017 = vsub.s32 0, %v1016
    %v1018 = vadd.s32 %v1013, 1
    %vm1019 = vcmp.gt.s32.totalorder %v1018, 0
    %v1020 = vsel %vm1019, %v1018, 0
    %v1021 = vshrl.u32 %v1020, 5
    %v1022 = vand.u32 %v1020, 31
    %v1023 = vsub.s32 32, %v1022
    %v1024 = vshrl.u32 683565275, %v1023
    %v1025 = vshll.u32 683565275, %v1022
    %v1026 = vshrl.u32 2475754826, %v1023
    %v1027 = vor.u32 %v1025, %v1026
    %v1028 = vshll.u32 2475754826, %v1022
    %v1029 = vshrl.u32 2131351028, %v1023
    %v1030 = vor.u32 %v1028, %v1029
    %v1031 = vshll.u32 2131351028, %v1022
    %v1032 = vshrl.u32 2102212464, %v1023
    %v1033 = vor.u32 %v1031, %v1032
    %v1034 = vshll.u32 2102212464, %v1022
    %v1035 = vshrl.u32 920167782, %v1023
    %v1036 = vor.u32 %v1034, %v1035
    %v1037 = vshll.u32 920167782, %v1022
    %v1038 = vshrl.u32 1326507024, %v1023
    %v1039 = vor.u32 %v1037, %v1038
    %vm1040 = vcmp.lt.s32.totalorder %v1021, 1
    %vm1041 = vcmp.lt.s32.totalorder %v1021, 2
    %vm1042 = vcmp.lt.s32.totalorder %v1021, 3
    %vm1043 = vcmp.lt.s32.totalorder %v1021, 4
    %v1044 = vsel %vm1040, %v1024, %v1027
    %v1045 = vsel %vm1043, %v1033, 2102212464
    %v1046 = vsel %vm1042, %v1030, %v1045
    %v1047 = vsel %vm1041, %v1044, %v1046
    %v1048 = vsel %vm1040, %v1027, %v1030
    %v1049 = vsel %vm1043, %v1036, 920167782
    %v1050 = vsel %vm1042, %v1033, %v1049
    %v1051 = vsel %vm1041, %v1048, %v1050
    %v1052 = vsel %vm1040, %v1030, %v1033
    %v1053 = vsel %vm1043, %v1039, 1326507024
    %v1054 = vsel %vm1042, %v1036, %v1053
    %v1055 = vsel %vm1041, %v1052, %v1054
    %v1056 = vshll.u32 %v1016, 8
    %v1057 = vmul.u32.u64.compose %v1056, %v1055
    %v1058 = vextract.low.u32 %v1057
    %v1059 = vextract.high.u32 %v1057
    %v1060 = vmul.u32.u64.compose %v1056, %v1051
    %v1061 = vextract.low.u32 %v1060
    %v1062 = vextract.high.u32 %v1060
    %v1063 = vmul.u32 %v1056, %v1047
    %v1064 = vadd.s32 %v1059, %v1061
    %vm1065 = vc.u32 %v1059, %v1061
    %v1066 = vadd.s32 %v1062, 1
    %v1067 = vsel %vm1065, %v1066, %v1062
    %v1068 = vadd.s32 %v1063, %v1067
    %v1069 = vadd.s32 %v1068, 536870912
    %v1070 = vshrl.u32 %v1069, 30
    %v1071 = vshll.u32 %v1070, 30
    %v1072 = vsub.s32 %v1068, %v1071
    %vm1073 = vcmp.lt.s32.totalorder %v1072, 0
    %v1074 = vsub.s32 0, %v1072
    %v1075 = vsel %vm1073, %v1074, %v1072
    %v1076 = vclz %v1075
    %v1077 = vsub.s32 %v1076, 2
    %vm1078 = vcmp.gt.s32.totalorder 0, %v1077
    %v1079 = vsel %vm1078, 0, %v1077
    %v1080 = vsub.s32 32, %v1079
    %v1081 = vshll.u32 %v1072, %v1079
    %v1082 = vshrl.u32 %v1064, %v1080
    %v1083 = vor.u32 %v1081, %v1082
    %v1084 = vsub.s32 4294967266, %v1079
    %v1085 = vadd.s32 %v1084, 127
    %v1086 = vshll.u32 %v1085, 23
    %v1087 = vor.u32 4788187, %v1086
    %v1088 = vand.u32 2147483647, %v1087
    %v1090 = vcvt.s32.f32 %v1083
    %v1091 = vmul.f32 %v1090, %v1088
    %v1092 = vxor.u32 %v1091, 2147483648
    %v1093 = vsel %vm1010, %v1092, %v1091
    %v1094 = vsub.s32 4, %v1070
    %v1095 = vsel %vm1010, %v1094, %v1070
    %v1096 = vsel %vm1009, %v1004, %v1093
    %v1097 = vsel %vm1009, 0, %v1095
    %v1098 = vcosq.f32.pop %v1096
    %v1099 = vsinq.f32.pop %v1096
    %vm1100 = vweird.f32 %v1004
    %v1101 = vand.u32 %v1097, 3
    %vm1102 = vcmp.lt.s32.totalorder %v1101, 2
    %vm1103 = vcmp.eq.s32.totalorder %v1101, 0
    %v1104 = vxor.u32 %v1099, 2147483648
    %v1105 = vsel %vm1103, %v1098, %v1104
    %vm1106 = vcmp.eq.s32.totalorder %v1101, 2
    %v1107 = vxor.u32 %v1098, 2147483648
    %v1108 = vsel %vm1106, %v1107, %v1099
    %v1109 = vsel %vm1102, %v1105, %v1108
    %v1110 = vsel %vm1100, nan, %v1109
    %v1111 = vand.u32 2147483647, %v1004
    %vm1112 = vcmp.le.f32.partialorder %v1111, 0.7853982
    %vm1113 = vcmp.lt.s32.totalorder %v1004, 0
    %v1114 = vand.u32 %v1004, 2139095040
    %v1115 = vshrl.u32 %v1114, 23
    %v1116 = vsub.s32 %v1115, 127
    %v1117 = vand.u32 2147483647, %v1004
    %v1118 = vand.u32 %v1117, 8388607
    %v1119 = vor.u32 %v1118, 8388608
    %v1120 = vsub.s32 0, %v1119
    %v1121 = vadd.s32 %v1116, 1
    %vm1122 = vcmp.gt.s32.totalorder %v1121, 0
    %v1123 = vsel %vm1122, %v1121, 0
    %v1124 = vshrl.u32 %v1123, 5
    %v1125 = vand.u32 %v1123, 31
    %v1126 = vsub.s32 32, %v1125
    %v1127 = vshrl.u32 683565275, %v1126
    %v1128 = vshll.u32 683565275, %v1125
    %v1129 = vshrl.u32 2475754826, %v1126
    %v1130 = vor.u32 %v1128, %v1129
    %v1131 = vshll.u32 2475754826, %v1125
    %v1132 = vshrl.u32 2131351028, %v1126
    %v1133 = vor.u32 %v1131, %v1132
    %v1134 = vshll.u32 2131351028, %v1125
    %v1135 = vshrl.u32 2102212464, %v1126
    %v1136 = vor.u32 %v1134, %v1135
    %v1137 = vshll.u32 2102212464, %v1125
    %v1138 = vshrl.u32 920167782, %v1126
    %v1139 = vor.u32 %v1137, %v1138
    %v1140 = vshll.u32 920167782, %v1125
    %v1141 = vshrl.u32 1326507024, %v1126
    %v1142 = vor.u32 %v1140, %v1141
    %vm1143 = vcmp.lt.s32.totalorder %v1124, 1
    %vm1144 = vcmp.lt.s32.totalorder %v1124, 2
    %vm1145 = vcmp.lt.s32.totalorder %v1124, 3
    %vm1146 = vcmp.lt.s32.totalorder %v1124, 4
    %v1147 = vsel %vm1143, %v1127, %v1130
    %v1148 = vsel %vm1146, %v1136, 2102212464
    %v1149 = vsel %vm1145, %v1133, %v1148
    %v1150 = vsel %vm1144, %v1147, %v1149
    %v1151 = vsel %vm1143, %v1130, %v1133
    %v1152 = vsel %vm1146, %v1139, 920167782
    %v1153 = vsel %vm1145, %v1136, %v1152
    %v1154 = vsel %vm1144, %v1151, %v1153
    %v1155 = vsel %vm1143, %v1133, %v1136
    %v1156 = vsel %vm1146, %v1142, 1326507024
    %v1157 = vsel %vm1145, %v1139, %v1156
    %v1158 = vsel %vm1144, %v1155, %v1157
    %v1159 = vshll.u32 %v1119, 8
    %v1160 = vmul.u32.u64.compose %v1159, %v1158
    %v1161 = vextract.low.u32 %v1160
    %v1162 = vextract.high.u32 %v1160
    %v1163 = vmul.u32.u64.compose %v1159, %v1154
    %v1164 = vextract.low.u32 %v1163
    %v1165 = vextract.high.u32 %v1163
    %v1166 = vmul.u32 %v1159, %v1150
    %v1167 = vadd.s32 %v1162, %v1164
    %vm1168 = vc.u32 %v1162, %v1164
    %v1169 = vadd.s32 %v1165, 1
    %v1170 = vsel %vm1168, %v1169, %v1165
    %v1171 = vadd.s32 %v1166, %v1170
    %v1172 = vadd.s32 %v1171, 536870912
    %v1173 = vshrl.u32 %v1172, 30
    %v1174 = vshll.u32 %v1173, 30
    %v1175 = vsub.s32 %v1171, %v1174
    %vm1176 = vcmp.lt.s32.totalorder %v1175, 0
    %v1177 = vsub.s32 0, %v1175
    %v1178 = vsel %vm1176, %v1177, %v1175
    %v1179 = vclz %v1178
    %v1180 = vsub.s32 %v1179, 2
    %vm1181 = vcmp.gt.s32.totalorder 0, %v1180
    %v1182 = vsel %vm1181, 0, %v1180
    %v1183 = vsub.s32 32, %v1182
    %v1184 = vshll.u32 %v1175, %v1182
    %v1185 = vshrl.u32 %v1167, %v1183
    %v1186 = vor.u32 %v1184, %v1185
    %v1187 = vsub.s32 4294967266, %v1182
    %v1188 = vadd.s32 %v1187, 127
    %v1189 = vshll.u32 %v1188, 23
    %v1190 = vor.u32 4788187, %v1189
    %v1191 = vand.u32 2147483647, %v1190
    %v1193 = vcvt.s32.f32 %v1186
    %v1194 = vmul.f32 %v1193, %v1191
    %v1195 = vxor.u32 %v1194, 2147483648
    %v1196 = vsel %vm1113, %v1195, %v1194
    %v1197 = vsub.s32 4, %v1173
    %v1198 = vsel %vm1113, %v1197, %v1173
    %v1199 = vsel %vm1112, %v1004, %v1196
    %v1200 = vsel %vm1112, 0, %v1198
    %v1201 = vcosq.f32.pop %v1199
    %v1202 = vsinq.f32.pop %v1199
    %vm1203 = vweird.f32 %v1004
    %v1204 = vadd.s32 %v1200, 3
    %v1205 = vand.u32 %v1204, 3
    %vm1206 = vcmp.lt.s32.totalorder %v1205, 2
    %vm1207 = vcmp.eq.s32.totalorder %v1205, 0
    %v1208 = vxor.u32 %v1202, 2147483648
    %v1209 = vsel %vm1207, %v1201, %v1208
    %vm1210 = vcmp.eq.s32.totalorder %v1205, 2
    %v1211 = vxor.u32 %v1201, 2147483648
    %v1212 = vsel %vm1210, %v1211, %v1202
    %v1213 = vsel %vm1206, %v1209, %v1212
    %v1214 = vsel %vm1203, nan, %v1213
    %v1215 = vsub.f32 1.0, %v1110
    %v1216 = vmul.f32 %v1215, %v1005
    %v1217 = vmul.f32 %v1215, %v1006
    %v1218 = vmul.f32 %v1215, %v1007
    %v1219 = vmul.f32 %v1214, %v1005
    %v1220 = vmul.f32 %v1214, %v1006
    %v1221 = vmul.f32 %v1214, %v1007
    %v1222 = vmul.f32 %v1216, %v1006
    %v1223 = vmul.f32 %v1216, %v1007
    %v1224 = vmul.f32 %v1217, %v1007
    %v1225 = vmul.f32 %v1216, %v1005
    %v1226 = vadd.f32 %v1110, %v1225
    %v1227 = vsub.f32 %v1222, %v1221
    %v1228 = vadd.f32 %v1223, %v1220
    %s1229 = scalar_lea.vmem [#allocation5], 3
    %v1230 = vld [vmem:[%s1229] sm:$0x1]
    %v1231 = vadd.f32 %v1222, %v1221
    %v1232 = vmul.f32 %v1217, %v1006
    %v1233 = vadd.f32 %v1110, %v1232
    %v1234 = vsub.f32 %v1224, %v1219
    %s1235 = scalar_lea.vmem [#allocation5], 11
    %v1236 = vld [vmem:[%s1235] sm:$0x1]
    %v1237 = vsub.f32 %v1223, %v1220
    %v1238 = vadd.f32 %v1224, %v1219
    %v1239 = vmul.f32 %v1218, %v1007
    %v1240 = vadd.f32 %v1110, %v1239
    %s1241 = scalar_lea.vmem [#allocation5], 19
    %v1242 = vld [vmem:[%s1241] sm:$0x1]
    %v1243 = vmul.f32 %v908, %v1226
    %v1244 = vmul.f32 %v913, %v1231
    %v1245 = vadd.f32 %v1243, %v1244
    %v1246 = vmul.f32 %v918, %v1237
    %v1247 = vadd.f32 %v1245, %v1246
    %v1248 = vmul.f32 %v908, %v1227
    %v1249 = vmul.f32 %v913, %v1233
    %v1250 = vadd.f32 %v1248, %v1249
    %v1251 = vmul.f32 %v918, %v1238
    %v1252 = vadd.f32 %v1250, %v1251
    %v1253 = vmul.f32 %v908, %v1228
    %v1254 = vmul.f32 %v913, %v1234
    %v1255 = vadd.f32 %v1253, %v1254
    %v1256 = vmul.f32 %v918, %v1240
    %v1257 = vadd.f32 %v1255, %v1256
    %v1258 = vmul.f32 %v908, %v1230
    %v1259 = vmul.f32 %v913, %v1236
    %v1260 = vadd.f32 %v1258, %v1259
    %v1261 = vmul.f32 %v918, %v1242
    %v1262 = vadd.f32 %v1260, %v1261
    %v1263 = vadd.f32 %v1262, %v924
    %v1264 = vmul.f32 %v929, %v1226
    %v1265 = vmul.f32 %v934, %v1231
    %v1266 = vadd.f32 %v1264, %v1265
    %v1267 = vmul.f32 %v939, %v1237
    %v1268 = vadd.f32 %v1266, %v1267
    %v1269 = vmul.f32 %v929, %v1227
    %v1270 = vmul.f32 %v934, %v1233
    %v1271 = vadd.f32 %v1269, %v1270
    %v1272 = vmul.f32 %v939, %v1238
    %v1273 = vadd.f32 %v1271, %v1272
    %v1274 = vmul.f32 %v929, %v1228
    %v1275 = vmul.f32 %v934, %v1234
    %v1276 = vadd.f32 %v1274, %v1275
    %v1277 = vmul.f32 %v939, %v1240
    %v1278 = vadd.f32 %v1276, %v1277
    %v1279 = vmul.f32 %v929, %v1230
    %v1280 = vmul.f32 %v934, %v1236
    %v1281 = vadd.f32 %v1279, %v1280
    %v1282 = vmul.f32 %v939, %v1242
    %v1283 = vadd.f32 %v1281, %v1282
    %v1284 = vadd.f32 %v1283, %v945
    %v1285 = vmul.f32 %v950, %v1226
    %v1286 = vmul.f32 %v955, %v1231
    %v1287 = vadd.f32 %v1285, %v1286
    %v1288 = vmul.f32 %v960, %v1237
    %v1289 = vadd.f32 %v1287, %v1288
    %v1290 = vmul.f32 %v950, %v1227
    %v1291 = vmul.f32 %v955, %v1233
    %v1292 = vadd.f32 %v1290, %v1291
    %v1293 = vmul.f32 %v960, %v1238
    %v1294 = vadd.f32 %v1292, %v1293
    %v1295 = vmul.f32 %v950, %v1228
    %v1296 = vmul.f32 %v955, %v1234
    %v1297 = vadd.f32 %v1295, %v1296
    %v1298 = vmul.f32 %v960, %v1240
    %v1299 = vadd.f32 %v1297, %v1298
    %v1300 = vmul.f32 %v950, %v1230
    %v1301 = vmul.f32 %v955, %v1236
    %v1302 = vadd.f32 %v1300, %v1301
    %v1303 = vmul.f32 %v960, %v1242
    %v1304 = vadd.f32 %v1302, %v1303
    %v1305 = vadd.f32 %v1304, %v966
    %s1306 = scalar_lea.vmem [#allocation7], 36
    %1307 = vst [vmem:[%s1306] sm:$0x1] %v1247
    %s1308 = scalar_lea.vmem [#allocation7], 37
    %1309 = vst [vmem:[%s1308] sm:$0x1] %v1252
    %s1310 = scalar_lea.vmem [#allocation7], 38
    %1311 = vst [vmem:[%s1310] sm:$0x1] %v1257
    %s1312 = scalar_lea.vmem [#allocation7], 39
    %1313 = vst [vmem:[%s1312] sm:$0x1] %v1263
    %s1314 = scalar_lea.vmem [#allocation7], 40
    %1315 = vst [vmem:[%s1314] sm:$0x1] %v1268
    %s1316 = scalar_lea.vmem [#allocation7], 41
    %1317 = vst [vmem:[%s1316] sm:$0x1] %v1273
    %s1318 = scalar_lea.vmem [#allocation7], 42
    %1319 = vst [vmem:[%s1318] sm:$0x1] %v1278
    %s1320 = scalar_lea.vmem [#allocation7], 43
    %1321 = vst [vmem:[%s1320] sm:$0x1] %v1284
    %s1322 = scalar_lea.vmem [#allocation7], 44
    %1323 = vst [vmem:[%s1322] sm:$0x1] %v1289
    %s1324 = scalar_lea.vmem [#allocation7], 45
    %1325 = vst [vmem:[%s1324] sm:$0x1] %v1294
    %s1326 = scalar_lea.vmem [#allocation7], 46
    %1327 = vst [vmem:[%s1326] sm:$0x1] %v1299
    %s1328 = scalar_lea.vmem [#allocation7], 47
    %1329 = vst [vmem:[%s1328] sm:$0x1] %v1305
    %v1330 = vld [vmem:[%s967] sm:$0x1]
    %v1331 = vld [vmem:[%s969] sm:$0x1]
    %v1332 = vld [vmem:[%s971] sm:$0x1]
    %v1333 = vld [vmem:[%s973] sm:$0x1]
    %v1334 = vld [vmem:[%s975] sm:$0x1]
    %v1335 = vld [vmem:[%s977] sm:$0x1]
    %v1336 = vld [vmem:[%s979] sm:$0x1]
    %v1337 = vld [vmem:[%s981] sm:$0x1]
    %v1338 = vld [vmem:[%s983] sm:$0x1]
    %v1339 = vld [vmem:[%s985] sm:$0x1]
    %v1340 = vld [vmem:[%s987] sm:$0x1]
    %v1341 = vld [vmem:[%s989] sm:$0x1]
    %s1342 = scalar_lea.vmem [#allocation2], 4
    %v1343 = vld [vmem:[%s1342] sm:$0x1]
    %s1344 = scalar_lea.vmem [#allocation2], 12
    %v1345 = vld [vmem:[%s1344] sm:$0x1]
    %s1346 = scalar_lea.vmem [#allocation2], 20
    %v1347 = vld [vmem:[%s1346] sm:$0x1]
    %v1348 = vmul.f32 %v1343, %v1343
    %v1349 = vmul.f32 %v1345, %v1345
    %v1350 = vadd.f32 %v1348, %v1349
    %v1351 = vmul.f32 %v1347, %v1347
    %v1352 = vadd.f32 %v1350, %v1351
    %v1353 = vadd.f32 %v1352, 1e-12
    %v1354 = vrsqrt.pop %v1353
    %v1355 = vmul.f32 %v1353, %v1354
    %v1356 = vmul.f32 %v1343, %v1354
    %v1357 = vmul.f32 %v1345, %v1354
    %v1358 = vmul.f32 %v1347, %v1354
    %v1359 = vand.u32 2147483647, %v1355
    %vm1360 = vcmp.le.f32.partialorder %v1359, 0.7853982
    %vm1361 = vcmp.lt.s32.totalorder %v1355, 0
    %v1362 = vand.u32 %v1355, 2139095040
    %v1363 = vshrl.u32 %v1362, 23
    %v1364 = vsub.s32 %v1363, 127
    %v1365 = vand.u32 2147483647, %v1355
    %v1366 = vand.u32 %v1365, 8388607
    %v1367 = vor.u32 %v1366, 8388608
    %v1368 = vsub.s32 0, %v1367
    %v1369 = vadd.s32 %v1364, 1
    %vm1370 = vcmp.gt.s32.totalorder %v1369, 0
    %v1371 = vsel %vm1370, %v1369, 0
    %v1372 = vshrl.u32 %v1371, 5
    %v1373 = vand.u32 %v1371, 31
    %v1374 = vsub.s32 32, %v1373
    %v1375 = vshrl.u32 683565275, %v1374
    %v1376 = vshll.u32 683565275, %v1373
    %v1377 = vshrl.u32 2475754826, %v1374
    %v1378 = vor.u32 %v1376, %v1377
    %v1379 = vshll.u32 2475754826, %v1373
    %v1380 = vshrl.u32 2131351028, %v1374
    %v1381 = vor.u32 %v1379, %v1380
    %v1382 = vshll.u32 2131351028, %v1373
    %v1383 = vshrl.u32 2102212464, %v1374
    %v1384 = vor.u32 %v1382, %v1383
    %v1385 = vshll.u32 2102212464, %v1373
    %v1386 = vshrl.u32 920167782, %v1374
    %v1387 = vor.u32 %v1385, %v1386
    %v1388 = vshll.u32 920167782, %v1373
    %v1389 = vshrl.u32 1326507024, %v1374
    %v1390 = vor.u32 %v1388, %v1389
    %vm1391 = vcmp.lt.s32.totalorder %v1372, 1
    %vm1392 = vcmp.lt.s32.totalorder %v1372, 2
    %vm1393 = vcmp.lt.s32.totalorder %v1372, 3
    %vm1394 = vcmp.lt.s32.totalorder %v1372, 4
    %v1395 = vsel %vm1391, %v1375, %v1378
    %v1396 = vsel %vm1394, %v1384, 2102212464
    %v1397 = vsel %vm1393, %v1381, %v1396
    %v1398 = vsel %vm1392, %v1395, %v1397
    %v1399 = vsel %vm1391, %v1378, %v1381
    %v1400 = vsel %vm1394, %v1387, 920167782
    %v1401 = vsel %vm1393, %v1384, %v1400
    %v1402 = vsel %vm1392, %v1399, %v1401
    %v1403 = vsel %vm1391, %v1381, %v1384
    %v1404 = vsel %vm1394, %v1390, 1326507024
    %v1405 = vsel %vm1393, %v1387, %v1404
    %v1406 = vsel %vm1392, %v1403, %v1405
    %v1407 = vshll.u32 %v1367, 8
    %v1408 = vmul.u32.u64.compose %v1407, %v1406
    %v1409 = vextract.low.u32 %v1408
    %v1410 = vextract.high.u32 %v1408
    %v1411 = vmul.u32.u64.compose %v1407, %v1402
    %v1412 = vextract.low.u32 %v1411
    %v1413 = vextract.high.u32 %v1411
    %v1414 = vmul.u32 %v1407, %v1398
    %v1415 = vadd.s32 %v1410, %v1412
    %vm1416 = vc.u32 %v1410, %v1412
    %v1417 = vadd.s32 %v1413, 1
    %v1418 = vsel %vm1416, %v1417, %v1413
    %v1419 = vadd.s32 %v1414, %v1418
    %v1420 = vadd.s32 %v1419, 536870912
    %v1421 = vshrl.u32 %v1420, 30
    %v1422 = vshll.u32 %v1421, 30
    %v1423 = vsub.s32 %v1419, %v1422
    %vm1424 = vcmp.lt.s32.totalorder %v1423, 0
    %v1425 = vsub.s32 0, %v1423
    %v1426 = vsel %vm1424, %v1425, %v1423
    %v1427 = vclz %v1426
    %v1428 = vsub.s32 %v1427, 2
    %vm1429 = vcmp.gt.s32.totalorder 0, %v1428
    %v1430 = vsel %vm1429, 0, %v1428
    %v1431 = vsub.s32 32, %v1430
    %v1432 = vshll.u32 %v1423, %v1430
    %v1433 = vshrl.u32 %v1415, %v1431
    %v1434 = vor.u32 %v1432, %v1433
    %v1435 = vsub.s32 4294967266, %v1430
    %v1436 = vadd.s32 %v1435, 127
    %v1437 = vshll.u32 %v1436, 23
    %v1438 = vor.u32 4788187, %v1437
    %v1439 = vand.u32 2147483647, %v1438
    %v1441 = vcvt.s32.f32 %v1434
    %v1442 = vmul.f32 %v1441, %v1439
    %v1443 = vxor.u32 %v1442, 2147483648
    %v1444 = vsel %vm1361, %v1443, %v1442
    %v1445 = vsub.s32 4, %v1421
    %v1446 = vsel %vm1361, %v1445, %v1421
    %v1447 = vsel %vm1360, %v1355, %v1444
    %v1448 = vsel %vm1360, 0, %v1446
    %v1449 = vcosq.f32.pop %v1447
    %v1450 = vsinq.f32.pop %v1447
    %vm1451 = vweird.f32 %v1355
    %v1452 = vand.u32 %v1448, 3
    %vm1453 = vcmp.lt.s32.totalorder %v1452, 2
    %vm1454 = vcmp.eq.s32.totalorder %v1452, 0
    %v1455 = vxor.u32 %v1450, 2147483648
    %v1456 = vsel %vm1454, %v1449, %v1455
    %vm1457 = vcmp.eq.s32.totalorder %v1452, 2
    %v1458 = vxor.u32 %v1449, 2147483648
    %v1459 = vsel %vm1457, %v1458, %v1450
    %v1460 = vsel %vm1453, %v1456, %v1459
    %v1461 = vsel %vm1451, nan, %v1460
    %v1462 = vand.u32 2147483647, %v1355
    %vm1463 = vcmp.le.f32.partialorder %v1462, 0.7853982
    %vm1464 = vcmp.lt.s32.totalorder %v1355, 0
    %v1465 = vand.u32 %v1355, 2139095040
    %v1466 = vshrl.u32 %v1465, 23
    %v1467 = vsub.s32 %v1466, 127
    %v1468 = vand.u32 2147483647, %v1355
    %v1469 = vand.u32 %v1468, 8388607
    %v1470 = vor.u32 %v1469, 8388608
    %v1471 = vsub.s32 0, %v1470
    %v1472 = vadd.s32 %v1467, 1
    %vm1473 = vcmp.gt.s32.totalorder %v1472, 0
    %v1474 = vsel %vm1473, %v1472, 0
    %v1475 = vshrl.u32 %v1474, 5
    %v1476 = vand.u32 %v1474, 31
    %v1477 = vsub.s32 32, %v1476
    %v1478 = vshrl.u32 683565275, %v1477
    %v1479 = vshll.u32 683565275, %v1476
    %v1480 = vshrl.u32 2475754826, %v1477
    %v1481 = vor.u32 %v1479, %v1480
    %v1482 = vshll.u32 2475754826, %v1476
    %v1483 = vshrl.u32 2131351028, %v1477
    %v1484 = vor.u32 %v1482, %v1483
    %v1485 = vshll.u32 2131351028, %v1476
    %v1486 = vshrl.u32 2102212464, %v1477
    %v1487 = vor.u32 %v1485, %v1486
    %v1488 = vshll.u32 2102212464, %v1476
    %v1489 = vshrl.u32 920167782, %v1477
    %v1490 = vor.u32 %v1488, %v1489
    %v1491 = vshll.u32 920167782, %v1476
    %v1492 = vshrl.u32 1326507024, %v1477
    %v1493 = vor.u32 %v1491, %v1492
    %vm1494 = vcmp.lt.s32.totalorder %v1475, 1
    %vm1495 = vcmp.lt.s32.totalorder %v1475, 2
    %vm1496 = vcmp.lt.s32.totalorder %v1475, 3
    %vm1497 = vcmp.lt.s32.totalorder %v1475, 4
    %v1498 = vsel %vm1494, %v1478, %v1481
    %v1499 = vsel %vm1497, %v1487, 2102212464
    %v1500 = vsel %vm1496, %v1484, %v1499
    %v1501 = vsel %vm1495, %v1498, %v1500
    %v1502 = vsel %vm1494, %v1481, %v1484
    %v1503 = vsel %vm1497, %v1490, 920167782
    %v1504 = vsel %vm1496, %v1487, %v1503
    %v1505 = vsel %vm1495, %v1502, %v1504
    %v1506 = vsel %vm1494, %v1484, %v1487
    %v1507 = vsel %vm1497, %v1493, 1326507024
    %v1508 = vsel %vm1496, %v1490, %v1507
    %v1509 = vsel %vm1495, %v1506, %v1508
    %v1510 = vshll.u32 %v1470, 8
    %v1511 = vmul.u32.u64.compose %v1510, %v1509
    %v1512 = vextract.low.u32 %v1511
    %v1513 = vextract.high.u32 %v1511
    %v1514 = vmul.u32.u64.compose %v1510, %v1505
    %v1515 = vextract.low.u32 %v1514
    %v1516 = vextract.high.u32 %v1514
    %v1517 = vmul.u32 %v1510, %v1501
    %v1518 = vadd.s32 %v1513, %v1515
    %vm1519 = vc.u32 %v1513, %v1515
    %v1520 = vadd.s32 %v1516, 1
    %v1521 = vsel %vm1519, %v1520, %v1516
    %v1522 = vadd.s32 %v1517, %v1521
    %v1523 = vadd.s32 %v1522, 536870912
    %v1524 = vshrl.u32 %v1523, 30
    %v1525 = vshll.u32 %v1524, 30
    %v1526 = vsub.s32 %v1522, %v1525
    %vm1527 = vcmp.lt.s32.totalorder %v1526, 0
    %v1528 = vsub.s32 0, %v1526
    %v1529 = vsel %vm1527, %v1528, %v1526
    %v1530 = vclz %v1529
    %v1531 = vsub.s32 %v1530, 2
    %vm1532 = vcmp.gt.s32.totalorder 0, %v1531
    %v1533 = vsel %vm1532, 0, %v1531
    %v1534 = vsub.s32 32, %v1533
    %v1535 = vshll.u32 %v1526, %v1533
    %v1536 = vshrl.u32 %v1518, %v1534
    %v1537 = vor.u32 %v1535, %v1536
    %v1538 = vsub.s32 4294967266, %v1533
    %v1539 = vadd.s32 %v1538, 127
    %v1540 = vshll.u32 %v1539, 23
    %v1541 = vor.u32 4788187, %v1540
    %v1542 = vand.u32 2147483647, %v1541
    %v1544 = vcvt.s32.f32 %v1537
    %v1545 = vmul.f32 %v1544, %v1542
    %v1546 = vxor.u32 %v1545, 2147483648
    %v1547 = vsel %vm1464, %v1546, %v1545
    %v1548 = vsub.s32 4, %v1524
    %v1549 = vsel %vm1464, %v1548, %v1524
    %v1550 = vsel %vm1463, %v1355, %v1547
    %v1551 = vsel %vm1463, 0, %v1549
    %v1552 = vcosq.f32.pop %v1550
    %v1553 = vsinq.f32.pop %v1550
    %vm1554 = vweird.f32 %v1355
    %v1555 = vadd.s32 %v1551, 3
    %v1556 = vand.u32 %v1555, 3
    %vm1557 = vcmp.lt.s32.totalorder %v1556, 2
    %vm1558 = vcmp.eq.s32.totalorder %v1556, 0
    %v1559 = vxor.u32 %v1553, 2147483648
    %v1560 = vsel %vm1558, %v1552, %v1559
    %vm1561 = vcmp.eq.s32.totalorder %v1556, 2
    %v1562 = vxor.u32 %v1552, 2147483648
    %v1563 = vsel %vm1561, %v1562, %v1553
    %v1564 = vsel %vm1557, %v1560, %v1563
    %v1565 = vsel %vm1554, nan, %v1564
    %v1566 = vsub.f32 1.0, %v1461
    %v1567 = vmul.f32 %v1566, %v1356
    %v1568 = vmul.f32 %v1566, %v1357
    %v1569 = vmul.f32 %v1566, %v1358
    %v1570 = vmul.f32 %v1565, %v1356
    %v1571 = vmul.f32 %v1565, %v1357
    %v1572 = vmul.f32 %v1565, %v1358
    %v1573 = vmul.f32 %v1567, %v1357
    %v1574 = vmul.f32 %v1567, %v1358
    %v1575 = vmul.f32 %v1568, %v1358
    %v1576 = vmul.f32 %v1567, %v1356
    %v1577 = vadd.f32 %v1461, %v1576
    %v1578 = vsub.f32 %v1573, %v1572
    %v1579 = vadd.f32 %v1574, %v1571
    %s1580 = scalar_lea.vmem [#allocation5], 4
    %v1581 = vld [vmem:[%s1580] sm:$0x1]
    %v1582 = vadd.f32 %v1573, %v1572
    %v1583 = vmul.f32 %v1568, %v1357
    %v1584 = vadd.f32 %v1461, %v1583
    %v1585 = vsub.f32 %v1575, %v1570
    %s1586 = scalar_lea.vmem [#allocation5], 12
    %v1587 = vld [vmem:[%s1586] sm:$0x1]
    %v1588 = vsub.f32 %v1574, %v1571
    %v1589 = vadd.f32 %v1575, %v1570
    %v1590 = vmul.f32 %v1569, %v1358
    %v1591 = vadd.f32 %v1461, %v1590
    %s1592 = scalar_lea.vmem [#allocation5], 20
    %v1593 = vld [vmem:[%s1592] sm:$0x1]
    %v1594 = vmul.f32 %v1330, %v1577
    %v1595 = vmul.f32 %v1331, %v1582
    %v1596 = vadd.f32 %v1594, %v1595
    %v1597 = vmul.f32 %v1332, %v1588
    %v1598 = vadd.f32 %v1596, %v1597
    %v1599 = vmul.f32 %v1330, %v1578
    %v1600 = vmul.f32 %v1331, %v1584
    %v1601 = vadd.f32 %v1599, %v1600
    %v1602 = vmul.f32 %v1332, %v1589
    %v1603 = vadd.f32 %v1601, %v1602
    %v1604 = vmul.f32 %v1330, %v1579
    %v1605 = vmul.f32 %v1331, %v1585
    %v1606 = vadd.f32 %v1604, %v1605
    %v1607 = vmul.f32 %v1332, %v1591
    %v1608 = vadd.f32 %v1606, %v1607
    %v1609 = vmul.f32 %v1330, %v1581
    %v1610 = vmul.f32 %v1331, %v1587
    %v1611 = vadd.f32 %v1609, %v1610
    %v1612 = vmul.f32 %v1332, %v1593
    %v1613 = vadd.f32 %v1611, %v1612
    %v1614 = vadd.f32 %v1613, %v1333
    %v1615 = vmul.f32 %v1334, %v1577
    %v1616 = vmul.f32 %v1335, %v1582
    %v1617 = vadd.f32 %v1615, %v1616
    %v1618 = vmul.f32 %v1336, %v1588
    %v1619 = vadd.f32 %v1617, %v1618
    %v1620 = vmul.f32 %v1334, %v1578
    %v1621 = vmul.f32 %v1335, %v1584
    %v1622 = vadd.f32 %v1620, %v1621
    %v1623 = vmul.f32 %v1336, %v1589
    %v1624 = vadd.f32 %v1622, %v1623
    %v1625 = vmul.f32 %v1334, %v1579
    %v1626 = vmul.f32 %v1335, %v1585
    %v1627 = vadd.f32 %v1625, %v1626
    %v1628 = vmul.f32 %v1336, %v1591
    %v1629 = vadd.f32 %v1627, %v1628
    %v1630 = vmul.f32 %v1334, %v1581
    %v1631 = vmul.f32 %v1335, %v1587
    %v1632 = vadd.f32 %v1630, %v1631
    %v1633 = vmul.f32 %v1336, %v1593
    %v1634 = vadd.f32 %v1632, %v1633
    %v1635 = vadd.f32 %v1634, %v1337
    %v1636 = vmul.f32 %v1338, %v1577
    %v1637 = vmul.f32 %v1339, %v1582
    %v1638 = vadd.f32 %v1636, %v1637
    %v1639 = vmul.f32 %v1340, %v1588
    %v1640 = vadd.f32 %v1638, %v1639
    %v1641 = vmul.f32 %v1338, %v1578
    %v1642 = vmul.f32 %v1339, %v1584
    %v1643 = vadd.f32 %v1641, %v1642
    %v1644 = vmul.f32 %v1340, %v1589
    %v1645 = vadd.f32 %v1643, %v1644
    %v1646 = vmul.f32 %v1338, %v1579
    %v1647 = vmul.f32 %v1339, %v1585
    %v1648 = vadd.f32 %v1646, %v1647
    %v1649 = vmul.f32 %v1340, %v1591
    %v1650 = vadd.f32 %v1648, %v1649
    %v1651 = vmul.f32 %v1338, %v1581
    %v1652 = vmul.f32 %v1339, %v1587
    %v1653 = vadd.f32 %v1651, %v1652
    %v1654 = vmul.f32 %v1340, %v1593
    %v1655 = vadd.f32 %v1653, %v1654
    %v1656 = vadd.f32 %v1655, %v1341
    %s1657 = scalar_lea.vmem [#allocation7], 48
    %1658 = vst [vmem:[%s1657] sm:$0x1] %v1598
    %s1659 = scalar_lea.vmem [#allocation7], 49
    %1660 = vst [vmem:[%s1659] sm:$0x1] %v1603
    %s1661 = scalar_lea.vmem [#allocation7], 50
    %1662 = vst [vmem:[%s1661] sm:$0x1] %v1608
    %s1663 = scalar_lea.vmem [#allocation7], 51
    %1664 = vst [vmem:[%s1663] sm:$0x1] %v1614
    %s1665 = scalar_lea.vmem [#allocation7], 52
    %1666 = vst [vmem:[%s1665] sm:$0x1] %v1619
    %s1667 = scalar_lea.vmem [#allocation7], 53
    %1668 = vst [vmem:[%s1667] sm:$0x1] %v1624
    %s1669 = scalar_lea.vmem [#allocation7], 54
    %1670 = vst [vmem:[%s1669] sm:$0x1] %v1629
    %s1671 = scalar_lea.vmem [#allocation7], 55
    %1672 = vst [vmem:[%s1671] sm:$0x1] %v1635
    %s1673 = scalar_lea.vmem [#allocation7], 56
    %1674 = vst [vmem:[%s1673] sm:$0x1] %v1640
    %s1675 = scalar_lea.vmem [#allocation7], 57
    %1676 = vst [vmem:[%s1675] sm:$0x1] %v1645
    %s1677 = scalar_lea.vmem [#allocation7], 58
    %1678 = vst [vmem:[%s1677] sm:$0x1] %v1650
    %s1679 = scalar_lea.vmem [#allocation7], 59
    %1680 = vst [vmem:[%s1679] sm:$0x1] %v1656
    %v1681 = vld [vmem:[#allocation7] sm:$0x1]
    %v1682 = vld [vmem:[%s291] sm:$0x1]
    %v1683 = vld [vmem:[%s293] sm:$0x1]
    %v1684 = vld [vmem:[%s295] sm:$0x1]
    %v1685 = vld [vmem:[%s297] sm:$0x1]
    %v1686 = vld [vmem:[%s299] sm:$0x1]
    %v1687 = vld [vmem:[%s301] sm:$0x1]
    %v1688 = vld [vmem:[%s303] sm:$0x1]
    %v1689 = vld [vmem:[%s305] sm:$0x1]
    %v1690 = vld [vmem:[%s307] sm:$0x1]
    %v1691 = vld [vmem:[%s309] sm:$0x1]
    %v1692 = vld [vmem:[%s311] sm:$0x1]
    %s1693 = scalar_lea.vmem [#allocation2], 5
    %v1694 = vld [vmem:[%s1693] sm:$0x1]
    %s1695 = scalar_lea.vmem [#allocation2], 13
    %v1696 = vld [vmem:[%s1695] sm:$0x1]
    %s1697 = scalar_lea.vmem [#allocation2], 21
    %v1698 = vld [vmem:[%s1697] sm:$0x1]
    %v1699 = vmul.f32 %v1694, %v1694
    %v1700 = vmul.f32 %v1696, %v1696
    %v1701 = vadd.f32 %v1699, %v1700
    %v1702 = vmul.f32 %v1698, %v1698
    %v1703 = vadd.f32 %v1701, %v1702
    %v1704 = vadd.f32 %v1703, 1e-12
    %v1705 = vrsqrt.pop %v1704
    %v1706 = vmul.f32 %v1704, %v1705
    %v1707 = vmul.f32 %v1694, %v1705
    %v1708 = vmul.f32 %v1696, %v1705
    %v1709 = vmul.f32 %v1698, %v1705
    %v1710 = vand.u32 2147483647, %v1706
    %vm1711 = vcmp.le.f32.partialorder %v1710, 0.7853982
    %vm1712 = vcmp.lt.s32.totalorder %v1706, 0
    %v1713 = vand.u32 %v1706, 2139095040
    %v1714 = vshrl.u32 %v1713, 23
    %v1715 = vsub.s32 %v1714, 127
    %v1716 = vand.u32 2147483647, %v1706
    %v1717 = vand.u32 %v1716, 8388607
    %v1718 = vor.u32 %v1717, 8388608
    %v1719 = vsub.s32 0, %v1718
    %v1720 = vadd.s32 %v1715, 1
    %vm1721 = vcmp.gt.s32.totalorder %v1720, 0
    %v1722 = vsel %vm1721, %v1720, 0
    %v1723 = vshrl.u32 %v1722, 5
    %v1724 = vand.u32 %v1722, 31
    %v1725 = vsub.s32 32, %v1724
    %v1726 = vshrl.u32 683565275, %v1725
    %v1727 = vshll.u32 683565275, %v1724
    %v1728 = vshrl.u32 2475754826, %v1725
    %v1729 = vor.u32 %v1727, %v1728
    %v1730 = vshll.u32 2475754826, %v1724
    %v1731 = vshrl.u32 2131351028, %v1725
    %v1732 = vor.u32 %v1730, %v1731
    %v1733 = vshll.u32 2131351028, %v1724
    %v1734 = vshrl.u32 2102212464, %v1725
    %v1735 = vor.u32 %v1733, %v1734
    %v1736 = vshll.u32 2102212464, %v1724
    %v1737 = vshrl.u32 920167782, %v1725
    %v1738 = vor.u32 %v1736, %v1737
    %v1739 = vshll.u32 920167782, %v1724
    %v1740 = vshrl.u32 1326507024, %v1725
    %v1741 = vor.u32 %v1739, %v1740
    %vm1742 = vcmp.lt.s32.totalorder %v1723, 1
    %vm1743 = vcmp.lt.s32.totalorder %v1723, 2
    %vm1744 = vcmp.lt.s32.totalorder %v1723, 3
    %vm1745 = vcmp.lt.s32.totalorder %v1723, 4
    %v1746 = vsel %vm1742, %v1726, %v1729
    %v1747 = vsel %vm1745, %v1735, 2102212464
    %v1748 = vsel %vm1744, %v1732, %v1747
    %v1749 = vsel %vm1743, %v1746, %v1748
    %v1750 = vsel %vm1742, %v1729, %v1732
    %v1751 = vsel %vm1745, %v1738, 920167782
    %v1752 = vsel %vm1744, %v1735, %v1751
    %v1753 = vsel %vm1743, %v1750, %v1752
    %v1754 = vsel %vm1742, %v1732, %v1735
    %v1755 = vsel %vm1745, %v1741, 1326507024
    %v1756 = vsel %vm1744, %v1738, %v1755
    %v1757 = vsel %vm1743, %v1754, %v1756
    %v1758 = vshll.u32 %v1718, 8
    %v1759 = vmul.u32.u64.compose %v1758, %v1757
    %v1760 = vextract.low.u32 %v1759
    %v1761 = vextract.high.u32 %v1759
    %v1762 = vmul.u32.u64.compose %v1758, %v1753
    %v1763 = vextract.low.u32 %v1762
    %v1764 = vextract.high.u32 %v1762
    %v1765 = vmul.u32 %v1758, %v1749
    %v1766 = vadd.s32 %v1761, %v1763
    %vm1767 = vc.u32 %v1761, %v1763
    %v1768 = vadd.s32 %v1764, 1
    %v1769 = vsel %vm1767, %v1768, %v1764
    %v1770 = vadd.s32 %v1765, %v1769
    %v1771 = vadd.s32 %v1770, 536870912
    %v1772 = vshrl.u32 %v1771, 30
    %v1773 = vshll.u32 %v1772, 30
    %v1774 = vsub.s32 %v1770, %v1773
    %vm1775 = vcmp.lt.s32.totalorder %v1774, 0
    %v1776 = vsub.s32 0, %v1774
    %v1777 = vsel %vm1775, %v1776, %v1774
    %v1778 = vclz %v1777
    %v1779 = vsub.s32 %v1778, 2
    %vm1780 = vcmp.gt.s32.totalorder 0, %v1779
    %v1781 = vsel %vm1780, 0, %v1779
    %v1782 = vsub.s32 32, %v1781
    %v1783 = vshll.u32 %v1774, %v1781
    %v1784 = vshrl.u32 %v1766, %v1782
    %v1785 = vor.u32 %v1783, %v1784
    %v1786 = vsub.s32 4294967266, %v1781
    %v1787 = vadd.s32 %v1786, 127
    %v1788 = vshll.u32 %v1787, 23
    %v1789 = vor.u32 4788187, %v1788
    %v1790 = vand.u32 2147483647, %v1789
    %v1792 = vcvt.s32.f32 %v1785
    %v1793 = vmul.f32 %v1792, %v1790
    %v1794 = vxor.u32 %v1793, 2147483648
    %v1795 = vsel %vm1712, %v1794, %v1793
    %v1796 = vsub.s32 4, %v1772
    %v1797 = vsel %vm1712, %v1796, %v1772
    %v1798 = vsel %vm1711, %v1706, %v1795
    %v1799 = vsel %vm1711, 0, %v1797
    %v1800 = vcosq.f32.pop %v1798
    %v1801 = vsinq.f32.pop %v1798
    %vm1802 = vweird.f32 %v1706
    %v1803 = vand.u32 %v1799, 3
    %vm1804 = vcmp.lt.s32.totalorder %v1803, 2
    %vm1805 = vcmp.eq.s32.totalorder %v1803, 0
    %v1806 = vxor.u32 %v1801, 2147483648
    %v1807 = vsel %vm1805, %v1800, %v1806
    %vm1808 = vcmp.eq.s32.totalorder %v1803, 2
    %v1809 = vxor.u32 %v1800, 2147483648
    %v1810 = vsel %vm1808, %v1809, %v1801
    %v1811 = vsel %vm1804, %v1807, %v1810
    %v1812 = vsel %vm1802, nan, %v1811
    %v1813 = vand.u32 2147483647, %v1706
    %vm1814 = vcmp.le.f32.partialorder %v1813, 0.7853982
    %vm1815 = vcmp.lt.s32.totalorder %v1706, 0
    %v1816 = vand.u32 %v1706, 2139095040
    %v1817 = vshrl.u32 %v1816, 23
    %v1818 = vsub.s32 %v1817, 127
    %v1819 = vand.u32 2147483647, %v1706
    %v1820 = vand.u32 %v1819, 8388607
    %v1821 = vor.u32 %v1820, 8388608
    %v1822 = vsub.s32 0, %v1821
    %v1823 = vadd.s32 %v1818, 1
    %vm1824 = vcmp.gt.s32.totalorder %v1823, 0
    %v1825 = vsel %vm1824, %v1823, 0
    %v1826 = vshrl.u32 %v1825, 5
    %v1827 = vand.u32 %v1825, 31
    %v1828 = vsub.s32 32, %v1827
    %v1829 = vshrl.u32 683565275, %v1828
    %v1830 = vshll.u32 683565275, %v1827
    %v1831 = vshrl.u32 2475754826, %v1828
    %v1832 = vor.u32 %v1830, %v1831
    %v1833 = vshll.u32 2475754826, %v1827
    %v1834 = vshrl.u32 2131351028, %v1828
    %v1835 = vor.u32 %v1833, %v1834
    %v1836 = vshll.u32 2131351028, %v1827
    %v1837 = vshrl.u32 2102212464, %v1828
    %v1838 = vor.u32 %v1836, %v1837
    %v1839 = vshll.u32 2102212464, %v1827
    %v1840 = vshrl.u32 920167782, %v1828
    %v1841 = vor.u32 %v1839, %v1840
    %v1842 = vshll.u32 920167782, %v1827
    %v1843 = vshrl.u32 1326507024, %v1828
    %v1844 = vor.u32 %v1842, %v1843
    %vm1845 = vcmp.lt.s32.totalorder %v1826, 1
    %vm1846 = vcmp.lt.s32.totalorder %v1826, 2
    %vm1847 = vcmp.lt.s32.totalorder %v1826, 3
    %vm1848 = vcmp.lt.s32.totalorder %v1826, 4
    %v1849 = vsel %vm1845, %v1829, %v1832
    %v1850 = vsel %vm1848, %v1838, 2102212464
    %v1851 = vsel %vm1847, %v1835, %v1850
    %v1852 = vsel %vm1846, %v1849, %v1851
    %v1853 = vsel %vm1845, %v1832, %v1835
    %v1854 = vsel %vm1848, %v1841, 920167782
    %v1855 = vsel %vm1847, %v1838, %v1854
    %v1856 = vsel %vm1846, %v1853, %v1855
    %v1857 = vsel %vm1845, %v1835, %v1838
    %v1858 = vsel %vm1848, %v1844, 1326507024
    %v1859 = vsel %vm1847, %v1841, %v1858
    %v1860 = vsel %vm1846, %v1857, %v1859
    %v1861 = vshll.u32 %v1821, 8
    %v1862 = vmul.u32.u64.compose %v1861, %v1860
    %v1863 = vextract.low.u32 %v1862
    %v1864 = vextract.high.u32 %v1862
    %v1865 = vmul.u32.u64.compose %v1861, %v1856
    %v1866 = vextract.low.u32 %v1865
    %v1867 = vextract.high.u32 %v1865
    %v1868 = vmul.u32 %v1861, %v1852
    %v1869 = vadd.s32 %v1864, %v1866
    %vm1870 = vc.u32 %v1864, %v1866
    %v1871 = vadd.s32 %v1867, 1
    %v1872 = vsel %vm1870, %v1871, %v1867
    %v1873 = vadd.s32 %v1868, %v1872
    %v1874 = vadd.s32 %v1873, 536870912
    %v1875 = vshrl.u32 %v1874, 30
    %v1876 = vshll.u32 %v1875, 30
    %v1877 = vsub.s32 %v1873, %v1876
    %vm1878 = vcmp.lt.s32.totalorder %v1877, 0
    %v1879 = vsub.s32 0, %v1877
    %v1880 = vsel %vm1878, %v1879, %v1877
    %v1881 = vclz %v1880
    %v1882 = vsub.s32 %v1881, 2
    %vm1883 = vcmp.gt.s32.totalorder 0, %v1882
    %v1884 = vsel %vm1883, 0, %v1882
    %v1885 = vsub.s32 32, %v1884
    %v1886 = vshll.u32 %v1877, %v1884
    %v1887 = vshrl.u32 %v1869, %v1885
    %v1888 = vor.u32 %v1886, %v1887
    %v1889 = vsub.s32 4294967266, %v1884
    %v1890 = vadd.s32 %v1889, 127
    %v1891 = vshll.u32 %v1890, 23
    %v1892 = vor.u32 4788187, %v1891
    %v1893 = vand.u32 2147483647, %v1892
    %v1895 = vcvt.s32.f32 %v1888
    %v1896 = vmul.f32 %v1895, %v1893
    %v1897 = vxor.u32 %v1896, 2147483648
    %v1898 = vsel %vm1815, %v1897, %v1896
    %v1899 = vsub.s32 4, %v1875
    %v1900 = vsel %vm1815, %v1899, %v1875
    %v1901 = vsel %vm1814, %v1706, %v1898
    %v1902 = vsel %vm1814, 0, %v1900
    %v1903 = vcosq.f32.pop %v1901
    %v1904 = vsinq.f32.pop %v1901
    %vm1905 = vweird.f32 %v1706
    %v1906 = vadd.s32 %v1902, 3
    %v1907 = vand.u32 %v1906, 3
    %vm1908 = vcmp.lt.s32.totalorder %v1907, 2
    %vm1909 = vcmp.eq.s32.totalorder %v1907, 0
    %v1910 = vxor.u32 %v1904, 2147483648
    %v1911 = vsel %vm1909, %v1903, %v1910
    %vm1912 = vcmp.eq.s32.totalorder %v1907, 2
    %v1913 = vxor.u32 %v1903, 2147483648
    %v1914 = vsel %vm1912, %v1913, %v1904
    %v1915 = vsel %vm1908, %v1911, %v1914
    %v1916 = vsel %vm1905, nan, %v1915
    %v1917 = vsub.f32 1.0, %v1812
    %v1918 = vmul.f32 %v1917, %v1707
    %v1919 = vmul.f32 %v1917, %v1708
    %v1920 = vmul.f32 %v1917, %v1709
    %v1921 = vmul.f32 %v1916, %v1707
    %v1922 = vmul.f32 %v1916, %v1708
    %v1923 = vmul.f32 %v1916, %v1709
    %v1924 = vmul.f32 %v1918, %v1708
    %v1925 = vmul.f32 %v1918, %v1709
    %v1926 = vmul.f32 %v1919, %v1709
    %v1927 = vmul.f32 %v1918, %v1707
    %v1928 = vadd.f32 %v1812, %v1927
    %v1929 = vsub.f32 %v1924, %v1923
    %v1930 = vadd.f32 %v1925, %v1922
    %s1931 = scalar_lea.vmem [#allocation5], 5
    %v1932 = vld [vmem:[%s1931] sm:$0x1]
    %v1933 = vadd.f32 %v1924, %v1923
    %v1934 = vmul.f32 %v1919, %v1708
    %v1935 = vadd.f32 %v1812, %v1934
    %v1936 = vsub.f32 %v1926, %v1921
    %s1937 = scalar_lea.vmem [#allocation5], 13
    %v1938 = vld [vmem:[%s1937] sm:$0x1]
    %v1939 = vsub.f32 %v1925, %v1922
    %v1940 = vadd.f32 %v1926, %v1921
    %v1941 = vmul.f32 %v1920, %v1709
    %v1942 = vadd.f32 %v1812, %v1941
    %s1943 = scalar_lea.vmem [#allocation5], 21
    %v1944 = vld [vmem:[%s1943] sm:$0x1]
    %v1945 = vmul.f32 %v1681, %v1928
    %v1946 = vmul.f32 %v1682, %v1933
    %v1947 = vadd.f32 %v1945, %v1946
    %v1948 = vmul.f32 %v1683, %v1939
    %v1949 = vadd.f32 %v1947, %v1948
    %v1950 = vmul.f32 %v1681, %v1929
    %v1951 = vmul.f32 %v1682, %v1935
    %v1952 = vadd.f32 %v1950, %v1951
    %v1953 = vmul.f32 %v1683, %v1940
    %v1954 = vadd.f32 %v1952, %v1953
    %v1955 = vmul.f32 %v1681, %v1930
    %v1956 = vmul.f32 %v1682, %v1936
    %v1957 = vadd.f32 %v1955, %v1956
    %v1958 = vmul.f32 %v1683, %v1942
    %v1959 = vadd.f32 %v1957, %v1958
    %v1960 = vmul.f32 %v1681, %v1932
    %v1961 = vmul.f32 %v1682, %v1938
    %v1962 = vadd.f32 %v1960, %v1961
    %v1963 = vmul.f32 %v1683, %v1944
    %v1964 = vadd.f32 %v1962, %v1963
    %v1965 = vadd.f32 %v1964, %v1684
    %v1966 = vmul.f32 %v1685, %v1928
    %v1967 = vmul.f32 %v1686, %v1933
    %v1968 = vadd.f32 %v1966, %v1967
    %v1969 = vmul.f32 %v1687, %v1939
    %v1970 = vadd.f32 %v1968, %v1969
    %v1971 = vmul.f32 %v1685, %v1929
    %v1972 = vmul.f32 %v1686, %v1935
    %v1973 = vadd.f32 %v1971, %v1972
    %v1974 = vmul.f32 %v1687, %v1940
    %v1975 = vadd.f32 %v1973, %v1974
    %v1976 = vmul.f32 %v1685, %v1930
    %v1977 = vmul.f32 %v1686, %v1936
    %v1978 = vadd.f32 %v1976, %v1977
    %v1979 = vmul.f32 %v1687, %v1942
    %v1980 = vadd.f32 %v1978, %v1979
    %v1981 = vmul.f32 %v1685, %v1932
    %v1982 = vmul.f32 %v1686, %v1938
    %v1983 = vadd.f32 %v1981, %v1982
    %v1984 = vmul.f32 %v1687, %v1944
    %v1985 = vadd.f32 %v1983, %v1984
    %v1986 = vadd.f32 %v1985, %v1688
    %v1987 = vmul.f32 %v1689, %v1928
    %v1988 = vmul.f32 %v1690, %v1933
    %v1989 = vadd.f32 %v1987, %v1988
    %v1990 = vmul.f32 %v1691, %v1939
    %v1991 = vadd.f32 %v1989, %v1990
    %v1992 = vmul.f32 %v1689, %v1929
    %v1993 = vmul.f32 %v1690, %v1935
    %v1994 = vadd.f32 %v1992, %v1993
    %v1995 = vmul.f32 %v1691, %v1940
    %v1996 = vadd.f32 %v1994, %v1995
    %v1997 = vmul.f32 %v1689, %v1930
    %v1998 = vmul.f32 %v1690, %v1936
    %v1999 = vadd.f32 %v1997, %v1998
    %v2000 = vmul.f32 %v1691, %v1942
    %v2001 = vadd.f32 %v1999, %v2000
    %v2002 = vmul.f32 %v1689, %v1932
    %v2003 = vmul.f32 %v1690, %v1938
    %v2004 = vadd.f32 %v2002, %v2003
    %v2005 = vmul.f32 %v1691, %v1944
    %v2006 = vadd.f32 %v2004, %v2005
    %v2007 = vadd.f32 %v2006, %v1692
    %s2008 = scalar_lea.vmem [#allocation7], 60
    %2009 = vst [vmem:[%s2008] sm:$0x1] %v1949
    %s2010 = scalar_lea.vmem [#allocation7], 61
    %2011 = vst [vmem:[%s2010] sm:$0x1] %v1954
    %s2012 = scalar_lea.vmem [#allocation7], 62
    %2013 = vst [vmem:[%s2012] sm:$0x1] %v1959
    %s2014 = scalar_lea.vmem [#allocation7], 63
    %2015 = vst [vmem:[%s2014] sm:$0x1] %v1965
    %s2016 = scalar_lea.vmem [#allocation7], 64
    %2017 = vst [vmem:[%s2016] sm:$0x1] %v1970
    %s2018 = scalar_lea.vmem [#allocation7], 65
    %2019 = vst [vmem:[%s2018] sm:$0x1] %v1975
    %s2020 = scalar_lea.vmem [#allocation7], 66
    %2021 = vst [vmem:[%s2020] sm:$0x1] %v1980
    %s2022 = scalar_lea.vmem [#allocation7], 67
    %2023 = vst [vmem:[%s2022] sm:$0x1] %v1986
    %s2024 = scalar_lea.vmem [#allocation7], 68
    %2025 = vst [vmem:[%s2024] sm:$0x1] %v1991
    %s2026 = scalar_lea.vmem [#allocation7], 69
    %2027 = vst [vmem:[%s2026] sm:$0x1] %v1996
    %s2028 = scalar_lea.vmem [#allocation7], 70
    %2029 = vst [vmem:[%s2028] sm:$0x1] %v2001
    %s2030 = scalar_lea.vmem [#allocation7], 71
    %2031 = vst [vmem:[%s2030] sm:$0x1] %v2007
    %s2032 = scalar_lea.vmem [#allocation2], 6
    %v2033 = vld [vmem:[%s2032] sm:$0x1]
    %s2034 = scalar_lea.vmem [#allocation2], 14
    %v2035 = vld [vmem:[%s2034] sm:$0x1]
    %s2036 = scalar_lea.vmem [#allocation2], 22
    %v2037 = vld [vmem:[%s2036] sm:$0x1]
    %v2038 = vmul.f32 %v2033, %v2033
    %v2039 = vmul.f32 %v2035, %v2035
    %v2040 = vadd.f32 %v2038, %v2039
    %v2041 = vmul.f32 %v2037, %v2037
    %v2042 = vadd.f32 %v2040, %v2041
    %v2043 = vadd.f32 %v2042, 1e-12
    %v2044 = vrsqrt.pop %v2043
    %v2045 = vmul.f32 %v2043, %v2044
    %v2046 = vmul.f32 %v2033, %v2044
    %v2047 = vmul.f32 %v2035, %v2044
    %v2048 = vmul.f32 %v2037, %v2044
    %v2049 = vand.u32 2147483647, %v2045
    %vm2050 = vcmp.le.f32.partialorder %v2049, 0.7853982
    %vm2051 = vcmp.lt.s32.totalorder %v2045, 0
    %v2052 = vand.u32 %v2045, 2139095040
    %v2053 = vshrl.u32 %v2052, 23
    %v2054 = vsub.s32 %v2053, 127
    %v2055 = vand.u32 2147483647, %v2045
    %v2056 = vand.u32 %v2055, 8388607
    %v2057 = vor.u32 %v2056, 8388608
    %v2058 = vsub.s32 0, %v2057
    %v2059 = vadd.s32 %v2054, 1
    %vm2060 = vcmp.gt.s32.totalorder %v2059, 0
    %v2061 = vsel %vm2060, %v2059, 0
    %v2062 = vshrl.u32 %v2061, 5
    %v2063 = vand.u32 %v2061, 31
    %v2064 = vsub.s32 32, %v2063
    %v2065 = vshrl.u32 683565275, %v2064
    %v2066 = vshll.u32 683565275, %v2063
    %v2067 = vshrl.u32 2475754826, %v2064
    %v2068 = vor.u32 %v2066, %v2067
    %v2069 = vshll.u32 2475754826, %v2063
    %v2070 = vshrl.u32 2131351028, %v2064
    %v2071 = vor.u32 %v2069, %v2070
    %v2072 = vshll.u32 2131351028, %v2063
    %v2073 = vshrl.u32 2102212464, %v2064
    %v2074 = vor.u32 %v2072, %v2073
    %v2075 = vshll.u32 2102212464, %v2063
    %v2076 = vshrl.u32 920167782, %v2064
    %v2077 = vor.u32 %v2075, %v2076
    %v2078 = vshll.u32 920167782, %v2063
    %v2079 = vshrl.u32 1326507024, %v2064
    %v2080 = vor.u32 %v2078, %v2079
    %vm2081 = vcmp.lt.s32.totalorder %v2062, 1
    %vm2082 = vcmp.lt.s32.totalorder %v2062, 2
    %vm2083 = vcmp.lt.s32.totalorder %v2062, 3
    %vm2084 = vcmp.lt.s32.totalorder %v2062, 4
    %v2085 = vsel %vm2081, %v2065, %v2068
    %v2086 = vsel %vm2084, %v2074, 2102212464
    %v2087 = vsel %vm2083, %v2071, %v2086
    %v2088 = vsel %vm2082, %v2085, %v2087
    %v2089 = vsel %vm2081, %v2068, %v2071
    %v2090 = vsel %vm2084, %v2077, 920167782
    %v2091 = vsel %vm2083, %v2074, %v2090
    %v2092 = vsel %vm2082, %v2089, %v2091
    %v2093 = vsel %vm2081, %v2071, %v2074
    %v2094 = vsel %vm2084, %v2080, 1326507024
    %v2095 = vsel %vm2083, %v2077, %v2094
    %v2096 = vsel %vm2082, %v2093, %v2095
    %v2097 = vshll.u32 %v2057, 8
    %v2098 = vmul.u32.u64.compose %v2097, %v2096
    %v2099 = vextract.low.u32 %v2098
    %v2100 = vextract.high.u32 %v2098
    %v2101 = vmul.u32.u64.compose %v2097, %v2092
    %v2102 = vextract.low.u32 %v2101
    %v2103 = vextract.high.u32 %v2101
    %v2104 = vmul.u32 %v2097, %v2088
    %v2105 = vadd.s32 %v2100, %v2102
    %vm2106 = vc.u32 %v2100, %v2102
    %v2107 = vadd.s32 %v2103, 1
    %v2108 = vsel %vm2106, %v2107, %v2103
    %v2109 = vadd.s32 %v2104, %v2108
    %v2110 = vadd.s32 %v2109, 536870912
    %v2111 = vshrl.u32 %v2110, 30
    %v2112 = vshll.u32 %v2111, 30
    %v2113 = vsub.s32 %v2109, %v2112
    %vm2114 = vcmp.lt.s32.totalorder %v2113, 0
    %v2115 = vsub.s32 0, %v2113
    %v2116 = vsel %vm2114, %v2115, %v2113
    %v2117 = vclz %v2116
    %v2118 = vsub.s32 %v2117, 2
    %vm2119 = vcmp.gt.s32.totalorder 0, %v2118
    %v2120 = vsel %vm2119, 0, %v2118
    %v2121 = vsub.s32 32, %v2120
    %v2122 = vshll.u32 %v2113, %v2120
    %v2123 = vshrl.u32 %v2105, %v2121
    %v2124 = vor.u32 %v2122, %v2123
    %v2125 = vsub.s32 4294967266, %v2120
    %v2126 = vadd.s32 %v2125, 127
    %v2127 = vshll.u32 %v2126, 23
    %v2128 = vor.u32 4788187, %v2127
    %v2129 = vand.u32 2147483647, %v2128
    %v2131 = vcvt.s32.f32 %v2124
    %v2132 = vmul.f32 %v2131, %v2129
    %v2133 = vxor.u32 %v2132, 2147483648
    %v2134 = vsel %vm2051, %v2133, %v2132
    %v2135 = vsub.s32 4, %v2111
    %v2136 = vsel %vm2051, %v2135, %v2111
    %v2137 = vsel %vm2050, %v2045, %v2134
    %v2138 = vsel %vm2050, 0, %v2136
    %v2139 = vcosq.f32.pop %v2137
    %v2140 = vsinq.f32.pop %v2137
    %vm2141 = vweird.f32 %v2045
    %v2142 = vand.u32 %v2138, 3
    %vm2143 = vcmp.lt.s32.totalorder %v2142, 2
    %vm2144 = vcmp.eq.s32.totalorder %v2142, 0
    %v2145 = vxor.u32 %v2140, 2147483648
    %v2146 = vsel %vm2144, %v2139, %v2145
    %vm2147 = vcmp.eq.s32.totalorder %v2142, 2
    %v2148 = vxor.u32 %v2139, 2147483648
    %v2149 = vsel %vm2147, %v2148, %v2140
    %v2150 = vsel %vm2143, %v2146, %v2149
    %v2151 = vsel %vm2141, nan, %v2150
    %v2152 = vand.u32 2147483647, %v2045
    %vm2153 = vcmp.le.f32.partialorder %v2152, 0.7853982
    %vm2154 = vcmp.lt.s32.totalorder %v2045, 0
    %v2155 = vand.u32 %v2045, 2139095040
    %v2156 = vshrl.u32 %v2155, 23
    %v2157 = vsub.s32 %v2156, 127
    %v2158 = vand.u32 2147483647, %v2045
    %v2159 = vand.u32 %v2158, 8388607
    %v2160 = vor.u32 %v2159, 8388608
    %v2161 = vsub.s32 0, %v2160
    %v2162 = vadd.s32 %v2157, 1
    %vm2163 = vcmp.gt.s32.totalorder %v2162, 0
    %v2164 = vsel %vm2163, %v2162, 0
    %v2165 = vshrl.u32 %v2164, 5
    %v2166 = vand.u32 %v2164, 31
    %v2167 = vsub.s32 32, %v2166
    %v2168 = vshrl.u32 683565275, %v2167
    %v2169 = vshll.u32 683565275, %v2166
    %v2170 = vshrl.u32 2475754826, %v2167
    %v2171 = vor.u32 %v2169, %v2170
    %v2172 = vshll.u32 2475754826, %v2166
    %v2173 = vshrl.u32 2131351028, %v2167
    %v2174 = vor.u32 %v2172, %v2173
    %v2175 = vshll.u32 2131351028, %v2166
    %v2176 = vshrl.u32 2102212464, %v2167
    %v2177 = vor.u32 %v2175, %v2176
    %v2178 = vshll.u32 2102212464, %v2166
    %v2179 = vshrl.u32 920167782, %v2167
    %v2180 = vor.u32 %v2178, %v2179
    %v2181 = vshll.u32 920167782, %v2166
    %v2182 = vshrl.u32 1326507024, %v2167
    %v2183 = vor.u32 %v2181, %v2182
    %vm2184 = vcmp.lt.s32.totalorder %v2165, 1
    %vm2185 = vcmp.lt.s32.totalorder %v2165, 2
    %vm2186 = vcmp.lt.s32.totalorder %v2165, 3
    %vm2187 = vcmp.lt.s32.totalorder %v2165, 4
    %v2188 = vsel %vm2184, %v2168, %v2171
    %v2189 = vsel %vm2187, %v2177, 2102212464
    %v2190 = vsel %vm2186, %v2174, %v2189
    %v2191 = vsel %vm2185, %v2188, %v2190
    %v2192 = vsel %vm2184, %v2171, %v2174
    %v2193 = vsel %vm2187, %v2180, 920167782
    %v2194 = vsel %vm2186, %v2177, %v2193
    %v2195 = vsel %vm2185, %v2192, %v2194
    %v2196 = vsel %vm2184, %v2174, %v2177
    %v2197 = vsel %vm2187, %v2183, 1326507024
    %v2198 = vsel %vm2186, %v2180, %v2197
    %v2199 = vsel %vm2185, %v2196, %v2198
    %v2200 = vshll.u32 %v2160, 8
    %v2201 = vmul.u32.u64.compose %v2200, %v2199
    %v2202 = vextract.low.u32 %v2201
    %v2203 = vextract.high.u32 %v2201
    %v2204 = vmul.u32.u64.compose %v2200, %v2195
    %v2205 = vextract.low.u32 %v2204
    %v2206 = vextract.high.u32 %v2204
    %v2207 = vmul.u32 %v2200, %v2191
    %v2208 = vadd.s32 %v2203, %v2205
    %vm2209 = vc.u32 %v2203, %v2205
    %v2210 = vadd.s32 %v2206, 1
    %v2211 = vsel %vm2209, %v2210, %v2206
    %v2212 = vadd.s32 %v2207, %v2211
    %v2213 = vadd.s32 %v2212, 536870912
    %v2214 = vshrl.u32 %v2213, 30
    %v2215 = vshll.u32 %v2214, 30
    %v2216 = vsub.s32 %v2212, %v2215
    %vm2217 = vcmp.lt.s32.totalorder %v2216, 0
    %v2218 = vsub.s32 0, %v2216
    %v2219 = vsel %vm2217, %v2218, %v2216
    %v2220 = vclz %v2219
    %v2221 = vsub.s32 %v2220, 2
    %vm2222 = vcmp.gt.s32.totalorder 0, %v2221
    %v2223 = vsel %vm2222, 0, %v2221
    %v2224 = vsub.s32 32, %v2223
    %v2225 = vshll.u32 %v2216, %v2223
    %v2226 = vshrl.u32 %v2208, %v2224
    %v2227 = vor.u32 %v2225, %v2226
    %v2228 = vsub.s32 4294967266, %v2223
    %v2229 = vadd.s32 %v2228, 127
    %v2230 = vshll.u32 %v2229, 23
    %v2231 = vor.u32 4788187, %v2230
    %v2232 = vand.u32 2147483647, %v2231
    %v2234 = vcvt.s32.f32 %v2227
    %v2235 = vmul.f32 %v2234, %v2232
    %v2236 = vxor.u32 %v2235, 2147483648
    %v2237 = vsel %vm2154, %v2236, %v2235
    %v2238 = vsub.s32 4, %v2214
    %v2239 = vsel %vm2154, %v2238, %v2214
    %v2240 = vsel %vm2153, %v2045, %v2237
    %v2241 = vsel %vm2153, 0, %v2239
    %v2242 = vcosq.f32.pop %v2240
    %v2243 = vsinq.f32.pop %v2240
    %vm2244 = vweird.f32 %v2045
    %v2245 = vadd.s32 %v2241, 3
    %v2246 = vand.u32 %v2245, 3
    %vm2247 = vcmp.lt.s32.totalorder %v2246, 2
    %vm2248 = vcmp.eq.s32.totalorder %v2246, 0
    %v2249 = vxor.u32 %v2243, 2147483648
    %v2250 = vsel %vm2248, %v2242, %v2249
    %vm2251 = vcmp.eq.s32.totalorder %v2246, 2
    %v2252 = vxor.u32 %v2242, 2147483648
    %v2253 = vsel %vm2251, %v2252, %v2243
    %v2254 = vsel %vm2247, %v2250, %v2253
    %v2255 = vsel %vm2244, nan, %v2254
    %v2256 = vsub.f32 1.0, %v2151
    %v2257 = vmul.f32 %v2256, %v2046
    %v2258 = vmul.f32 %v2256, %v2047
    %v2259 = vmul.f32 %v2256, %v2048
    %v2260 = vmul.f32 %v2255, %v2046
    %v2261 = vmul.f32 %v2255, %v2047
    %v2262 = vmul.f32 %v2255, %v2048
    %v2263 = vmul.f32 %v2257, %v2047
    %v2264 = vmul.f32 %v2257, %v2048
    %v2265 = vmul.f32 %v2258, %v2048
    %v2266 = vmul.f32 %v2257, %v2046
    %v2267 = vadd.f32 %v2151, %v2266
    %v2268 = vsub.f32 %v2263, %v2262
    %v2269 = vadd.f32 %v2264, %v2261
    %s2270 = scalar_lea.vmem [#allocation5], 6
    %v2271 = vld [vmem:[%s2270] sm:$0x1]
    %v2272 = vadd.f32 %v2263, %v2262
    %v2273 = vmul.f32 %v2258, %v2047
    %v2274 = vadd.f32 %v2151, %v2273
    %v2275 = vsub.f32 %v2265, %v2260
    %s2276 = scalar_lea.vmem [#allocation5], 14
    %v2277 = vld [vmem:[%s2276] sm:$0x1]
    %v2278 = vsub.f32 %v2264, %v2261
    %v2279 = vadd.f32 %v2265, %v2260
    %v2280 = vmul.f32 %v2259, %v2048
    %v2281 = vadd.f32 %v2151, %v2280
    %s2282 = scalar_lea.vmem [#allocation5], 22
    %v2283 = vld [vmem:[%s2282] sm:$0x1]
    %v2284 = vmul.f32 %v1949, %v2267
    %v2285 = vmul.f32 %v1954, %v2272
    %v2286 = vadd.f32 %v2284, %v2285
    %v2287 = vmul.f32 %v1959, %v2278
    %v2288 = vadd.f32 %v2286, %v2287
    %v2289 = vmul.f32 %v1949, %v2268
    %v2290 = vmul.f32 %v1954, %v2274
    %v2291 = vadd.f32 %v2289, %v2290
    %v2292 = vmul.f32 %v1959, %v2279
    %v2293 = vadd.f32 %v2291, %v2292
    %v2294 = vmul.f32 %v1949, %v2269
    %v2295 = vmul.f32 %v1954, %v2275
    %v2296 = vadd.f32 %v2294, %v2295
    %v2297 = vmul.f32 %v1959, %v2281
    %v2298 = vadd.f32 %v2296, %v2297
    %v2299 = vmul.f32 %v1949, %v2271
    %v2300 = vmul.f32 %v1954, %v2277
    %v2301 = vadd.f32 %v2299, %v2300
    %v2302 = vmul.f32 %v1959, %v2283
    %v2303 = vadd.f32 %v2301, %v2302
    %v2304 = vadd.f32 %v2303, %v1965
    %v2305 = vmul.f32 %v1970, %v2267
    %v2306 = vmul.f32 %v1975, %v2272
    %v2307 = vadd.f32 %v2305, %v2306
    %v2308 = vmul.f32 %v1980, %v2278
    %v2309 = vadd.f32 %v2307, %v2308
    %v2310 = vmul.f32 %v1970, %v2268
    %v2311 = vmul.f32 %v1975, %v2274
    %v2312 = vadd.f32 %v2310, %v2311
    %v2313 = vmul.f32 %v1980, %v2279
    %v2314 = vadd.f32 %v2312, %v2313
    %v2315 = vmul.f32 %v1970, %v2269
    %v2316 = vmul.f32 %v1975, %v2275
    %v2317 = vadd.f32 %v2315, %v2316
    %v2318 = vmul.f32 %v1980, %v2281
    %v2319 = vadd.f32 %v2317, %v2318
    %v2320 = vmul.f32 %v1970, %v2271
    %v2321 = vmul.f32 %v1975, %v2277
    %v2322 = vadd.f32 %v2320, %v2321
    %v2323 = vmul.f32 %v1980, %v2283
    %v2324 = vadd.f32 %v2322, %v2323
    %v2325 = vadd.f32 %v2324, %v1986
    %v2326 = vmul.f32 %v1991, %v2267
    %v2327 = vmul.f32 %v1996, %v2272
    %v2328 = vadd.f32 %v2326, %v2327
    %v2329 = vmul.f32 %v2001, %v2278
    %v2330 = vadd.f32 %v2328, %v2329
    %v2331 = vmul.f32 %v1991, %v2268
    %v2332 = vmul.f32 %v1996, %v2274
    %v2333 = vadd.f32 %v2331, %v2332
    %v2334 = vmul.f32 %v2001, %v2279
    %v2335 = vadd.f32 %v2333, %v2334
    %v2336 = vmul.f32 %v1991, %v2269
    %v2337 = vmul.f32 %v1996, %v2275
    %v2338 = vadd.f32 %v2336, %v2337
    %v2339 = vmul.f32 %v2001, %v2281
    %v2340 = vadd.f32 %v2338, %v2339
    %v2341 = vmul.f32 %v1991, %v2271
    %v2342 = vmul.f32 %v1996, %v2277
    %v2343 = vadd.f32 %v2341, %v2342
    %v2344 = vmul.f32 %v2001, %v2283
    %v2345 = vadd.f32 %v2343, %v2344
    %v2346 = vadd.f32 %v2345, %v2007
    %s2347 = scalar_lea.vmem [#allocation7], 72
    %2348 = vst [vmem:[%s2347] sm:$0x1] %v2288
    %s2349 = scalar_lea.vmem [#allocation7], 73
    %2350 = vst [vmem:[%s2349] sm:$0x1] %v2293
    %s2351 = scalar_lea.vmem [#allocation7], 74
    %2352 = vst [vmem:[%s2351] sm:$0x1] %v2298
    %s2353 = scalar_lea.vmem [#allocation7], 75
    %2354 = vst [vmem:[%s2353] sm:$0x1] %v2304
    %s2355 = scalar_lea.vmem [#allocation7], 76
    %2356 = vst [vmem:[%s2355] sm:$0x1] %v2309
    %s2357 = scalar_lea.vmem [#allocation7], 77
    %2358 = vst [vmem:[%s2357] sm:$0x1] %v2314
    %s2359 = scalar_lea.vmem [#allocation7], 78
    %2360 = vst [vmem:[%s2359] sm:$0x1] %v2319
    %s2361 = scalar_lea.vmem [#allocation7], 79
    %2362 = vst [vmem:[%s2361] sm:$0x1] %v2325
    %s2363 = scalar_lea.vmem [#allocation7], 80
    %2364 = vst [vmem:[%s2363] sm:$0x1] %v2330
    %s2365 = scalar_lea.vmem [#allocation7], 81
    %2366 = vst [vmem:[%s2365] sm:$0x1] %v2335
    %s2367 = scalar_lea.vmem [#allocation7], 82
    %2368 = vst [vmem:[%s2367] sm:$0x1] %v2340
    %s2369 = scalar_lea.vmem [#allocation7], 83
    %2370 = vst [vmem:[%s2369] sm:$0x1] %v2346
    %s2371 = scalar_lea.vmem [#allocation2], 7
    %v2372 = vld [vmem:[%s2371] sm:$0x1]
    %s2373 = scalar_lea.vmem [#allocation2], 15
    %v2374 = vld [vmem:[%s2373] sm:$0x1]
    %s2375 = scalar_lea.vmem [#allocation2], 23
    %v2376 = vld [vmem:[%s2375] sm:$0x1]
    %v2377 = vmul.f32 %v2372, %v2372
    %v2378 = vmul.f32 %v2374, %v2374
    %v2379 = vadd.f32 %v2377, %v2378
    %v2380 = vmul.f32 %v2376, %v2376
    %v2381 = vadd.f32 %v2379, %v2380
    %v2382 = vadd.f32 %v2381, 1e-12
    %v2383 = vrsqrt.pop %v2382
    %v2384 = vmul.f32 %v2382, %v2383
    %v2385 = vmul.f32 %v2372, %v2383
    %v2386 = vmul.f32 %v2374, %v2383
    %v2387 = vmul.f32 %v2376, %v2383
    %v2388 = vand.u32 2147483647, %v2384
    %vm2389 = vcmp.le.f32.partialorder %v2388, 0.7853982
    %vm2390 = vcmp.lt.s32.totalorder %v2384, 0
    %v2391 = vand.u32 %v2384, 2139095040
    %v2392 = vshrl.u32 %v2391, 23
    %v2393 = vsub.s32 %v2392, 127
    %v2394 = vand.u32 2147483647, %v2384
    %v2395 = vand.u32 %v2394, 8388607
    %v2396 = vor.u32 %v2395, 8388608
    %v2397 = vsub.s32 0, %v2396
    %v2398 = vadd.s32 %v2393, 1
    %vm2399 = vcmp.gt.s32.totalorder %v2398, 0
    %v2400 = vsel %vm2399, %v2398, 0
    %v2401 = vshrl.u32 %v2400, 5
    %v2402 = vand.u32 %v2400, 31
    %v2403 = vsub.s32 32, %v2402
    %v2404 = vshrl.u32 683565275, %v2403
    %v2405 = vshll.u32 683565275, %v2402
    %v2406 = vshrl.u32 2475754826, %v2403
    %v2407 = vor.u32 %v2405, %v2406
    %v2408 = vshll.u32 2475754826, %v2402
    %v2409 = vshrl.u32 2131351028, %v2403
    %v2410 = vor.u32 %v2408, %v2409
    %v2411 = vshll.u32 2131351028, %v2402
    %v2412 = vshrl.u32 2102212464, %v2403
    %v2413 = vor.u32 %v2411, %v2412
    %v2414 = vshll.u32 2102212464, %v2402
    %v2415 = vshrl.u32 920167782, %v2403
    %v2416 = vor.u32 %v2414, %v2415
    %v2417 = vshll.u32 920167782, %v2402
    %v2418 = vshrl.u32 1326507024, %v2403
    %v2419 = vor.u32 %v2417, %v2418
    %vm2420 = vcmp.lt.s32.totalorder %v2401, 1
    %vm2421 = vcmp.lt.s32.totalorder %v2401, 2
    %vm2422 = vcmp.lt.s32.totalorder %v2401, 3
    %vm2423 = vcmp.lt.s32.totalorder %v2401, 4
    %v2424 = vsel %vm2420, %v2404, %v2407
    %v2425 = vsel %vm2423, %v2413, 2102212464
    %v2426 = vsel %vm2422, %v2410, %v2425
    %v2427 = vsel %vm2421, %v2424, %v2426
    %v2428 = vsel %vm2420, %v2407, %v2410
    %v2429 = vsel %vm2423, %v2416, 920167782
    %v2430 = vsel %vm2422, %v2413, %v2429
    %v2431 = vsel %vm2421, %v2428, %v2430
    %v2432 = vsel %vm2420, %v2410, %v2413
    %v2433 = vsel %vm2423, %v2419, 1326507024
    %v2434 = vsel %vm2422, %v2416, %v2433
    %v2435 = vsel %vm2421, %v2432, %v2434
    %v2436 = vshll.u32 %v2396, 8
    %v2437 = vmul.u32.u64.compose %v2436, %v2435
    %v2438 = vextract.low.u32 %v2437
    %v2439 = vextract.high.u32 %v2437
    %v2440 = vmul.u32.u64.compose %v2436, %v2431
    %v2441 = vextract.low.u32 %v2440
    %v2442 = vextract.high.u32 %v2440
    %v2443 = vmul.u32 %v2436, %v2427
    %v2444 = vadd.s32 %v2439, %v2441
    %vm2445 = vc.u32 %v2439, %v2441
    %v2446 = vadd.s32 %v2442, 1
    %v2447 = vsel %vm2445, %v2446, %v2442
    %v2448 = vadd.s32 %v2443, %v2447
    %v2449 = vadd.s32 %v2448, 536870912
    %v2450 = vshrl.u32 %v2449, 30
    %v2451 = vshll.u32 %v2450, 30
    %v2452 = vsub.s32 %v2448, %v2451
    %vm2453 = vcmp.lt.s32.totalorder %v2452, 0
    %v2454 = vsub.s32 0, %v2452
    %v2455 = vsel %vm2453, %v2454, %v2452
    %v2456 = vclz %v2455
    %v2457 = vsub.s32 %v2456, 2
    %vm2458 = vcmp.gt.s32.totalorder 0, %v2457
    %v2459 = vsel %vm2458, 0, %v2457
    %v2460 = vsub.s32 32, %v2459
    %v2461 = vshll.u32 %v2452, %v2459
    %v2462 = vshrl.u32 %v2444, %v2460
    %v2463 = vor.u32 %v2461, %v2462
    %v2464 = vsub.s32 4294967266, %v2459
    %v2465 = vadd.s32 %v2464, 127
    %v2466 = vshll.u32 %v2465, 23
    %v2467 = vor.u32 4788187, %v2466
    %v2468 = vand.u32 2147483647, %v2467
    %v2470 = vcvt.s32.f32 %v2463
    %v2471 = vmul.f32 %v2470, %v2468
    %v2472 = vxor.u32 %v2471, 2147483648
    %v2473 = vsel %vm2390, %v2472, %v2471
    %v2474 = vsub.s32 4, %v2450
    %v2475 = vsel %vm2390, %v2474, %v2450
    %v2476 = vsel %vm2389, %v2384, %v2473
    %v2477 = vsel %vm2389, 0, %v2475
    %v2478 = vcosq.f32.pop %v2476
    %v2479 = vsinq.f32.pop %v2476
    %vm2480 = vweird.f32 %v2384
    %v2481 = vand.u32 %v2477, 3
    %vm2482 = vcmp.lt.s32.totalorder %v2481, 2
    %vm2483 = vcmp.eq.s32.totalorder %v2481, 0
    %v2484 = vxor.u32 %v2479, 2147483648
    %v2485 = vsel %vm2483, %v2478, %v2484
    %vm2486 = vcmp.eq.s32.totalorder %v2481, 2
    %v2487 = vxor.u32 %v2478, 2147483648
    %v2488 = vsel %vm2486, %v2487, %v2479
    %v2489 = vsel %vm2482, %v2485, %v2488
    %v2490 = vsel %vm2480, nan, %v2489
    %v2491 = vand.u32 2147483647, %v2384
    %vm2492 = vcmp.le.f32.partialorder %v2491, 0.7853982
    %vm2493 = vcmp.lt.s32.totalorder %v2384, 0
    %v2494 = vand.u32 %v2384, 2139095040
    %v2495 = vshrl.u32 %v2494, 23
    %v2496 = vsub.s32 %v2495, 127
    %v2497 = vand.u32 2147483647, %v2384
    %v2498 = vand.u32 %v2497, 8388607
    %v2499 = vor.u32 %v2498, 8388608
    %v2500 = vsub.s32 0, %v2499
    %v2501 = vadd.s32 %v2496, 1
    %vm2502 = vcmp.gt.s32.totalorder %v2501, 0
    %v2503 = vsel %vm2502, %v2501, 0
    %v2504 = vshrl.u32 %v2503, 5
    %v2505 = vand.u32 %v2503, 31
    %v2506 = vsub.s32 32, %v2505
    %v2507 = vshrl.u32 683565275, %v2506
    %v2508 = vshll.u32 683565275, %v2505
    %v2509 = vshrl.u32 2475754826, %v2506
    %v2510 = vor.u32 %v2508, %v2509
    %v2511 = vshll.u32 2475754826, %v2505
    %v2512 = vshrl.u32 2131351028, %v2506
    %v2513 = vor.u32 %v2511, %v2512
    %v2514 = vshll.u32 2131351028, %v2505
    %v2515 = vshrl.u32 2102212464, %v2506
    %v2516 = vor.u32 %v2514, %v2515
    %v2517 = vshll.u32 2102212464, %v2505
    %v2518 = vshrl.u32 920167782, %v2506
    %v2519 = vor.u32 %v2517, %v2518
    %v2520 = vshll.u32 920167782, %v2505
    %v2521 = vshrl.u32 1326507024, %v2506
    %v2522 = vor.u32 %v2520, %v2521
    %vm2523 = vcmp.lt.s32.totalorder %v2504, 1
    %vm2524 = vcmp.lt.s32.totalorder %v2504, 2
    %vm2525 = vcmp.lt.s32.totalorder %v2504, 3
    %vm2526 = vcmp.lt.s32.totalorder %v2504, 4
    %v2527 = vsel %vm2523, %v2507, %v2510
    %v2528 = vsel %vm2526, %v2516, 2102212464
    %v2529 = vsel %vm2525, %v2513, %v2528
    %v2530 = vsel %vm2524, %v2527, %v2529
    %v2531 = vsel %vm2523, %v2510, %v2513
    %v2532 = vsel %vm2526, %v2519, 920167782
    %v2533 = vsel %vm2525, %v2516, %v2532
    %v2534 = vsel %vm2524, %v2531, %v2533
    %v2535 = vsel %vm2523, %v2513, %v2516
    %v2536 = vsel %vm2526, %v2522, 1326507024
    %v2537 = vsel %vm2525, %v2519, %v2536
    %v2538 = vsel %vm2524, %v2535, %v2537
    %v2539 = vshll.u32 %v2499, 8
    %v2540 = vmul.u32.u64.compose %v2539, %v2538
    %v2541 = vextract.low.u32 %v2540
    %v2542 = vextract.high.u32 %v2540
    %v2543 = vmul.u32.u64.compose %v2539, %v2534
    %v2544 = vextract.low.u32 %v2543
    %v2545 = vextract.high.u32 %v2543
    %v2546 = vmul.u32 %v2539, %v2530
    %v2547 = vadd.s32 %v2542, %v2544
    %vm2548 = vc.u32 %v2542, %v2544
    %v2549 = vadd.s32 %v2545, 1
    %v2550 = vsel %vm2548, %v2549, %v2545
    %v2551 = vadd.s32 %v2546, %v2550
    %v2552 = vadd.s32 %v2551, 536870912
    %v2553 = vshrl.u32 %v2552, 30
    %v2554 = vshll.u32 %v2553, 30
    %v2555 = vsub.s32 %v2551, %v2554
    %vm2556 = vcmp.lt.s32.totalorder %v2555, 0
    %v2557 = vsub.s32 0, %v2555
    %v2558 = vsel %vm2556, %v2557, %v2555
    %v2559 = vclz %v2558
    %v2560 = vsub.s32 %v2559, 2
    %vm2561 = vcmp.gt.s32.totalorder 0, %v2560
    %v2562 = vsel %vm2561, 0, %v2560
    %v2563 = vsub.s32 32, %v2562
    %v2564 = vshll.u32 %v2555, %v2562
    %v2565 = vshrl.u32 %v2547, %v2563
    %v2566 = vor.u32 %v2564, %v2565
    %v2567 = vsub.s32 4294967266, %v2562
    %v2568 = vadd.s32 %v2567, 127
    %v2569 = vshll.u32 %v2568, 23
    %v2570 = vor.u32 4788187, %v2569
    %v2571 = vand.u32 2147483647, %v2570
    %v2573 = vcvt.s32.f32 %v2566
    %v2574 = vmul.f32 %v2573, %v2571
    %v2575 = vxor.u32 %v2574, 2147483648
    %v2576 = vsel %vm2493, %v2575, %v2574
    %v2577 = vsub.s32 4, %v2553
    %v2578 = vsel %vm2493, %v2577, %v2553
    %v2579 = vsel %vm2492, %v2384, %v2576
    %v2580 = vsel %vm2492, 0, %v2578
    %v2581 = vcosq.f32.pop %v2579
    %v2582 = vsinq.f32.pop %v2579
    %vm2583 = vweird.f32 %v2384
    %v2584 = vadd.s32 %v2580, 3
    %v2585 = vand.u32 %v2584, 3
    %vm2586 = vcmp.lt.s32.totalorder %v2585, 2
    %vm2587 = vcmp.eq.s32.totalorder %v2585, 0
    %v2588 = vxor.u32 %v2582, 2147483648
    %v2589 = vsel %vm2587, %v2581, %v2588
    %vm2590 = vcmp.eq.s32.totalorder %v2585, 2
    %v2591 = vxor.u32 %v2581, 2147483648
    %v2592 = vsel %vm2590, %v2591, %v2582
    %v2593 = vsel %vm2586, %v2589, %v2592
    %v2594 = vsel %vm2583, nan, %v2593
    %v2595 = vsub.f32 1.0, %v2490
    %v2596 = vmul.f32 %v2595, %v2385
    %v2597 = vmul.f32 %v2595, %v2386
    %v2598 = vmul.f32 %v2595, %v2387
    %v2599 = vmul.f32 %v2594, %v2385
    %v2600 = vmul.f32 %v2594, %v2386
    %v2601 = vmul.f32 %v2594, %v2387
    %v2602 = vmul.f32 %v2596, %v2386
    %v2603 = vmul.f32 %v2596, %v2387
    %v2604 = vmul.f32 %v2597, %v2387
    %v2605 = vmul.f32 %v2596, %v2385
    %v2606 = vadd.f32 %v2490, %v2605
    %v2607 = vsub.f32 %v2602, %v2601
    %v2608 = vadd.f32 %v2603, %v2600
    %s2609 = scalar_lea.vmem [#allocation5], 7
    %v2610 = vld [vmem:[%s2609] sm:$0x1]
    %v2611 = vadd.f32 %v2602, %v2601
    %v2612 = vmul.f32 %v2597, %v2386
    %v2613 = vadd.f32 %v2490, %v2612
    %v2614 = vsub.f32 %v2604, %v2599
    %s2615 = scalar_lea.vmem [#allocation5], 15
    %v2616 = vld [vmem:[%s2615] sm:$0x1]
    %v2617 = vsub.f32 %v2603, %v2600
    %v2618 = vadd.f32 %v2604, %v2599
    %v2619 = vmul.f32 %v2598, %v2387
    %v2620 = vadd.f32 %v2490, %v2619
    %s2621 = scalar_lea.vmem [#allocation5], 23
    %v2622 = vld [vmem:[%s2621] sm:$0x1]
    %v2623 = vmul.f32 %v2288, %v2606
    %v2624 = vmul.f32 %v2293, %v2611
    %v2625 = vadd.f32 %v2623, %v2624
    %v2626 = vmul.f32 %v2298, %v2617
    %v2627 = vadd.f32 %v2625, %v2626
    %v2628 = vmul.f32 %v2288, %v2607
    %v2629 = vmul.f32 %v2293, %v2613
    %v2630 = vadd.f32 %v2628, %v2629
    %v2631 = vmul.f32 %v2298, %v2618
    %v2632 = vadd.f32 %v2630, %v2631
    %v2633 = vmul.f32 %v2288, %v2608
    %v2634 = vmul.f32 %v2293, %v2614
    %v2635 = vadd.f32 %v2633, %v2634
    %v2636 = vmul.f32 %v2298, %v2620
    %v2637 = vadd.f32 %v2635, %v2636
    %v2638 = vmul.f32 %v2288, %v2610
    %v2639 = vmul.f32 %v2293, %v2616
    %v2640 = vadd.f32 %v2638, %v2639
    %v2641 = vmul.f32 %v2298, %v2622
    %v2642 = vadd.f32 %v2640, %v2641
    %v2643 = vadd.f32 %v2642, %v2304
    %v2644 = vmul.f32 %v2309, %v2606
    %v2645 = vmul.f32 %v2314, %v2611
    %v2646 = vadd.f32 %v2644, %v2645
    %v2647 = vmul.f32 %v2319, %v2617
    %v2648 = vadd.f32 %v2646, %v2647
    %v2649 = vmul.f32 %v2309, %v2607
    %v2650 = vmul.f32 %v2314, %v2613
    %v2651 = vadd.f32 %v2649, %v2650
    %v2652 = vmul.f32 %v2319, %v2618
    %v2653 = vadd.f32 %v2651, %v2652
    %v2654 = vmul.f32 %v2309, %v2608
    %v2655 = vmul.f32 %v2314, %v2614
    %v2656 = vadd.f32 %v2654, %v2655
    %v2657 = vmul.f32 %v2319, %v2620
    %v2658 = vadd.f32 %v2656, %v2657
    %v2659 = vmul.f32 %v2309, %v2610
    %v2660 = vmul.f32 %v2314, %v2616
    %v2661 = vadd.f32 %v2659, %v2660
    %v2662 = vmul.f32 %v2319, %v2622
    %v2663 = vadd.f32 %v2661, %v2662
    %v2664 = vadd.f32 %v2663, %v2325
    %v2665 = vmul.f32 %v2330, %v2606
    %v2666 = vmul.f32 %v2335, %v2611
    %v2667 = vadd.f32 %v2665, %v2666
    %v2668 = vmul.f32 %v2340, %v2617
    %v2669 = vadd.f32 %v2667, %v2668
    %v2670 = vmul.f32 %v2330, %v2607
    %v2671 = vmul.f32 %v2335, %v2613
    %v2672 = vadd.f32 %v2670, %v2671
    %v2673 = vmul.f32 %v2340, %v2618
    %v2674 = vadd.f32 %v2672, %v2673
    %v2675 = vmul.f32 %v2330, %v2608
    %v2676 = vmul.f32 %v2335, %v2614
    %v2677 = vadd.f32 %v2675, %v2676
    %v2678 = vmul.f32 %v2340, %v2620
    %v2679 = vadd.f32 %v2677, %v2678
    %v2680 = vmul.f32 %v2330, %v2610
    %v2681 = vmul.f32 %v2335, %v2616
    %v2682 = vadd.f32 %v2680, %v2681
    %v2683 = vmul.f32 %v2340, %v2622
    %v2684 = vadd.f32 %v2682, %v2683
    %v2685 = vadd.f32 %v2684, %v2346
    %s2686 = scalar_lea.vmem [#allocation7], 84
    %2687 = vst [vmem:[%s2686] sm:$0x1] %v2627
    %s2688 = scalar_lea.vmem [#allocation7], 85
    %2689 = vst [vmem:[%s2688] sm:$0x1] %v2632
    %s2690 = scalar_lea.vmem [#allocation7], 86
    %2691 = vst [vmem:[%s2690] sm:$0x1] %v2637
    %s2692 = scalar_lea.vmem [#allocation7], 87
    %2693 = vst [vmem:[%s2692] sm:$0x1] %v2643
    %s2694 = scalar_lea.vmem [#allocation7], 88
    %2695 = vst [vmem:[%s2694] sm:$0x1] %v2648
    %s2696 = scalar_lea.vmem [#allocation7], 89
    %2697 = vst [vmem:[%s2696] sm:$0x1] %v2653
    %s2698 = scalar_lea.vmem [#allocation7], 90
    %2699 = vst [vmem:[%s2698] sm:$0x1] %v2658
    %s2700 = scalar_lea.vmem [#allocation7], 91
    %2701 = vst [vmem:[%s2700] sm:$0x1] %v2664
    %s2702 = scalar_lea.vmem [#allocation7], 92
    %2703 = vst [vmem:[%s2702] sm:$0x1] %v2669
    %s2704 = scalar_lea.vmem [#allocation7], 93
    %2705 = vst [vmem:[%s2704] sm:$0x1] %v2674
    %s2706 = scalar_lea.vmem [#allocation7], 94
    %2707 = vst [vmem:[%s2706] sm:$0x1] %v2679
    %s2708 = scalar_lea.vmem [#allocation7], 95
    %2709 = vst [vmem:[%s2708] sm:$0x1] %v2685
    // Predicated region
    $region18: #{tpu_custom_call.1} parent=1 // pred_check
      _
    $region19: #{tpu_custom_call.1} parent=1 // pred_check_branch
      %2711 = sbr.rel (0) target = $region21
    $region20: #{tpu_custom_call.1} parent=1 // pred_region
      %s2713 = ssub.s32 1536, 1536
      %2714 = vsyncadd [#allocation4], %s2713
      %s2715 = sshll.u32 [#allocation7], 4
      %s2716 = int_to_ptr.vmem [resolvable:$true] %s2715
      %2721 = dma.vmem_to_hbm [thread:$0]  %s2716, 1536, %s2, [#allocation4], 16, 16, 1
    $region21: #{tpu_custom_call.1} parent=1 // pred_fallthru
      _
    // Predicated region
    $region22: #{tpu_custom_call.1} parent=1 // pred_check
      _
    $region23: #{tpu_custom_call.1} parent=1 // pred_check_branch
      %2723 = sbr.rel (0) target = $region25
    $region24: #{tpu_custom_call.1} parent=1 // pred_region
      %2724 = dma.done [#allocation4], 1536
    $region25: #{tpu_custom_call.1} parent=1 // pred_fallthru
      _
    %2725 = vsyncpa [#allocation3], 1
    %2726 = vsyncpa [#allocation6], 1
    %2727 = vsyncpa [#allocation4], 1

</llo_original>
